<compile_context>
chip_gen: v7x
topology: tpu7x:2x2x1
jax: 0.10.0
libtpu: 0.0.40
codegen_flags: <defaults>
</compile_context>

<pallas_src>
import functools

import numpy as np
import jax
import jax.numpy as jnp
from jax.experimental import pallas as pl
from jax.experimental.pallas import tpu as pltpu


# ----------------------------- small config ---------------------------------
MODEL_DIM = 32
NUM_HEADS = 4
NUM_LAYERS = 2
VOCAB_SIZE = 128
MAX_SEQ_LEN = 16
NUM_FRAMEWORKS = 3
FFN_DIM = MODEL_DIM * 4
LN_EPS = 1e-5


# ------------------------------ fused kernel ---------------------------------
def _policy_fwd_kernel(
    ids_ref, tok_ref, posb_ref, masks_ref,
    attn_w_ref, attn_b_ref, ln_ref,
    w1T_ref, b1_ref, w2T_ref, b2_ref,
    outwT_ref, outb_ref,
    *rest,
    n_layers, n_heads, n_active,
):
    if n_active > 0:
        adpT_ref, adpb_ref, scl_ref, logits_ref, hidden_ref = rest
    else:
        logits_ref, hidden_ref = rest

    R = ids_ref.shape[0]          # TB * S rows in this grid step
    V, D = tok_ref.shape
    Dh = D // n_heads
    f32, bf16 = jnp.float32, jnp.bfloat16

    # --- token + position embedding (one-hot @ table keeps it on the MXU) ----
    ids = ids_ref[...]                                                # (R, 1) int32
    onehot = (ids == jax.lax.broadcasted_iota(jnp.int32, (R, V), 1)).astype(bf16)
    x = jnp.dot(onehot, tok_ref[...], preferred_element_type=f32) + posb_ref[...]
    mem16 = x.astype(bf16)                                            # memory = embeds

    # --- hoisted constants (masks / head lane-masks built once) --------------
    self_mask = masks_ref[0]                                          # (R, R) additive
    cross_mask = masks_ref[1]
    lane = jax.lax.broadcasted_iota(jnp.int32, (1, D), 1)
    head_masks = [((lane >= h * Dh) & (lane < (h + 1) * Dh)).astype(f32)
                  for h in range(n_heads)]

    def layernorm(h, i):
        g = ln_ref[2 * i]                                             # (1, D)
        b = ln_ref[2 * i + 1]
        mu = jnp.mean(h, axis=-1, keepdims=True)
        var = jnp.mean((h - mu) ** 2, axis=-1, keepdims=True)
        return (h - mu) * jax.lax.rsqrt(var + LN_EPS) * g + b

    def mha(xq16, xkv16, a, mask):
        # a: static attention-instance index (2*l self, 2*l+1 cross)
        base = 4 * a
        # full-width Q/K/V projections (1/sqrt(Dh) pre-folded into Wq, bq)
        q = jnp.dot(xq16, attn_w_ref[base + 0], preferred_element_type=f32) + attn_b_ref[base + 0]
        k = jnp.dot(xkv16, attn_w_ref[base + 1], preferred_element_type=f32) + attn_b_ref[base + 1]
        v = jnp.dot(xkv16, attn_w_ref[base + 2], preferred_element_type=f32) + attn_b_ref[base + 2]
        k16 = k.astype(bf16)
        attn = jnp.zeros((R, D), f32)
        for h in range(n_heads):
            m = head_masks[h]
            # masked-q contraction over full D only picks up head-h lanes of k
            s = jax.lax.dot_general((q * m).astype(bf16), k16,
                                    (((1,), (1,)), ((), ())),
                                    preferred_element_type=f32)       # (R, R)
            s = s + mask
            smax = jnp.max(s, axis=-1, keepdims=True)
            p = jnp.exp(s - smax)
            p = p * pl.reciprocal(jnp.sum(p, axis=-1, keepdims=True), approx=True)
            # masked-v: head output lands directly in its own lanes (== concat)
            attn = attn + jnp.dot(p.astype(bf16), (v * m).astype(bf16),
                                  preferred_element_type=f32)
        return (jnp.dot(attn.astype(bf16), attn_w_ref[base + 3],
                        preferred_element_type=f32) + attn_b_ref[base + 3])

    # --- decoder layers (post-norm, relu, dropout = identity) ----------------
    for l in range(n_layers):
        x16 = x.astype(bf16)
        x = layernorm(x + mha(x16, x16, 2 * l, self_mask), 3 * l)
        x16 = x.astype(bf16)
        x = layernorm(x + mha(x16, mem16, 2 * l + 1, cross_mask), 3 * l + 1)
        x16 = x.astype(bf16)
        h1 = jnp.maximum(
            jnp.dot(x16, w1T_ref[l], preferred_element_type=f32) + b1_ref[l], 0.0)
        ff = jnp.dot(h1.astype(bf16), w2T_ref[l], preferred_element_type=f32) + b2_ref[l]
        x = layernorm(x + ff, 3 * l + 2)

    # --- framework adapters (only statically-active ones) --------------------
    if n_active > 0:
        x16 = x.astype(bf16)
        adapted = jnp.zeros_like(x)
        for j in range(n_active):
            ai = jnp.dot(x16, adpT_ref[j], preferred_element_type=f32) + adpb_ref[j]
            adapted = adapted + scl_ref[j] * ai
        x = x + adapted

    # --- outputs (logits are lane-dense: V == 128) ----------------------------
    hidden_ref[...] = x
    logits_ref[...] = (jnp.dot(x.astype(bf16), outwT_ref[...],
                               preferred_element_type=f32) + outb_ref[...])


# ------------------------------- wrapper --------------------------------------
def policy_forward(params, input_ids, framework_weights=None, active_frameworks=None):
    B, S = input_ids.shape
    D, V, H = MODEL_DIM, VOCAB_SIZE, NUM_HEADS
    L, NF, F = NUM_LAYERS, NUM_FRAMEWORKS, FFN_DIM
    Dh = D // H
    f32, bf16 = jnp.float32, jnp.bfloat16

    # rows per grid step: TB whole sequences so TB*S approaches a full MXU tile
    tb = max(1, min(B, max(1, 128 // S)))
    while B % tb:
        tb -= 1
    R = tb * S
    grid = (B // tb,)

    # ---- trace-time weight packing: pre-transposed, bf16, stacked slabs ------
    inv_sqrt_dh = 1.0 / float(Dh) ** 0.5
    attn_w, attn_b, ln = [], [], []
    w1T, b1, w2T, b2 = [], [], [], []
    for lp in params["layers"]:
        for ap in (lp["self_attn"], lp["cross_attn"]):
            W, bvec = ap["in_proj_w"], ap["in_proj_b"]
            Wq, Wk, Wv = W[:D], W[D:2 * D], W[2 * D:]
            b_q, b_k, b_v = bvec[:D], bvec[D:2 * D], bvec[2 * D:]
            attn_w += [Wq.T * inv_sqrt_dh, Wk.T, Wv.T, ap["out_proj_w"].T]
            attn_b += [(b_q * inv_sqrt_dh)[None, :], b_k[None, :], b_v[None, :],
                       ap["out_proj_b"][None, :]]
        w1T.append(lp["w1"].T); b1.append(lp["b1"][None, :])
        w2T.append(lp["w2"].T); b2.append(lp["b2"][None, :])
        for n in ("1", "2", "3"):
            ln += [lp[f"norm{n}_g"][None, :], lp[f"norm{n}_b"][None, :]]
    attn_w = jnp.stack(attn_w).astype(bf16)        # (8L, D, D)  [in, out]
    attn_b = jnp.stack(attn_b).astype(f32)         # (8L, 1, D)
    ln = jnp.stack(ln).astype(f32)                 # (6L, 1, D)  even=gamma, odd=beta
    w1T = jnp.stack(w1T).astype(bf16)              # (L, D, F)
    b1 = jnp.stack(b1).astype(f32)                 # (L, 1, F)
    w2T = jnp.stack(w2T).astype(bf16)              # (L, F, D)
    b2 = jnp.stack(b2).astype(f32)                 # (L, 1, D)

    tok = params["token_emb"].astype(bf16)                          # (V, D)
    posb = jnp.tile(params["pos_emb"][:S], (tb, 1)).astype(f32)     # (R, D)
    outwT = params["out_w"].T.astype(bf16)                          # (D, V)
    outb = params["out_b"][None, :].astype(f32)                     # (1, V)
    ids = input_ids.reshape(B * S, 1).astype(jnp.int32)

    # additive masks: block-diagonal across the TB sequences in a step (+causal)
    r = np.arange(R)
    same_seq = (r[:, None] // S) == (r[None, :] // S)
    causal_ok = (r[None, :] % S) <= (r[:, None] % S)
    self_m = np.where(same_seq & causal_ok, 0.0, -1e9).astype(np.float32)
    cross_m = np.where(same_seq, 0.0, -1e9).astype(np.float32)
    masks = jnp.asarray(np.stack([self_m, cross_m]))                # (2, R, R)

    # ---- framework adapters: only statically-active ones ---------------------
    adpT_l, adpb_l, scl_l = [], [], []
    if framework_weights is not None and active_frameworks is not None:
        for fw in active_frameworks:
            if fw < NF:
                w, bvec = params["adapters"][fw]
                adpT_l.append(w.T)
                adpb_l.append(bvec[None, :])
                scl_l.append(jnp.repeat(framework_weights[:, fw].astype(f32), S)[:, None])
    n_active = len(adpT_l)

    def full_spec(a):
        nd = a.ndim
        return pl.BlockSpec(a.shape, lambda g, _n=nd: (0,) * _n)

    inputs = [ids, tok, posb, masks, attn_w, attn_b, ln, w1T, b1, w2T, b2, outwT, outb]
    in_specs = [pl.BlockSpec((R, 1), lambda g: (g, 0))] + [full_spec(a) for a in inputs[1:]]

    if n_active > 0:
        adpT = jnp.stack(adpT_l).astype(bf16)          # (NA, D, D)
        adpb = jnp.stack(adpb_l).astype(f32)           # (NA, 1, D)
        scl = jnp.stack(scl_l).astype(f32)             # (NA, B*S, 1) per-row scales
        inputs += [adpT, adpb, scl]
        in_specs += [full_spec(adpT), full_spec(adpb),
                     pl.BlockSpec((n_active, R, 1), lambda g: (0, g, 0))]

    kernel = functools.partial(
        _policy_fwd_kernel, n_layers=L, n_heads=H, n_active=n_active)

    logits, hidden = pl.pallas_call(
        kernel,
        grid=grid,
        in_specs=in_specs,
        out_specs=(pl.BlockSpec((R, V), lambda g: (g, 0)),
                   pl.BlockSpec((R, D), lambda g: (g, 0))),
        out_shape=(jax.ShapeDtypeStruct((B * S, V), jnp.float32),
                   jax.ShapeDtypeStruct((B * S, D), jnp.float32)),
        compiler_params=pltpu.CompilerParams(
            dimension_semantics=("parallel",)),
    )(*inputs)

    return {"logits": logits.reshape(B, S, V),
            "hidden_states": hidden.reshape(B, S, D)}


# ------------------------------ parameter init --------------------------------
def init_params(key):
    def nrm(k, shape):
        return 0.02 * jax.random.normal(k, shape, dtype=jnp.float32)

    keys = iter(jax.random.split(key, 256))
    D, F = MODEL_DIM, FFN_DIM
    params = {
        "token_emb": nrm(next(keys), (VOCAB_SIZE, D)),
        "pos_emb": nrm(next(keys), (MAX_SEQ_LEN, D)),
        "out_w": nrm(next(keys), (VOCAB_SIZE, D)),
        "out_b": jnp.zeros((VOCAB_SIZE,), jnp.float32),
        "adapters": [
            (nrm(next(keys), (D, D)), jnp.zeros((D,), jnp.float32))
            for _ in range(NUM_FRAMEWORKS)
        ],
        "layers": [],
    }
    for _ in range(NUM_LAYERS):
        def attn_params():
            return {
                "in_proj_w": nrm(next(keys), (3 * D, D)),
                "in_proj_b": jnp.zeros((3 * D,), jnp.float32),
                "out_proj_w": nrm(next(keys), (D, D)),
                "out_proj_b": jnp.zeros((D,), jnp.float32),
            }

        lp = {
            "self_attn": attn_params(),
            "cross_attn": attn_params(),
            "w1": nrm(next(keys), (F, D)),
            "b1": jnp.zeros((F,), jnp.float32),
            "w2": nrm(next(keys), (D, F)),
            "b2": jnp.zeros((D,), jnp.float32),
            "norm1_g": jnp.ones((D,), jnp.float32),
            "norm1_b": jnp.zeros((D,), jnp.float32),
            "norm2_g": jnp.ones((D,), jnp.float32),
            "norm2_b": jnp.zeros((D,), jnp.float32),
            "norm3_g": jnp.ones((D,), jnp.float32),
            "norm3_b": jnp.zeros((D,), jnp.float32),
        }
        params["layers"].append(lp)
    return params


# ----------------------------------- main --------------------------------------
if __name__ == "__main__":
    key = jax.random.PRNGKey(0)
    k_param, k_ids, k_fw = jax.random.split(key, 3)

    B, S = 2, 8
    params = init_params(k_param)
    input_ids = jax.random.randint(k_ids, (B, S), 0, VOCAB_SIZE, dtype=jnp.int32)
    framework_weights = jax.nn.softmax(
        jax.random.normal(k_fw, (B, NUM_FRAMEWORKS), dtype=jnp.float32), axis=-1
    )
    active_frameworks = [0, 2]   # static python list, as in the PyTorch module

    out = policy_forward(params, input_ids, framework_weights, active_frameworks)
    jax.block_until_ready(out)

    assert out["logits"].shape == (B, S, VOCAB_SIZE)
    assert out["hidden_states"].shape == (B, S, MODEL_DIM)
    assert bool(jnp.all(jnp.isfinite(out["logits"])))
    assert bool(jnp.all(jnp.isfinite(out["hidden_states"])))
    print("KERNEL_OK")
</pallas_src>

<mosaic_0001>
module attributes {stable_mosaic.version = 11 : i64} {
  func.func @_policy_fwd_kernel(%arg0: i32, %arg1: memref<16x1xi32, #tpu.memory_space<vmem>>, %arg2: memref<128x32xbf16, #tpu.memory_space<vmem>>, %arg3: memref<16x32xf32, #tpu.memory_space<vmem>>, %arg4: memref<2x16x16xf32, #tpu.memory_space<vmem>>, %arg5: memref<16x32x32xbf16, #tpu.memory_space<vmem>>, %arg6: memref<16x1x32xf32, #tpu.memory_space<vmem>>, %arg7: memref<12x1x32xf32, #tpu.memory_space<vmem>>, %arg8: memref<2x32x128xbf16, #tpu.memory_space<vmem>>, %arg9: memref<2x1x128xf32, #tpu.memory_space<vmem>>, %arg10: memref<2x128x32xbf16, #tpu.memory_space<vmem>>, %arg11: memref<2x1x32xf32, #tpu.memory_space<vmem>>, %arg12: memref<32x128xbf16, #tpu.memory_space<vmem>>, %arg13: memref<1x128xf32, #tpu.memory_space<vmem>>, %arg14: memref<2x32x32xbf16, #tpu.memory_space<vmem>>, %arg15: memref<2x1x32xf32, #tpu.memory_space<vmem>>, %arg16: memref<2x16x1xf32, #tpu.memory_space<vmem>>, %arg17: memref<16x128xf32, #tpu.memory_space<vmem>>, %arg18: memref<16x32xf32, #tpu.memory_space<vmem>>) attributes {dimension_semantics = [#tpu.dimension_semantics<parallel>], iteration_bounds = array<i64: 1>, scalar_prefetch = 0 : i64, scratch_operands = 0 : i64, tpu.core_type = #tpu.core_type<tc>, window_params = [{transform_indices = @transform_0, window_bounds = array<i64: 16, 1>}, {pipeline_mode = #tpu.pipeline_mode<synchronous>, transform_indices = @transform_1, window_bounds = array<i64: 128, 32>}, {pipeline_mode = #tpu.pipeline_mode<synchronous>, transform_indices = @transform_2, window_bounds = array<i64: 16, 32>}, {pipeline_mode = #tpu.pipeline_mode<synchronous>, transform_indices = @transform_3, window_bounds = array<i64: 2, 16, 16>}, {pipeline_mode = #tpu.pipeline_mode<synchronous>, transform_indices = @transform_4, window_bounds = array<i64: 16, 32, 32>}, {pipeline_mode = #tpu.pipeline_mode<synchronous>, transform_indices = @transform_5, window_bounds = array<i64: 16, 1, 32>}, {pipeline_mode = #tpu.pipeline_mode<synchronous>, transform_indices = @transform_6, window_bounds = array<i64: 12, 1, 32>}, {pipeline_mode = #tpu.pipeline_mode<synchronous>, transform_indices = @transform_7, window_bounds = array<i64: 2, 32, 128>}, {pipeline_mode = #tpu.pipeline_mode<synchronous>, transform_indices = @transform_8, window_bounds = array<i64: 2, 1, 128>}, {pipeline_mode = #tpu.pipeline_mode<synchronous>, transform_indices = @transform_9, window_bounds = array<i64: 2, 128, 32>}, {pipeline_mode = #tpu.pipeline_mode<synchronous>, transform_indices = @transform_10, window_bounds = array<i64: 2, 1, 32>}, {pipeline_mode = #tpu.pipeline_mode<synchronous>, transform_indices = @transform_11, window_bounds = array<i64: 32, 128>}, {pipeline_mode = #tpu.pipeline_mode<synchronous>, transform_indices = @transform_12, window_bounds = array<i64: 1, 128>}, {pipeline_mode = #tpu.pipeline_mode<synchronous>, transform_indices = @transform_13, window_bounds = array<i64: 2, 32, 32>}, {pipeline_mode = #tpu.pipeline_mode<synchronous>, transform_indices = @transform_14, window_bounds = array<i64: 2, 1, 32>}, {transform_indices = @transform_15, window_bounds = array<i64: 2, 16, 1>}, {transform_indices = @transform_16, window_bounds = array<i64: 16, 128>}, {transform_indices = @transform_17, window_bounds = array<i64: 16, 32>}]} {
    %c0 = arith.constant 0 : index
    %c0_0 = arith.constant 0 : index
    %0 = vector.load %arg1[%c0, %c0_0] : memref<16x1xi32, #tpu.memory_space<vmem>>, vector<16x1xi32>
    %1 = tpu.iota {dimensions = array<i32: 1>} : vector<16x128xi32>
    %2 = vector.broadcast %0 : vector<16x1xi32> to vector<16x128xi32>
    %3 = arith.cmpi eq, %2, %1 : vector<16x128xi32>
    %4 = arith.extui %3 : vector<16x128xi1> to vector<16x128xi32>
    %5 = arith.sitofp %4 : vector<16x128xi32> to vector<16x128xf32>
    %6 = arith.truncf %5 : vector<16x128xf32> to vector<16x128xbf16>
    %c0_1 = arith.constant 0 : index
    %c0_2 = arith.constant 0 : index
    %7 = vector.load %arg2[%c0_1, %c0_2] : memref<128x32xbf16, #tpu.memory_space<vmem>>, vector<128x32xbf16>
    %cst = arith.constant dense<0.000000e+00> : vector<16x32xf32>
    %8 = tpu.matmul %6, %7, %cst {dimension_numbers = #tpu.dot_dimension_numbers<[1], [0], [0], [1], [0, 0, 1, 1], [], []>} : vector<16x128xbf16>, vector<128x32xbf16>, vector<16x32xf32> -> vector<16x32xf32>
    %c0_3 = arith.constant 0 : index
    %c0_4 = arith.constant 0 : index
    %9 = vector.load %arg3[%c0_3, %c0_4] : memref<16x32xf32, #tpu.memory_space<vmem>>, vector<16x32xf32>
    %10 = arith.addf %8, %9 : vector<16x32xf32>
    %11 = arith.truncf %10 : vector<16x32xf32> to vector<16x32xbf16>
    %c0_5 = arith.constant 0 : index
    %c0_6 = arith.constant 0 : index
    %c0_7 = arith.constant 0 : index
    %12 = vector.load %arg4[%c0_5, %c0_6, %c0_7] : memref<2x16x16xf32, #tpu.memory_space<vmem>>, vector<1x16x16xf32>
    %13 = vector.shape_cast %12 : vector<1x16x16xf32> to vector<16x16xf32>
    %c1 = arith.constant 1 : index
    %c0_8 = arith.constant 0 : index
    %c0_9 = arith.constant 0 : index
    %14 = vector.load %arg4[%c1, %c0_8, %c0_9] : memref<2x16x16xf32, #tpu.memory_space<vmem>>, vector<1x16x16xf32>
    %15 = vector.shape_cast %14 : vector<1x16x16xf32> to vector<16x16xf32>
    %16 = tpu.iota {dimensions = array<i32: 1>} : vector<1x32xi32>
    %c0_i32 = arith.constant 0 : i32
    %17 = vector.broadcast %c0_i32 : i32 to vector<1x32xi32>
    %18 = arith.cmpi sge, %16, %17 : vector<1x32xi32>
    %c8_i32 = arith.constant 8 : i32
    %19 = vector.broadcast %c8_i32 : i32 to vector<1x32xi32>
    %20 = arith.cmpi slt, %16, %19 : vector<1x32xi32>
    %21 = arith.andi %18, %20 : vector<1x32xi1>
    %22 = arith.extui %21 : vector<1x32xi1> to vector<1x32xi32>
    %23 = arith.sitofp %22 : vector<1x32xi32> to vector<1x32xf32>
    %c8_i32_10 = arith.constant 8 : i32
    %24 = vector.broadcast %c8_i32_10 : i32 to vector<1x32xi32>
    %25 = arith.cmpi sge, %16, %24 : vector<1x32xi32>
    %c16_i32 = arith.constant 16 : i32
    %26 = vector.broadcast %c16_i32 : i32 to vector<1x32xi32>
    %27 = arith.cmpi slt, %16, %26 : vector<1x32xi32>
    %28 = arith.andi %25, %27 : vector<1x32xi1>
    %29 = arith.extui %28 : vector<1x32xi1> to vector<1x32xi32>
    %30 = arith.sitofp %29 : vector<1x32xi32> to vector<1x32xf32>
    %c16_i32_11 = arith.constant 16 : i32
    %31 = vector.broadcast %c16_i32_11 : i32 to vector<1x32xi32>
    %32 = arith.cmpi sge, %16, %31 : vector<1x32xi32>
    %c24_i32 = arith.constant 24 : i32
    %33 = vector.broadcast %c24_i32 : i32 to vector<1x32xi32>
    %34 = arith.cmpi slt, %16, %33 : vector<1x32xi32>
    %35 = arith.andi %32, %34 : vector<1x32xi1>
    %36 = arith.extui %35 : vector<1x32xi1> to vector<1x32xi32>
    %37 = arith.sitofp %36 : vector<1x32xi32> to vector<1x32xf32>
    %c24_i32_12 = arith.constant 24 : i32
    %38 = vector.broadcast %c24_i32_12 : i32 to vector<1x32xi32>
    %39 = arith.cmpi sge, %16, %38 : vector<1x32xi32>
    %c32_i32 = arith.constant 32 : i32
    %40 = vector.broadcast %c32_i32 : i32 to vector<1x32xi32>
    %41 = arith.cmpi slt, %16, %40 : vector<1x32xi32>
    %42 = arith.andi %39, %41 : vector<1x32xi1>
    %43 = arith.extui %42 : vector<1x32xi1> to vector<1x32xi32>
    %44 = arith.sitofp %43 : vector<1x32xi32> to vector<1x32xf32>
    %45 = arith.truncf %10 : vector<16x32xf32> to vector<16x32xbf16>
    %c0_13 = arith.constant 0 : index
    %c0_14 = arith.constant 0 : index
    %c0_15 = arith.constant 0 : index
    %46 = vector.load %arg5[%c0_13, %c0_14, %c0_15] : memref<16x32x32xbf16, #tpu.memory_space<vmem>>, vector<1x32x32xbf16>
    %47 = vector.shape_cast %46 : vector<1x32x32xbf16> to vector<32x32xbf16>
    %cst_16 = arith.constant dense<0.000000e+00> : vector<16x32xf32>
    %48 = tpu.matmul %45, %47, %cst_16 {dimension_numbers = #tpu.dot_dimension_numbers<[1], [0], [0], [1], [0, 0, 1, 1], [], []>} : vector<16x32xbf16>, vector<32x32xbf16>, vector<16x32xf32> -> vector<16x32xf32>
    %c0_17 = arith.constant 0 : index
    %c0_18 = arith.constant 0 : index
    %c0_19 = arith.constant 0 : index
    %49 = vector.load %arg6[%c0_17, %c0_18, %c0_19] : memref<16x1x32xf32, #tpu.memory_space<vmem>>, vector<1x1x32xf32>
    %50 = vector.shape_cast %49 : vector<1x1x32xf32> to vector<1x32xf32>
    %51 = vector.broadcast %50 : vector<1x32xf32> to vector<16x32xf32>
    %52 = arith.addf %48, %51 : vector<16x32xf32>
    %c1_20 = arith.constant 1 : index
    %c0_21 = arith.constant 0 : index
    %c0_22 = arith.constant 0 : index
    %53 = vector.load %arg5[%c1_20, %c0_21, %c0_22] : memref<16x32x32xbf16, #tpu.memory_space<vmem>>, vector<1x32x32xbf16>
    %54 = vector.shape_cast %53 : vector<1x32x32xbf16> to vector<32x32xbf16>
    %cst_23 = arith.constant dense<0.000000e+00> : vector<16x32xf32>
    %55 = tpu.matmul %45, %54, %cst_23 {dimension_numbers = #tpu.dot_dimension_numbers<[1], [0], [0], [1], [0, 0, 1, 1], [], []>} : vector<16x32xbf16>, vector<32x32xbf16>, vector<16x32xf32> -> vector<16x32xf32>
    %c1_24 = arith.constant 1 : index
    %c0_25 = arith.constant 0 : index
    %c0_26 = arith.constant 0 : index
    %56 = vector.load %arg6[%c1_24, %c0_25, %c0_26] : memref<16x1x32xf32, #tpu.memory_space<vmem>>, vector<1x1x32xf32>
    %57 = vector.shape_cast %56 : vector<1x1x32xf32> to vector<1x32xf32>
    %58 = vector.broadcast %57 : vector<1x32xf32> to vector<16x32xf32>
    %59 = arith.addf %55, %58 : vector<16x32xf32>
    %c2 = arith.constant 2 : index
    %c0_27 = arith.constant 0 : index
    %c0_28 = arith.constant 0 : index
    %60 = vector.load %arg5[%c2, %c0_27, %c0_28] : memref<16x32x32xbf16, #tpu.memory_space<vmem>>, vector<1x32x32xbf16>
    %61 = vector.shape_cast %60 : vector<1x32x32xbf16> to vector<32x32xbf16>
    %cst_29 = arith.constant dense<0.000000e+00> : vector<16x32xf32>
    %62 = tpu.matmul %45, %61, %cst_29 {dimension_numbers = #tpu.dot_dimension_numbers<[1], [0], [0], [1], [0, 0, 1, 1], [], []>} : vector<16x32xbf16>, vector<32x32xbf16>, vector<16x32xf32> -> vector<16x32xf32>
    %c2_30 = arith.constant 2 : index
    %c0_31 = arith.constant 0 : index
    %c0_32 = arith.constant 0 : index
    %63 = vector.load %arg6[%c2_30, %c0_31, %c0_32] : memref<16x1x32xf32, #tpu.memory_space<vmem>>, vector<1x1x32xf32>
    %64 = vector.shape_cast %63 : vector<1x1x32xf32> to vector<1x32xf32>
    %65 = vector.broadcast %64 : vector<1x32xf32> to vector<16x32xf32>
    %66 = arith.addf %62, %65 : vector<16x32xf32>
    %67 = arith.truncf %59 : vector<16x32xf32> to vector<16x32xbf16>
    %cst_33 = arith.constant 0.000000e+00 : f32
    %68 = vector.broadcast %cst_33 : f32 to vector<16x32xf32>
    %69 = vector.broadcast %23 : vector<1x32xf32> to vector<16x32xf32>
    %70 = arith.mulf %52, %69 : vector<16x32xf32>
    %71 = arith.truncf %70 : vector<16x32xf32> to vector<16x32xbf16>
    %cst_34 = arith.constant dense<0.000000e+00> : vector<16x16xf32>
    %72 = tpu.matmul %71, %67, %cst_34 {dimension_numbers = #tpu.dot_dimension_numbers<[1], [1], [0], [0], [0, 0, 1, 0], [], []>} : vector<16x32xbf16>, vector<16x32xbf16>, vector<16x16xf32> -> vector<16x16xf32>
    %73 = arith.addf %72, %13 : vector<16x16xf32>
    %cst_35 = arith.constant dense<0xFF800000> : vector<16xf32>
    %74 = vector.multi_reduction <maximumf>, %73, %cst_35 [1] : vector<16x16xf32> to vector<16xf32>
    %75 = vector.shape_cast %74 : vector<16xf32> to vector<16x1xf32>
    %76 = vector.broadcast %75 : vector<16x1xf32> to vector<16x16xf32>
    %77 = arith.subf %73, %76 : vector<16x16xf32>
    %78 = math.exp %77 : vector<16x16xf32>
    %cst_36 = arith.constant dense<0.000000e+00> : vector<16xf32>
    %79 = vector.multi_reduction <add>, %78, %cst_36 [1] : vector<16x16xf32> to vector<16xf32>
    %80 = vector.shape_cast %79 : vector<16xf32> to vector<16x1xf32>
    %81 = tpu.reciprocal %80 {approx = true} : vector<16x1xf32> -> vector<16x1xf32>
    %82 = vector.broadcast %81 : vector<16x1xf32> to vector<16x16xf32>
    %83 = arith.mulf %78, %82 : vector<16x16xf32>
    %84 = arith.truncf %83 : vector<16x16xf32> to vector<16x16xbf16>
    %85 = vector.broadcast %23 : vector<1x32xf32> to vector<16x32xf32>
    %86 = arith.mulf %66, %85 : vector<16x32xf32>
    %87 = arith.truncf %86 : vector<16x32xf32> to vector<16x32xbf16>
    %cst_37 = arith.constant dense<0.000000e+00> : vector<16x32xf32>
    %88 = tpu.matmul %84, %87, %cst_37 {dimension_numbers = #tpu.dot_dimension_numbers<[1], [0], [0], [1], [0, 0, 1, 1], [], []>} : vector<16x16xbf16>, vector<16x32xbf16>, vector<16x32xf32> -> vector<16x32xf32>
    %89 = arith.addf %68, %88 : vector<16x32xf32>
    %90 = vector.broadcast %30 : vector<1x32xf32> to vector<16x32xf32>
    %91 = arith.mulf %52, %90 : vector<16x32xf32>
    %92 = arith.truncf %91 : vector<16x32xf32> to vector<16x32xbf16>
    %cst_38 = arith.constant dense<0.000000e+00> : vector<16x16xf32>
    %93 = tpu.matmul %92, %67, %cst_38 {dimension_numbers = #tpu.dot_dimension_numbers<[1], [1], [0], [0], [0, 0, 1, 0], [], []>} : vector<16x32xbf16>, vector<16x32xbf16>, vector<16x16xf32> -> vector<16x16xf32>
    %94 = arith.addf %93, %13 : vector<16x16xf32>
    %cst_39 = arith.constant dense<0xFF800000> : vector<16xf32>
    %95 = vector.multi_reduction <maximumf>, %94, %cst_39 [1] : vector<16x16xf32> to vector<16xf32>
    %96 = vector.shape_cast %95 : vector<16xf32> to vector<16x1xf32>
    %97 = vector.broadcast %96 : vector<16x1xf32> to vector<16x16xf32>
    %98 = arith.subf %94, %97 : vector<16x16xf32>
    %99 = math.exp %98 : vector<16x16xf32>
    %cst_40 = arith.constant dense<0.000000e+00> : vector<16xf32>
    %100 = vector.multi_reduction <add>, %99, %cst_40 [1] : vector<16x16xf32> to vector<16xf32>
    %101 = vector.shape_cast %100 : vector<16xf32> to vector<16x1xf32>
    %102 = tpu.reciprocal %101 {approx = true} : vector<16x1xf32> -> vector<16x1xf32>
    %103 = vector.broadcast %102 : vector<16x1xf32> to vector<16x16xf32>
    %104 = arith.mulf %99, %103 : vector<16x16xf32>
    %105 = arith.truncf %104 : vector<16x16xf32> to vector<16x16xbf16>
    %106 = vector.broadcast %30 : vector<1x32xf32> to vector<16x32xf32>
    %107 = arith.mulf %66, %106 : vector<16x32xf32>
    %108 = arith.truncf %107 : vector<16x32xf32> to vector<16x32xbf16>
    %cst_41 = arith.constant dense<0.000000e+00> : vector<16x32xf32>
    %109 = tpu.matmul %105, %108, %cst_41 {dimension_numbers = #tpu.dot_dimension_numbers<[1], [0], [0], [1], [0, 0, 1, 1], [], []>} : vector<16x16xbf16>, vector<16x32xbf16>, vector<16x32xf32> -> vector<16x32xf32>
    %110 = arith.addf %89, %109 : vector<16x32xf32>
    %111 = vector.broadcast %37 : vector<1x32xf32> to vector<16x32xf32>
    %112 = arith.mulf %52, %111 : vector<16x32xf32>
    %113 = arith.truncf %112 : vector<16x32xf32> to vector<16x32xbf16>
    %cst_42 = arith.constant dense<0.000000e+00> : vector<16x16xf32>
    %114 = tpu.matmul %113, %67, %cst_42 {dimension_numbers = #tpu.dot_dimension_numbers<[1], [1], [0], [0], [0, 0, 1, 0], [], []>} : vector<16x32xbf16>, vector<16x32xbf16>, vector<16x16xf32> -> vector<16x16xf32>
    %115 = arith.addf %114, %13 : vector<16x16xf32>
    %cst_43 = arith.constant dense<0xFF800000> : vector<16xf32>
    %116 = vector.multi_reduction <maximumf>, %115, %cst_43 [1] : vector<16x16xf32> to vector<16xf32>
    %117 = vector.shape_cast %116 : vector<16xf32> to vector<16x1xf32>
    %118 = vector.broadcast %117 : vector<16x1xf32> to vector<16x16xf32>
    %119 = arith.subf %115, %118 : vector<16x16xf32>
    %120 = math.exp %119 : vector<16x16xf32>
    %cst_44 = arith.constant dense<0.000000e+00> : vector<16xf32>
    %121 = vector.multi_reduction <add>, %120, %cst_44 [1] : vector<16x16xf32> to vector<16xf32>
    %122 = vector.shape_cast %121 : vector<16xf32> to vector<16x1xf32>
    %123 = tpu.reciprocal %122 {approx = true} : vector<16x1xf32> -> vector<16x1xf32>
    %124 = vector.broadcast %123 : vector<16x1xf32> to vector<16x16xf32>
    %125 = arith.mulf %120, %124 : vector<16x16xf32>
    %126 = arith.truncf %125 : vector<16x16xf32> to vector<16x16xbf16>
    %127 = vector.broadcast %37 : vector<1x32xf32> to vector<16x32xf32>
    %128 = arith.mulf %66, %127 : vector<16x32xf32>
    %129 = arith.truncf %128 : vector<16x32xf32> to vector<16x32xbf16>
    %cst_45 = arith.constant dense<0.000000e+00> : vector<16x32xf32>
    %130 = tpu.matmul %126, %129, %cst_45 {dimension_numbers = #tpu.dot_dimension_numbers<[1], [0], [0], [1], [0, 0, 1, 1], [], []>} : vector<16x16xbf16>, vector<16x32xbf16>, vector<16x32xf32> -> vector<16x32xf32>
    %131 = arith.addf %110, %130 : vector<16x32xf32>
    %132 = vector.broadcast %44 : vector<1x32xf32> to vector<16x32xf32>
    %133 = arith.mulf %52, %132 : vector<16x32xf32>
    %134 = arith.truncf %133 : vector<16x32xf32> to vector<16x32xbf16>
    %cst_46 = arith.constant dense<0.000000e+00> : vector<16x16xf32>
    %135 = tpu.matmul %134, %67, %cst_46 {dimension_numbers = #tpu.dot_dimension_numbers<[1], [1], [0], [0], [0, 0, 1, 0], [], []>} : vector<16x32xbf16>, vector<16x32xbf16>, vector<16x16xf32> -> vector<16x16xf32>
    %136 = arith.addf %135, %13 : vector<16x16xf32>
    %cst_47 = arith.constant dense<0xFF800000> : vector<16xf32>
    %137 = vector.multi_reduction <maximumf>, %136, %cst_47 [1] : vector<16x16xf32> to vector<16xf32>
    %138 = vector.shape_cast %137 : vector<16xf32> to vector<16x1xf32>
    %139 = vector.broadcast %138 : vector<16x1xf32> to vector<16x16xf32>
    %140 = arith.subf %136, %139 : vector<16x16xf32>
    %141 = math.exp %140 : vector<16x16xf32>
    %cst_48 = arith.constant dense<0.000000e+00> : vector<16xf32>
    %142 = vector.multi_reduction <add>, %141, %cst_48 [1] : vector<16x16xf32> to vector<16xf32>
    %143 = vector.shape_cast %142 : vector<16xf32> to vector<16x1xf32>
    %144 = tpu.reciprocal %143 {approx = true} : vector<16x1xf32> -> vector<16x1xf32>
    %145 = vector.broadcast %144 : vector<16x1xf32> to vector<16x16xf32>
    %146 = arith.mulf %141, %145 : vector<16x16xf32>
    %147 = arith.truncf %146 : vector<16x16xf32> to vector<16x16xbf16>
    %148 = vector.broadcast %44 : vector<1x32xf32> to vector<16x32xf32>
    %149 = arith.mulf %66, %148 : vector<16x32xf32>
    %150 = arith.truncf %149 : vector<16x32xf32> to vector<16x32xbf16>
    %cst_49 = arith.constant dense<0.000000e+00> : vector<16x32xf32>
    %151 = tpu.matmul %147, %150, %cst_49 {dimension_numbers = #tpu.dot_dimension_numbers<[1], [0], [0], [1], [0, 0, 1, 1], [], []>} : vector<16x16xbf16>, vector<16x32xbf16>, vector<16x32xf32> -> vector<16x32xf32>
    %152 = arith.addf %131, %151 : vector<16x32xf32>
    %153 = arith.truncf %152 : vector<16x32xf32> to vector<16x32xbf16>
    %c3 = arith.constant 3 : index
    %c0_50 = arith.constant 0 : index
    %c0_51 = arith.constant 0 : index
    %154 = vector.load %arg5[%c3, %c0_50, %c0_51] : memref<16x32x32xbf16, #tpu.memory_space<vmem>>, vector<1x32x32xbf16>
    %155 = vector.shape_cast %154 : vector<1x32x32xbf16> to vector<32x32xbf16>
    %cst_52 = arith.constant dense<0.000000e+00> : vector<16x32xf32>
    %156 = tpu.matmul %153, %155, %cst_52 {dimension_numbers = #tpu.dot_dimension_numbers<[1], [0], [0], [1], [0, 0, 1, 1], [], []>} : vector<16x32xbf16>, vector<32x32xbf16>, vector<16x32xf32> -> vector<16x32xf32>
    %c3_53 = arith.constant 3 : index
    %c0_54 = arith.constant 0 : index
    %c0_55 = arith.constant 0 : index
    %157 = vector.load %arg6[%c3_53, %c0_54, %c0_55] : memref<16x1x32xf32, #tpu.memory_space<vmem>>, vector<1x1x32xf32>
    %158 = vector.shape_cast %157 : vector<1x1x32xf32> to vector<1x32xf32>
    %159 = vector.broadcast %158 : vector<1x32xf32> to vector<16x32xf32>
    %160 = arith.addf %156, %159 : vector<16x32xf32>
    %161 = arith.addf %10, %160 : vector<16x32xf32>
    %c0_56 = arith.constant 0 : index
    %c0_57 = arith.constant 0 : index
    %c0_58 = arith.constant 0 : index
    %162 = vector.load %arg7[%c0_56, %c0_57, %c0_58] : memref<12x1x32xf32, #tpu.memory_space<vmem>>, vector<1x1x32xf32>
    %163 = vector.shape_cast %162 : vector<1x1x32xf32> to vector<1x32xf32>
    %c1_59 = arith.constant 1 : index
    %c0_60 = arith.constant 0 : index
    %c0_61 = arith.constant 0 : index
    %164 = vector.load %arg7[%c1_59, %c0_60, %c0_61] : memref<12x1x32xf32, #tpu.memory_space<vmem>>, vector<1x1x32xf32>
    %165 = vector.shape_cast %164 : vector<1x1x32xf32> to vector<1x32xf32>
    %cst_62 = arith.constant dense<0.000000e+00> : vector<16xf32>
    %166 = vector.multi_reduction <add>, %161, %cst_62 [1] : vector<16x32xf32> to vector<16xf32>
    %167 = vector.shape_cast %166 : vector<16xf32> to vector<16x1xf32>
    %cst_63 = arith.constant 3.200000e+01 : f32
    %168 = vector.broadcast %cst_63 : f32 to vector<16x1xf32>
    %169 = arith.divf %167, %168 : vector<16x1xf32>
    %170 = vector.broadcast %169 : vector<16x1xf32> to vector<16x32xf32>
    %171 = arith.subf %161, %170 : vector<16x32xf32>
    %172 = arith.mulf %171, %171 : vector<16x32xf32>
    %cst_64 = arith.constant dense<0.000000e+00> : vector<16xf32>
    %173 = vector.multi_reduction <add>, %172, %cst_64 [1] : vector<16x32xf32> to vector<16xf32>
    %174 = vector.shape_cast %173 : vector<16xf32> to vector<16x1xf32>
    %cst_65 = arith.constant 3.200000e+01 : f32
    %175 = vector.broadcast %cst_65 : f32 to vector<16x1xf32>
    %176 = arith.divf %174, %175 : vector<16x1xf32>
    %177 = vector.broadcast %169 : vector<16x1xf32> to vector<16x32xf32>
    %178 = arith.subf %161, %177 : vector<16x32xf32>
    %cst_66 = arith.constant 9.99999974E-6 : f32
    %179 = vector.broadcast %cst_66 : f32 to vector<16x1xf32>
    %180 = arith.addf %176, %179 : vector<16x1xf32>
    %181 = math.rsqrt %180 : vector<16x1xf32>
    %182 = vector.broadcast %181 : vector<16x1xf32> to vector<16x32xf32>
    %183 = arith.mulf %178, %182 : vector<16x32xf32>
    %184 = vector.broadcast %163 : vector<1x32xf32> to vector<16x32xf32>
    %185 = arith.mulf %183, %184 : vector<16x32xf32>
    %186 = vector.broadcast %165 : vector<1x32xf32> to vector<16x32xf32>
    %187 = arith.addf %185, %186 : vector<16x32xf32>
    %188 = arith.truncf %187 : vector<16x32xf32> to vector<16x32xbf16>
    %c4 = arith.constant 4 : index
    %c0_67 = arith.constant 0 : index
    %c0_68 = arith.constant 0 : index
    %189 = vector.load %arg5[%c4, %c0_67, %c0_68] : memref<16x32x32xbf16, #tpu.memory_space<vmem>>, vector<1x32x32xbf16>
    %190 = vector.shape_cast %189 : vector<1x32x32xbf16> to vector<32x32xbf16>
    %cst_69 = arith.constant dense<0.000000e+00> : vector<16x32xf32>
    %191 = tpu.matmul %188, %190, %cst_69 {dimension_numbers = #tpu.dot_dimension_numbers<[1], [0], [0], [1], [0, 0, 1, 1], [], []>} : vector<16x32xbf16>, vector<32x32xbf16>, vector<16x32xf32> -> vector<16x32xf32>
    %c4_70 = arith.constant 4 : index
    %c0_71 = arith.constant 0 : index
    %c0_72 = arith.constant 0 : index
    %192 = vector.load %arg6[%c4_70, %c0_71, %c0_72] : memref<16x1x32xf32, #tpu.memory_space<vmem>>, vector<1x1x32xf32>
    %193 = vector.shape_cast %192 : vector<1x1x32xf32> to vector<1x32xf32>
    %194 = vector.broadcast %193 : vector<1x32xf32> to vector<16x32xf32>
    %195 = arith.addf %191, %194 : vector<16x32xf32>
    %c5 = arith.constant 5 : index
    %c0_73 = arith.constant 0 : index
    %c0_74 = arith.constant 0 : index
    %196 = vector.load %arg5[%c5, %c0_73, %c0_74] : memref<16x32x32xbf16, #tpu.memory_space<vmem>>, vector<1x32x32xbf16>
    %197 = vector.shape_cast %196 : vector<1x32x32xbf16> to vector<32x32xbf16>
    %cst_75 = arith.constant dense<0.000000e+00> : vector<16x32xf32>
    %198 = tpu.matmul %11, %197, %cst_75 {dimension_numbers = #tpu.dot_dimension_numbers<[1], [0], [0], [1], [0, 0, 1, 1], [], []>} : vector<16x32xbf16>, vector<32x32xbf16>, vector<16x32xf32> -> vector<16x32xf32>
    %c5_76 = arith.constant 5 : index
    %c0_77 = arith.constant 0 : index
    %c0_78 = arith.constant 0 : index
    %199 = vector.load %arg6[%c5_76, %c0_77, %c0_78] : memref<16x1x32xf32, #tpu.memory_space<vmem>>, vector<1x1x32xf32>
    %200 = vector.shape_cast %199 : vector<1x1x32xf32> to vector<1x32xf32>
    %201 = vector.broadcast %200 : vector<1x32xf32> to vector<16x32xf32>
    %202 = arith.addf %198, %201 : vector<16x32xf32>
    %c6 = arith.constant 6 : index
    %c0_79 = arith.constant 0 : index
    %c0_80 = arith.constant 0 : index
    %203 = vector.load %arg5[%c6, %c0_79, %c0_80] : memref<16x32x32xbf16, #tpu.memory_space<vmem>>, vector<1x32x32xbf16>
    %204 = vector.shape_cast %203 : vector<1x32x32xbf16> to vector<32x32xbf16>
    %cst_81 = arith.constant dense<0.000000e+00> : vector<16x32xf32>
    %205 = tpu.matmul %11, %204, %cst_81 {dimension_numbers = #tpu.dot_dimension_numbers<[1], [0], [0], [1], [0, 0, 1, 1], [], []>} : vector<16x32xbf16>, vector<32x32xbf16>, vector<16x32xf32> -> vector<16x32xf32>
    %c6_82 = arith.constant 6 : index
    %c0_83 = arith.constant 0 : index
    %c0_84 = arith.constant 0 : index
    %206 = vector.load %arg6[%c6_82, %c0_83, %c0_84] : memref<16x1x32xf32, #tpu.memory_space<vmem>>, vector<1x1x32xf32>
    %207 = vector.shape_cast %206 : vector<1x1x32xf32> to vector<1x32xf32>
    %208 = vector.broadcast %207 : vector<1x32xf32> to vector<16x32xf32>
    %209 = arith.addf %205, %208 : vector<16x32xf32>
    %210 = arith.truncf %202 : vector<16x32xf32> to vector<16x32xbf16>
    %cst_85 = arith.constant 0.000000e+00 : f32
    %211 = vector.broadcast %cst_85 : f32 to vector<16x32xf32>
    %212 = vector.broadcast %23 : vector<1x32xf32> to vector<16x32xf32>
    %213 = arith.mulf %195, %212 : vector<16x32xf32>
    %214 = arith.truncf %213 : vector<16x32xf32> to vector<16x32xbf16>
    %cst_86 = arith.constant dense<0.000000e+00> : vector<16x16xf32>
    %215 = tpu.matmul %214, %210, %cst_86 {dimension_numbers = #tpu.dot_dimension_numbers<[1], [1], [0], [0], [0, 0, 1, 0], [], []>} : vector<16x32xbf16>, vector<16x32xbf16>, vector<16x16xf32> -> vector<16x16xf32>
    %216 = arith.addf %215, %15 : vector<16x16xf32>
    %cst_87 = arith.constant dense<0xFF800000> : vector<16xf32>
    %217 = vector.multi_reduction <maximumf>, %216, %cst_87 [1] : vector<16x16xf32> to vector<16xf32>
    %218 = vector.shape_cast %217 : vector<16xf32> to vector<16x1xf32>
    %219 = vector.broadcast %218 : vector<16x1xf32> to vector<16x16xf32>
    %220 = arith.subf %216, %219 : vector<16x16xf32>
    %221 = math.exp %220 : vector<16x16xf32>
    %cst_88 = arith.constant dense<0.000000e+00> : vector<16xf32>
    %222 = vector.multi_reduction <add>, %221, %cst_88 [1] : vector<16x16xf32> to vector<16xf32>
    %223 = vector.shape_cast %222 : vector<16xf32> to vector<16x1xf32>
    %224 = tpu.reciprocal %223 {approx = true} : vector<16x1xf32> -> vector<16x1xf32>
    %225 = vector.broadcast %224 : vector<16x1xf32> to vector<16x16xf32>
    %226 = arith.mulf %221, %225 : vector<16x16xf32>
    %227 = arith.truncf %226 : vector<16x16xf32> to vector<16x16xbf16>
    %228 = vector.broadcast %23 : vector<1x32xf32> to vector<16x32xf32>
    %229 = arith.mulf %209, %228 : vector<16x32xf32>
    %230 = arith.truncf %229 : vector<16x32xf32> to vector<16x32xbf16>
    %cst_89 = arith.constant dense<0.000000e+00> : vector<16x32xf32>
    %231 = tpu.matmul %227, %230, %cst_89 {dimension_numbers = #tpu.dot_dimension_numbers<[1], [0], [0], [1], [0, 0, 1, 1], [], []>} : vector<16x16xbf16>, vector<16x32xbf16>, vector<16x32xf32> -> vector<16x32xf32>
    %232 = arith.addf %211, %231 : vector<16x32xf32>
    %233 = vector.broadcast %30 : vector<1x32xf32> to vector<16x32xf32>
    %234 = arith.mulf %195, %233 : vector<16x32xf32>
    %235 = arith.truncf %234 : vector<16x32xf32> to vector<16x32xbf16>
    %cst_90 = arith.constant dense<0.000000e+00> : vector<16x16xf32>
    %236 = tpu.matmul %235, %210, %cst_90 {dimension_numbers = #tpu.dot_dimension_numbers<[1], [1], [0], [0], [0, 0, 1, 0], [], []>} : vector<16x32xbf16>, vector<16x32xbf16>, vector<16x16xf32> -> vector<16x16xf32>
    %237 = arith.addf %236, %15 : vector<16x16xf32>
    %cst_91 = arith.constant dense<0xFF800000> : vector<16xf32>
    %238 = vector.multi_reduction <maximumf>, %237, %cst_91 [1] : vector<16x16xf32> to vector<16xf32>
    %239 = vector.shape_cast %238 : vector<16xf32> to vector<16x1xf32>
    %240 = vector.broadcast %239 : vector<16x1xf32> to vector<16x16xf32>
    %241 = arith.subf %237, %240 : vector<16x16xf32>
    %242 = math.exp %241 : vector<16x16xf32>
    %cst_92 = arith.constant dense<0.000000e+00> : vector<16xf32>
    %243 = vector.multi_reduction <add>, %242, %cst_92 [1] : vector<16x16xf32> to vector<16xf32>
    %244 = vector.shape_cast %243 : vector<16xf32> to vector<16x1xf32>
    %245 = tpu.reciprocal %244 {approx = true} : vector<16x1xf32> -> vector<16x1xf32>
    %246 = vector.broadcast %245 : vector<16x1xf32> to vector<16x16xf32>
    %247 = arith.mulf %242, %246 : vector<16x16xf32>
    %248 = arith.truncf %247 : vector<16x16xf32> to vector<16x16xbf16>
    %249 = vector.broadcast %30 : vector<1x32xf32> to vector<16x32xf32>
    %250 = arith.mulf %209, %249 : vector<16x32xf32>
    %251 = arith.truncf %250 : vector<16x32xf32> to vector<16x32xbf16>
    %cst_93 = arith.constant dense<0.000000e+00> : vector<16x32xf32>
    %252 = tpu.matmul %248, %251, %cst_93 {dimension_numbers = #tpu.dot_dimension_numbers<[1], [0], [0], [1], [0, 0, 1, 1], [], []>} : vector<16x16xbf16>, vector<16x32xbf16>, vector<16x32xf32> -> vector<16x32xf32>
    %253 = arith.addf %232, %252 : vector<16x32xf32>
    %254 = vector.broadcast %37 : vector<1x32xf32> to vector<16x32xf32>
    %255 = arith.mulf %195, %254 : vector<16x32xf32>
    %256 = arith.truncf %255 : vector<16x32xf32> to vector<16x32xbf16>
    %cst_94 = arith.constant dense<0.000000e+00> : vector<16x16xf32>
    %257 = tpu.matmul %256, %210, %cst_94 {dimension_numbers = #tpu.dot_dimension_numbers<[1], [1], [0], [0], [0, 0, 1, 0], [], []>} : vector<16x32xbf16>, vector<16x32xbf16>, vector<16x16xf32> -> vector<16x16xf32>
    %258 = arith.addf %257, %15 : vector<16x16xf32>
    %cst_95 = arith.constant dense<0xFF800000> : vector<16xf32>
    %259 = vector.multi_reduction <maximumf>, %258, %cst_95 [1] : vector<16x16xf32> to vector<16xf32>
    %260 = vector.shape_cast %259 : vector<16xf32> to vector<16x1xf32>
    %261 = vector.broadcast %260 : vector<16x1xf32> to vector<16x16xf32>
    %262 = arith.subf %258, %261 : vector<16x16xf32>
    %263 = math.exp %262 : vector<16x16xf32>
    %cst_96 = arith.constant dense<0.000000e+00> : vector<16xf32>
    %264 = vector.multi_reduction <add>, %263, %cst_96 [1] : vector<16x16xf32> to vector<16xf32>
    %265 = vector.shape_cast %264 : vector<16xf32> to vector<16x1xf32>
    %266 = tpu.reciprocal %265 {approx = true} : vector<16x1xf32> -> vector<16x1xf32>
    %267 = vector.broadcast %266 : vector<16x1xf32> to vector<16x16xf32>
    %268 = arith.mulf %263, %267 : vector<16x16xf32>
    %269 = arith.truncf %268 : vector<16x16xf32> to vector<16x16xbf16>
    %270 = vector.broadcast %37 : vector<1x32xf32> to vector<16x32xf32>
    %271 = arith.mulf %209, %270 : vector<16x32xf32>
    %272 = arith.truncf %271 : vector<16x32xf32> to vector<16x32xbf16>
    %cst_97 = arith.constant dense<0.000000e+00> : vector<16x32xf32>
    %273 = tpu.matmul %269, %272, %cst_97 {dimension_numbers = #tpu.dot_dimension_numbers<[1], [0], [0], [1], [0, 0, 1, 1], [], []>} : vector<16x16xbf16>, vector<16x32xbf16>, vector<16x32xf32> -> vector<16x32xf32>
    %274 = arith.addf %253, %273 : vector<16x32xf32>
    %275 = vector.broadcast %44 : vector<1x32xf32> to vector<16x32xf32>
    %276 = arith.mulf %195, %275 : vector<16x32xf32>
    %277 = arith.truncf %276 : vector<16x32xf32> to vector<16x32xbf16>
    %cst_98 = arith.constant dense<0.000000e+00> : vector<16x16xf32>
    %278 = tpu.matmul %277, %210, %cst_98 {dimension_numbers = #tpu.dot_dimension_numbers<[1], [1], [0], [0], [0, 0, 1, 0], [], []>} : vector<16x32xbf16>, vector<16x32xbf16>, vector<16x16xf32> -> vector<16x16xf32>
    %279 = arith.addf %278, %15 : vector<16x16xf32>
    %cst_99 = arith.constant dense<0xFF800000> : vector<16xf32>
    %280 = vector.multi_reduction <maximumf>, %279, %cst_99 [1] : vector<16x16xf32> to vector<16xf32>
    %281 = vector.shape_cast %280 : vector<16xf32> to vector<16x1xf32>
    %282 = vector.broadcast %281 : vector<16x1xf32> to vector<16x16xf32>
    %283 = arith.subf %279, %282 : vector<16x16xf32>
    %284 = math.exp %283 : vector<16x16xf32>
    %cst_100 = arith.constant dense<0.000000e+00> : vector<16xf32>
    %285 = vector.multi_reduction <add>, %284, %cst_100 [1] : vector<16x16xf32> to vector<16xf32>
    %286 = vector.shape_cast %285 : vector<16xf32> to vector<16x1xf32>
    %287 = tpu.reciprocal %286 {approx = true} : vector<16x1xf32> -> vector<16x1xf32>
    %288 = vector.broadcast %287 : vector<16x1xf32> to vector<16x16xf32>
    %289 = arith.mulf %284, %288 : vector<16x16xf32>
    %290 = arith.truncf %289 : vector<16x16xf32> to vector<16x16xbf16>
    %291 = vector.broadcast %44 : vector<1x32xf32> to vector<16x32xf32>
    %292 = arith.mulf %209, %291 : vector<16x32xf32>
    %293 = arith.truncf %292 : vector<16x32xf32> to vector<16x32xbf16>
    %cst_101 = arith.constant dense<0.000000e+00> : vector<16x32xf32>
    %294 = tpu.matmul %290, %293, %cst_101 {dimension_numbers = #tpu.dot_dimension_numbers<[1], [0], [0], [1], [0, 0, 1, 1], [], []>} : vector<16x16xbf16>, vector<16x32xbf16>, vector<16x32xf32> -> vector<16x32xf32>
    %295 = arith.addf %274, %294 : vector<16x32xf32>
    %296 = arith.truncf %295 : vector<16x32xf32> to vector<16x32xbf16>
    %c7 = arith.constant 7 : index
    %c0_102 = arith.constant 0 : index
    %c0_103 = arith.constant 0 : index
    %297 = vector.load %arg5[%c7, %c0_102, %c0_103] : memref<16x32x32xbf16, #tpu.memory_space<vmem>>, vector<1x32x32xbf16>
    %298 = vector.shape_cast %297 : vector<1x32x32xbf16> to vector<32x32xbf16>
    %cst_104 = arith.constant dense<0.000000e+00> : vector<16x32xf32>
    %299 = tpu.matmul %296, %298, %cst_104 {dimension_numbers = #tpu.dot_dimension_numbers<[1], [0], [0], [1], [0, 0, 1, 1], [], []>} : vector<16x32xbf16>, vector<32x32xbf16>, vector<16x32xf32> -> vector<16x32xf32>
    %c7_105 = arith.constant 7 : index
    %c0_106 = arith.constant 0 : index
    %c0_107 = arith.constant 0 : index
    %300 = vector.load %arg6[%c7_105, %c0_106, %c0_107] : memref<16x1x32xf32, #tpu.memory_space<vmem>>, vector<1x1x32xf32>
    %301 = vector.shape_cast %300 : vector<1x1x32xf32> to vector<1x32xf32>
    %302 = vector.broadcast %301 : vector<1x32xf32> to vector<16x32xf32>
    %303 = arith.addf %299, %302 : vector<16x32xf32>
    %304 = arith.addf %187, %303 : vector<16x32xf32>
    %c2_108 = arith.constant 2 : index
    %c0_109 = arith.constant 0 : index
    %c0_110 = arith.constant 0 : index
    %305 = vector.load %arg7[%c2_108, %c0_109, %c0_110] : memref<12x1x32xf32, #tpu.memory_space<vmem>>, vector<1x1x32xf32>
    %306 = vector.shape_cast %305 : vector<1x1x32xf32> to vector<1x32xf32>
    %c3_111 = arith.constant 3 : index
    %c0_112 = arith.constant 0 : index
    %c0_113 = arith.constant 0 : index
    %307 = vector.load %arg7[%c3_111, %c0_112, %c0_113] : memref<12x1x32xf32, #tpu.memory_space<vmem>>, vector<1x1x32xf32>
    %308 = vector.shape_cast %307 : vector<1x1x32xf32> to vector<1x32xf32>
    %cst_114 = arith.constant dense<0.000000e+00> : vector<16xf32>
    %309 = vector.multi_reduction <add>, %304, %cst_114 [1] : vector<16x32xf32> to vector<16xf32>
    %310 = vector.shape_cast %309 : vector<16xf32> to vector<16x1xf32>
    %cst_115 = arith.constant 3.200000e+01 : f32
    %311 = vector.broadcast %cst_115 : f32 to vector<16x1xf32>
    %312 = arith.divf %310, %311 : vector<16x1xf32>
    %313 = vector.broadcast %312 : vector<16x1xf32> to vector<16x32xf32>
    %314 = arith.subf %304, %313 : vector<16x32xf32>
    %315 = arith.mulf %314, %314 : vector<16x32xf32>
    %cst_116 = arith.constant dense<0.000000e+00> : vector<16xf32>
    %316 = vector.multi_reduction <add>, %315, %cst_116 [1] : vector<16x32xf32> to vector<16xf32>
    %317 = vector.shape_cast %316 : vector<16xf32> to vector<16x1xf32>
    %cst_117 = arith.constant 3.200000e+01 : f32
    %318 = vector.broadcast %cst_117 : f32 to vector<16x1xf32>
    %319 = arith.divf %317, %318 : vector<16x1xf32>
    %320 = vector.broadcast %312 : vector<16x1xf32> to vector<16x32xf32>
    %321 = arith.subf %304, %320 : vector<16x32xf32>
    %cst_118 = arith.constant 9.99999974E-6 : f32
    %322 = vector.broadcast %cst_118 : f32 to vector<16x1xf32>
    %323 = arith.addf %319, %322 : vector<16x1xf32>
    %324 = math.rsqrt %323 : vector<16x1xf32>
    %325 = vector.broadcast %324 : vector<16x1xf32> to vector<16x32xf32>
    %326 = arith.mulf %321, %325 : vector<16x32xf32>
    %327 = vector.broadcast %306 : vector<1x32xf32> to vector<16x32xf32>
    %328 = arith.mulf %326, %327 : vector<16x32xf32>
    %329 = vector.broadcast %308 : vector<1x32xf32> to vector<16x32xf32>
    %330 = arith.addf %328, %329 : vector<16x32xf32>
    %331 = arith.truncf %330 : vector<16x32xf32> to vector<16x32xbf16>
    %c0_119 = arith.constant 0 : index
    %c0_120 = arith.constant 0 : index
    %c0_121 = arith.constant 0 : index
    %332 = vector.load %arg8[%c0_119, %c0_120, %c0_121] : memref<2x32x128xbf16, #tpu.memory_space<vmem>>, vector<1x32x128xbf16>
    %333 = vector.shape_cast %332 : vector<1x32x128xbf16> to vector<32x128xbf16>
    %cst_122 = arith.constant dense<0.000000e+00> : vector<16x128xf32>
    %334 = tpu.matmul %331, %333, %cst_122 {dimension_numbers = #tpu.dot_dimension_numbers<[1], [0], [0], [1], [0, 0, 1, 1], [], []>} : vector<16x32xbf16>, vector<32x128xbf16>, vector<16x128xf32> -> vector<16x128xf32>
    %c0_123 = arith.constant 0 : index
    %c0_124 = arith.constant 0 : index
    %c0_125 = arith.constant 0 : index
    %335 = vector.load %arg9[%c0_123, %c0_124, %c0_125] : memref<2x1x128xf32, #tpu.memory_space<vmem>>, vector<1x1x128xf32>
    %336 = vector.shape_cast %335 : vector<1x1x128xf32> to vector<1x128xf32>
    %337 = vector.broadcast %336 : vector<1x128xf32> to vector<16x128xf32>
    %338 = arith.addf %334, %337 : vector<16x128xf32>
    %cst_126 = arith.constant 0.000000e+00 : f32
    %339 = vector.broadcast %cst_126 : f32 to vector<16x128xf32>
    %340 = arith.maximumf %338, %339 : vector<16x128xf32>
    %341 = arith.truncf %340 : vector<16x128xf32> to vector<16x128xbf16>
    %c0_127 = arith.constant 0 : index
    %c0_128 = arith.constant 0 : index
    %c0_129 = arith.constant 0 : index
    %342 = vector.load %arg10[%c0_127, %c0_128, %c0_129] : memref<2x128x32xbf16, #tpu.memory_space<vmem>>, vector<1x128x32xbf16>
    %343 = vector.shape_cast %342 : vector<1x128x32xbf16> to vector<128x32xbf16>
    %cst_130 = arith.constant dense<0.000000e+00> : vector<16x32xf32>
    %344 = tpu.matmul %341, %343, %cst_130 {dimension_numbers = #tpu.dot_dimension_numbers<[1], [0], [0], [1], [0, 0, 1, 1], [], []>} : vector<16x128xbf16>, vector<128x32xbf16>, vector<16x32xf32> -> vector<16x32xf32>
    %c0_131 = arith.constant 0 : index
    %c0_132 = arith.constant 0 : index
    %c0_133 = arith.constant 0 : index
    %345 = vector.load %arg11[%c0_131, %c0_132, %c0_133] : memref<2x1x32xf32, #tpu.memory_space<vmem>>, vector<1x1x32xf32>
    %346 = vector.shape_cast %345 : vector<1x1x32xf32> to vector<1x32xf32>
    %347 = vector.broadcast %346 : vector<1x32xf32> to vector<16x32xf32>
    %348 = arith.addf %344, %347 : vector<16x32xf32>
    %349 = arith.addf %330, %348 : vector<16x32xf32>
    %c4_134 = arith.constant 4 : index
    %c0_135 = arith.constant 0 : index
    %c0_136 = arith.constant 0 : index
    %350 = vector.load %arg7[%c4_134, %c0_135, %c0_136] : memref<12x1x32xf32, #tpu.memory_space<vmem>>, vector<1x1x32xf32>
    %351 = vector.shape_cast %350 : vector<1x1x32xf32> to vector<1x32xf32>
    %c5_137 = arith.constant 5 : index
    %c0_138 = arith.constant 0 : index
    %c0_139 = arith.constant 0 : index
    %352 = vector.load %arg7[%c5_137, %c0_138, %c0_139] : memref<12x1x32xf32, #tpu.memory_space<vmem>>, vector<1x1x32xf32>
    %353 = vector.shape_cast %352 : vector<1x1x32xf32> to vector<1x32xf32>
    %cst_140 = arith.constant dense<0.000000e+00> : vector<16xf32>
    %354 = vector.multi_reduction <add>, %349, %cst_140 [1] : vector<16x32xf32> to vector<16xf32>
    %355 = vector.shape_cast %354 : vector<16xf32> to vector<16x1xf32>
    %cst_141 = arith.constant 3.200000e+01 : f32
    %356 = vector.broadcast %cst_141 : f32 to vector<16x1xf32>
    %357 = arith.divf %355, %356 : vector<16x1xf32>
    %358 = vector.broadcast %357 : vector<16x1xf32> to vector<16x32xf32>
    %359 = arith.subf %349, %358 : vector<16x32xf32>
    %360 = arith.mulf %359, %359 : vector<16x32xf32>
    %cst_142 = arith.constant dense<0.000000e+00> : vector<16xf32>
    %361 = vector.multi_reduction <add>, %360, %cst_142 [1] : vector<16x32xf32> to vector<16xf32>
    %362 = vector.shape_cast %361 : vector<16xf32> to vector<16x1xf32>
    %cst_143 = arith.constant 3.200000e+01 : f32
    %363 = vector.broadcast %cst_143 : f32 to vector<16x1xf32>
    %364 = arith.divf %362, %363 : vector<16x1xf32>
    %365 = vector.broadcast %357 : vector<16x1xf32> to vector<16x32xf32>
    %366 = arith.subf %349, %365 : vector<16x32xf32>
    %cst_144 = arith.constant 9.99999974E-6 : f32
    %367 = vector.broadcast %cst_144 : f32 to vector<16x1xf32>
    %368 = arith.addf %364, %367 : vector<16x1xf32>
    %369 = math.rsqrt %368 : vector<16x1xf32>
    %370 = vector.broadcast %369 : vector<16x1xf32> to vector<16x32xf32>
    %371 = arith.mulf %366, %370 : vector<16x32xf32>
    %372 = vector.broadcast %351 : vector<1x32xf32> to vector<16x32xf32>
    %373 = arith.mulf %371, %372 : vector<16x32xf32>
    %374 = vector.broadcast %353 : vector<1x32xf32> to vector<16x32xf32>
    %375 = arith.addf %373, %374 : vector<16x32xf32>
    %376 = arith.truncf %375 : vector<16x32xf32> to vector<16x32xbf16>
    %c8 = arith.constant 8 : index
    %c0_145 = arith.constant 0 : index
    %c0_146 = arith.constant 0 : index
    %377 = vector.load %arg5[%c8, %c0_145, %c0_146] : memref<16x32x32xbf16, #tpu.memory_space<vmem>>, vector<1x32x32xbf16>
    %378 = vector.shape_cast %377 : vector<1x32x32xbf16> to vector<32x32xbf16>
    %cst_147 = arith.constant dense<0.000000e+00> : vector<16x32xf32>
    %379 = tpu.matmul %376, %378, %cst_147 {dimension_numbers = #tpu.dot_dimension_numbers<[1], [0], [0], [1], [0, 0, 1, 1], [], []>} : vector<16x32xbf16>, vector<32x32xbf16>, vector<16x32xf32> -> vector<16x32xf32>
    %c8_148 = arith.constant 8 : index
    %c0_149 = arith.constant 0 : index
    %c0_150 = arith.constant 0 : index
    %380 = vector.load %arg6[%c8_148, %c0_149, %c0_150] : memref<16x1x32xf32, #tpu.memory_space<vmem>>, vector<1x1x32xf32>
    %381 = vector.shape_cast %380 : vector<1x1x32xf32> to vector<1x32xf32>
    %382 = vector.broadcast %381 : vector<1x32xf32> to vector<16x32xf32>
    %383 = arith.addf %379, %382 : vector<16x32xf32>
    %c9 = arith.constant 9 : index
    %c0_151 = arith.constant 0 : index
    %c0_152 = arith.constant 0 : index
    %384 = vector.load %arg5[%c9, %c0_151, %c0_152] : memref<16x32x32xbf16, #tpu.memory_space<vmem>>, vector<1x32x32xbf16>
    %385 = vector.shape_cast %384 : vector<1x32x32xbf16> to vector<32x32xbf16>
    %cst_153 = arith.constant dense<0.000000e+00> : vector<16x32xf32>
    %386 = tpu.matmul %376, %385, %cst_153 {dimension_numbers = #tpu.dot_dimension_numbers<[1], [0], [0], [1], [0, 0, 1, 1], [], []>} : vector<16x32xbf16>, vector<32x32xbf16>, vector<16x32xf32> -> vector<16x32xf32>
    %c9_154 = arith.constant 9 : index
    %c0_155 = arith.constant 0 : index
    %c0_156 = arith.constant 0 : index
    %387 = vector.load %arg6[%c9_154, %c0_155, %c0_156] : memref<16x1x32xf32, #tpu.memory_space<vmem>>, vector<1x1x32xf32>
    %388 = vector.shape_cast %387 : vector<1x1x32xf32> to vector<1x32xf32>
    %389 = vector.broadcast %388 : vector<1x32xf32> to vector<16x32xf32>
    %390 = arith.addf %386, %389 : vector<16x32xf32>
    %c10 = arith.constant 10 : index
    %c0_157 = arith.constant 0 : index
    %c0_158 = arith.constant 0 : index
    %391 = vector.load %arg5[%c10, %c0_157, %c0_158] : memref<16x32x32xbf16, #tpu.memory_space<vmem>>, vector<1x32x32xbf16>
    %392 = vector.shape_cast %391 : vector<1x32x32xbf16> to vector<32x32xbf16>
    %cst_159 = arith.constant dense<0.000000e+00> : vector<16x32xf32>
    %393 = tpu.matmul %376, %392, %cst_159 {dimension_numbers = #tpu.dot_dimension_numbers<[1], [0], [0], [1], [0, 0, 1, 1], [], []>} : vector<16x32xbf16>, vector<32x32xbf16>, vector<16x32xf32> -> vector<16x32xf32>
    %c10_160 = arith.constant 10 : index
    %c0_161 = arith.constant 0 : index
    %c0_162 = arith.constant 0 : index
    %394 = vector.load %arg6[%c10_160, %c0_161, %c0_162] : memref<16x1x32xf32, #tpu.memory_space<vmem>>, vector<1x1x32xf32>
    %395 = vector.shape_cast %394 : vector<1x1x32xf32> to vector<1x32xf32>
    %396 = vector.broadcast %395 : vector<1x32xf32> to vector<16x32xf32>
    %397 = arith.addf %393, %396 : vector<16x32xf32>
    %398 = arith.truncf %390 : vector<16x32xf32> to vector<16x32xbf16>
    %cst_163 = arith.constant 0.000000e+00 : f32
    %399 = vector.broadcast %cst_163 : f32 to vector<16x32xf32>
    %400 = vector.broadcast %23 : vector<1x32xf32> to vector<16x32xf32>
    %401 = arith.mulf %383, %400 : vector<16x32xf32>
    %402 = arith.truncf %401 : vector<16x32xf32> to vector<16x32xbf16>
    %cst_164 = arith.constant dense<0.000000e+00> : vector<16x16xf32>
    %403 = tpu.matmul %402, %398, %cst_164 {dimension_numbers = #tpu.dot_dimension_numbers<[1], [1], [0], [0], [0, 0, 1, 0], [], []>} : vector<16x32xbf16>, vector<16x32xbf16>, vector<16x16xf32> -> vector<16x16xf32>
    %404 = arith.addf %403, %13 : vector<16x16xf32>
    %cst_165 = arith.constant dense<0xFF800000> : vector<16xf32>
    %405 = vector.multi_reduction <maximumf>, %404, %cst_165 [1] : vector<16x16xf32> to vector<16xf32>
    %406 = vector.shape_cast %405 : vector<16xf32> to vector<16x1xf32>
    %407 = vector.broadcast %406 : vector<16x1xf32> to vector<16x16xf32>
    %408 = arith.subf %404, %407 : vector<16x16xf32>
    %409 = math.exp %408 : vector<16x16xf32>
    %cst_166 = arith.constant dense<0.000000e+00> : vector<16xf32>
    %410 = vector.multi_reduction <add>, %409, %cst_166 [1] : vector<16x16xf32> to vector<16xf32>
    %411 = vector.shape_cast %410 : vector<16xf32> to vector<16x1xf32>
    %412 = tpu.reciprocal %411 {approx = true} : vector<16x1xf32> -> vector<16x1xf32>
    %413 = vector.broadcast %412 : vector<16x1xf32> to vector<16x16xf32>
    %414 = arith.mulf %409, %413 : vector<16x16xf32>
    %415 = arith.truncf %414 : vector<16x16xf32> to vector<16x16xbf16>
    %416 = vector.broadcast %23 : vector<1x32xf32> to vector<16x32xf32>
    %417 = arith.mulf %397, %416 : vector<16x32xf32>
    %418 = arith.truncf %417 : vector<16x32xf32> to vector<16x32xbf16>
    %cst_167 = arith.constant dense<0.000000e+00> : vector<16x32xf32>
    %419 = tpu.matmul %415, %418, %cst_167 {dimension_numbers = #tpu.dot_dimension_numbers<[1], [0], [0], [1], [0, 0, 1, 1], [], []>} : vector<16x16xbf16>, vector<16x32xbf16>, vector<16x32xf32> -> vector<16x32xf32>
    %420 = arith.addf %399, %419 : vector<16x32xf32>
    %421 = vector.broadcast %30 : vector<1x32xf32> to vector<16x32xf32>
    %422 = arith.mulf %383, %421 : vector<16x32xf32>
    %423 = arith.truncf %422 : vector<16x32xf32> to vector<16x32xbf16>
    %cst_168 = arith.constant dense<0.000000e+00> : vector<16x16xf32>
    %424 = tpu.matmul %423, %398, %cst_168 {dimension_numbers = #tpu.dot_dimension_numbers<[1], [1], [0], [0], [0, 0, 1, 0], [], []>} : vector<16x32xbf16>, vector<16x32xbf16>, vector<16x16xf32> -> vector<16x16xf32>
    %425 = arith.addf %424, %13 : vector<16x16xf32>
    %cst_169 = arith.constant dense<0xFF800000> : vector<16xf32>
    %426 = vector.multi_reduction <maximumf>, %425, %cst_169 [1] : vector<16x16xf32> to vector<16xf32>
    %427 = vector.shape_cast %426 : vector<16xf32> to vector<16x1xf32>
    %428 = vector.broadcast %427 : vector<16x1xf32> to vector<16x16xf32>
    %429 = arith.subf %425, %428 : vector<16x16xf32>
    %430 = math.exp %429 : vector<16x16xf32>
    %cst_170 = arith.constant dense<0.000000e+00> : vector<16xf32>
    %431 = vector.multi_reduction <add>, %430, %cst_170 [1] : vector<16x16xf32> to vector<16xf32>
    %432 = vector.shape_cast %431 : vector<16xf32> to vector<16x1xf32>
    %433 = tpu.reciprocal %432 {approx = true} : vector<16x1xf32> -> vector<16x1xf32>
    %434 = vector.broadcast %433 : vector<16x1xf32> to vector<16x16xf32>
    %435 = arith.mulf %430, %434 : vector<16x16xf32>
    %436 = arith.truncf %435 : vector<16x16xf32> to vector<16x16xbf16>
    %437 = vector.broadcast %30 : vector<1x32xf32> to vector<16x32xf32>
    %438 = arith.mulf %397, %437 : vector<16x32xf32>
    %439 = arith.truncf %438 : vector<16x32xf32> to vector<16x32xbf16>
    %cst_171 = arith.constant dense<0.000000e+00> : vector<16x32xf32>
    %440 = tpu.matmul %436, %439, %cst_171 {dimension_numbers = #tpu.dot_dimension_numbers<[1], [0], [0], [1], [0, 0, 1, 1], [], []>} : vector<16x16xbf16>, vector<16x32xbf16>, vector<16x32xf32> -> vector<16x32xf32>
    %441 = arith.addf %420, %440 : vector<16x32xf32>
    %442 = vector.broadcast %37 : vector<1x32xf32> to vector<16x32xf32>
    %443 = arith.mulf %383, %442 : vector<16x32xf32>
    %444 = arith.truncf %443 : vector<16x32xf32> to vector<16x32xbf16>
    %cst_172 = arith.constant dense<0.000000e+00> : vector<16x16xf32>
    %445 = tpu.matmul %444, %398, %cst_172 {dimension_numbers = #tpu.dot_dimension_numbers<[1], [1], [0], [0], [0, 0, 1, 0], [], []>} : vector<16x32xbf16>, vector<16x32xbf16>, vector<16x16xf32> -> vector<16x16xf32>
    %446 = arith.addf %445, %13 : vector<16x16xf32>
    %cst_173 = arith.constant dense<0xFF800000> : vector<16xf32>
    %447 = vector.multi_reduction <maximumf>, %446, %cst_173 [1] : vector<16x16xf32> to vector<16xf32>
    %448 = vector.shape_cast %447 : vector<16xf32> to vector<16x1xf32>
    %449 = vector.broadcast %448 : vector<16x1xf32> to vector<16x16xf32>
    %450 = arith.subf %446, %449 : vector<16x16xf32>
    %451 = math.exp %450 : vector<16x16xf32>
    %cst_174 = arith.constant dense<0.000000e+00> : vector<16xf32>
    %452 = vector.multi_reduction <add>, %451, %cst_174 [1] : vector<16x16xf32> to vector<16xf32>
    %453 = vector.shape_cast %452 : vector<16xf32> to vector<16x1xf32>
    %454 = tpu.reciprocal %453 {approx = true} : vector<16x1xf32> -> vector<16x1xf32>
    %455 = vector.broadcast %454 : vector<16x1xf32> to vector<16x16xf32>
    %456 = arith.mulf %451, %455 : vector<16x16xf32>
    %457 = arith.truncf %456 : vector<16x16xf32> to vector<16x16xbf16>
    %458 = vector.broadcast %37 : vector<1x32xf32> to vector<16x32xf32>
    %459 = arith.mulf %397, %458 : vector<16x32xf32>
    %460 = arith.truncf %459 : vector<16x32xf32> to vector<16x32xbf16>
    %cst_175 = arith.constant dense<0.000000e+00> : vector<16x32xf32>
    %461 = tpu.matmul %457, %460, %cst_175 {dimension_numbers = #tpu.dot_dimension_numbers<[1], [0], [0], [1], [0, 0, 1, 1], [], []>} : vector<16x16xbf16>, vector<16x32xbf16>, vector<16x32xf32> -> vector<16x32xf32>
    %462 = arith.addf %441, %461 : vector<16x32xf32>
    %463 = vector.broadcast %44 : vector<1x32xf32> to vector<16x32xf32>
    %464 = arith.mulf %383, %463 : vector<16x32xf32>
    %465 = arith.truncf %464 : vector<16x32xf32> to vector<16x32xbf16>
    %cst_176 = arith.constant dense<0.000000e+00> : vector<16x16xf32>
    %466 = tpu.matmul %465, %398, %cst_176 {dimension_numbers = #tpu.dot_dimension_numbers<[1], [1], [0], [0], [0, 0, 1, 0], [], []>} : vector<16x32xbf16>, vector<16x32xbf16>, vector<16x16xf32> -> vector<16x16xf32>
    %467 = arith.addf %466, %13 : vector<16x16xf32>
    %cst_177 = arith.constant dense<0xFF800000> : vector<16xf32>
    %468 = vector.multi_reduction <maximumf>, %467, %cst_177 [1] : vector<16x16xf32> to vector<16xf32>
    %469 = vector.shape_cast %468 : vector<16xf32> to vector<16x1xf32>
    %470 = vector.broadcast %469 : vector<16x1xf32> to vector<16x16xf32>
    %471 = arith.subf %467, %470 : vector<16x16xf32>
    %472 = math.exp %471 : vector<16x16xf32>
    %cst_178 = arith.constant dense<0.000000e+00> : vector<16xf32>
    %473 = vector.multi_reduction <add>, %472, %cst_178 [1] : vector<16x16xf32> to vector<16xf32>
    %474 = vector.shape_cast %473 : vector<16xf32> to vector<16x1xf32>
    %475 = tpu.reciprocal %474 {approx = true} : vector<16x1xf32> -> vector<16x1xf32>
    %476 = vector.broadcast %475 : vector<16x1xf32> to vector<16x16xf32>
    %477 = arith.mulf %472, %476 : vector<16x16xf32>
    %478 = arith.truncf %477 : vector<16x16xf32> to vector<16x16xbf16>
    %479 = vector.broadcast %44 : vector<1x32xf32> to vector<16x32xf32>
    %480 = arith.mulf %397, %479 : vector<16x32xf32>
    %481 = arith.truncf %480 : vector<16x32xf32> to vector<16x32xbf16>
    %cst_179 = arith.constant dense<0.000000e+00> : vector<16x32xf32>
    %482 = tpu.matmul %478, %481, %cst_179 {dimension_numbers = #tpu.dot_dimension_numbers<[1], [0], [0], [1], [0, 0, 1, 1], [], []>} : vector<16x16xbf16>, vector<16x32xbf16>, vector<16x32xf32> -> vector<16x32xf32>
    %483 = arith.addf %462, %482 : vector<16x32xf32>
    %484 = arith.truncf %483 : vector<16x32xf32> to vector<16x32xbf16>
    %c11 = arith.constant 11 : index
    %c0_180 = arith.constant 0 : index
    %c0_181 = arith.constant 0 : index
    %485 = vector.load %arg5[%c11, %c0_180, %c0_181] : memref<16x32x32xbf16, #tpu.memory_space<vmem>>, vector<1x32x32xbf16>
    %486 = vector.shape_cast %485 : vector<1x32x32xbf16> to vector<32x32xbf16>
    %cst_182 = arith.constant dense<0.000000e+00> : vector<16x32xf32>
    %487 = tpu.matmul %484, %486, %cst_182 {dimension_numbers = #tpu.dot_dimension_numbers<[1], [0], [0], [1], [0, 0, 1, 1], [], []>} : vector<16x32xbf16>, vector<32x32xbf16>, vector<16x32xf32> -> vector<16x32xf32>
    %c11_183 = arith.constant 11 : index
    %c0_184 = arith.constant 0 : index
    %c0_185 = arith.constant 0 : index
    %488 = vector.load %arg6[%c11_183, %c0_184, %c0_185] : memref<16x1x32xf32, #tpu.memory_space<vmem>>, vector<1x1x32xf32>
    %489 = vector.shape_cast %488 : vector<1x1x32xf32> to vector<1x32xf32>
    %490 = vector.broadcast %489 : vector<1x32xf32> to vector<16x32xf32>
    %491 = arith.addf %487, %490 : vector<16x32xf32>
    %492 = arith.addf %375, %491 : vector<16x32xf32>
    %c6_186 = arith.constant 6 : index
    %c0_187 = arith.constant 0 : index
    %c0_188 = arith.constant 0 : index
    %493 = vector.load %arg7[%c6_186, %c0_187, %c0_188] : memref<12x1x32xf32, #tpu.memory_space<vmem>>, vector<1x1x32xf32>
    %494 = vector.shape_cast %493 : vector<1x1x32xf32> to vector<1x32xf32>
    %c7_189 = arith.constant 7 : index
    %c0_190 = arith.constant 0 : index
    %c0_191 = arith.constant 0 : index
    %495 = vector.load %arg7[%c7_189, %c0_190, %c0_191] : memref<12x1x32xf32, #tpu.memory_space<vmem>>, vector<1x1x32xf32>
    %496 = vector.shape_cast %495 : vector<1x1x32xf32> to vector<1x32xf32>
    %cst_192 = arith.constant dense<0.000000e+00> : vector<16xf32>
    %497 = vector.multi_reduction <add>, %492, %cst_192 [1] : vector<16x32xf32> to vector<16xf32>
    %498 = vector.shape_cast %497 : vector<16xf32> to vector<16x1xf32>
    %cst_193 = arith.constant 3.200000e+01 : f32
    %499 = vector.broadcast %cst_193 : f32 to vector<16x1xf32>
    %500 = arith.divf %498, %499 : vector<16x1xf32>
    %501 = vector.broadcast %500 : vector<16x1xf32> to vector<16x32xf32>
    %502 = arith.subf %492, %501 : vector<16x32xf32>
    %503 = arith.mulf %502, %502 : vector<16x32xf32>
    %cst_194 = arith.constant dense<0.000000e+00> : vector<16xf32>
    %504 = vector.multi_reduction <add>, %503, %cst_194 [1] : vector<16x32xf32> to vector<16xf32>
    %505 = vector.shape_cast %504 : vector<16xf32> to vector<16x1xf32>
    %cst_195 = arith.constant 3.200000e+01 : f32
    %506 = vector.broadcast %cst_195 : f32 to vector<16x1xf32>
    %507 = arith.divf %505, %506 : vector<16x1xf32>
    %508 = vector.broadcast %500 : vector<16x1xf32> to vector<16x32xf32>
    %509 = arith.subf %492, %508 : vector<16x32xf32>
    %cst_196 = arith.constant 9.99999974E-6 : f32
    %510 = vector.broadcast %cst_196 : f32 to vector<16x1xf32>
    %511 = arith.addf %507, %510 : vector<16x1xf32>
    %512 = math.rsqrt %511 : vector<16x1xf32>
    %513 = vector.broadcast %512 : vector<16x1xf32> to vector<16x32xf32>
    %514 = arith.mulf %509, %513 : vector<16x32xf32>
    %515 = vector.broadcast %494 : vector<1x32xf32> to vector<16x32xf32>
    %516 = arith.mulf %514, %515 : vector<16x32xf32>
    %517 = vector.broadcast %496 : vector<1x32xf32> to vector<16x32xf32>
    %518 = arith.addf %516, %517 : vector<16x32xf32>
    %519 = arith.truncf %518 : vector<16x32xf32> to vector<16x32xbf16>
    %c12 = arith.constant 12 : index
    %c0_197 = arith.constant 0 : index
    %c0_198 = arith.constant 0 : index
    %520 = vector.load %arg5[%c12, %c0_197, %c0_198] : memref<16x32x32xbf16, #tpu.memory_space<vmem>>, vector<1x32x32xbf16>
    %521 = vector.shape_cast %520 : vector<1x32x32xbf16> to vector<32x32xbf16>
    %cst_199 = arith.constant dense<0.000000e+00> : vector<16x32xf32>
    %522 = tpu.matmul %519, %521, %cst_199 {dimension_numbers = #tpu.dot_dimension_numbers<[1], [0], [0], [1], [0, 0, 1, 1], [], []>} : vector<16x32xbf16>, vector<32x32xbf16>, vector<16x32xf32> -> vector<16x32xf32>
    %c12_200 = arith.constant 12 : index
    %c0_201 = arith.constant 0 : index
    %c0_202 = arith.constant 0 : index
    %523 = vector.load %arg6[%c12_200, %c0_201, %c0_202] : memref<16x1x32xf32, #tpu.memory_space<vmem>>, vector<1x1x32xf32>
    %524 = vector.shape_cast %523 : vector<1x1x32xf32> to vector<1x32xf32>
    %525 = vector.broadcast %524 : vector<1x32xf32> to vector<16x32xf32>
    %526 = arith.addf %522, %525 : vector<16x32xf32>
    %c13 = arith.constant 13 : index
    %c0_203 = arith.constant 0 : index
    %c0_204 = arith.constant 0 : index
    %527 = vector.load %arg5[%c13, %c0_203, %c0_204] : memref<16x32x32xbf16, #tpu.memory_space<vmem>>, vector<1x32x32xbf16>
    %528 = vector.shape_cast %527 : vector<1x32x32xbf16> to vector<32x32xbf16>
    %cst_205 = arith.constant dense<0.000000e+00> : vector<16x32xf32>
    %529 = tpu.matmul %11, %528, %cst_205 {dimension_numbers = #tpu.dot_dimension_numbers<[1], [0], [0], [1], [0, 0, 1, 1], [], []>} : vector<16x32xbf16>, vector<32x32xbf16>, vector<16x32xf32> -> vector<16x32xf32>
    %c13_206 = arith.constant 13 : index
    %c0_207 = arith.constant 0 : index
    %c0_208 = arith.constant 0 : index
    %530 = vector.load %arg6[%c13_206, %c0_207, %c0_208] : memref<16x1x32xf32, #tpu.memory_space<vmem>>, vector<1x1x32xf32>
    %531 = vector.shape_cast %530 : vector<1x1x32xf32> to vector<1x32xf32>
    %532 = vector.broadcast %531 : vector<1x32xf32> to vector<16x32xf32>
    %533 = arith.addf %529, %532 : vector<16x32xf32>
    %c14 = arith.constant 14 : index
    %c0_209 = arith.constant 0 : index
    %c0_210 = arith.constant 0 : index
    %534 = vector.load %arg5[%c14, %c0_209, %c0_210] : memref<16x32x32xbf16, #tpu.memory_space<vmem>>, vector<1x32x32xbf16>
    %535 = vector.shape_cast %534 : vector<1x32x32xbf16> to vector<32x32xbf16>
    %cst_211 = arith.constant dense<0.000000e+00> : vector<16x32xf32>
    %536 = tpu.matmul %11, %535, %cst_211 {dimension_numbers = #tpu.dot_dimension_numbers<[1], [0], [0], [1], [0, 0, 1, 1], [], []>} : vector<16x32xbf16>, vector<32x32xbf16>, vector<16x32xf32> -> vector<16x32xf32>
    %c14_212 = arith.constant 14 : index
    %c0_213 = arith.constant 0 : index
    %c0_214 = arith.constant 0 : index
    %537 = vector.load %arg6[%c14_212, %c0_213, %c0_214] : memref<16x1x32xf32, #tpu.memory_space<vmem>>, vector<1x1x32xf32>
    %538 = vector.shape_cast %537 : vector<1x1x32xf32> to vector<1x32xf32>
    %539 = vector.broadcast %538 : vector<1x32xf32> to vector<16x32xf32>
    %540 = arith.addf %536, %539 : vector<16x32xf32>
    %541 = arith.truncf %533 : vector<16x32xf32> to vector<16x32xbf16>
    %cst_215 = arith.constant 0.000000e+00 : f32
    %542 = vector.broadcast %cst_215 : f32 to vector<16x32xf32>
    %543 = vector.broadcast %23 : vector<1x32xf32> to vector<16x32xf32>
    %544 = arith.mulf %526, %543 : vector<16x32xf32>
    %545 = arith.truncf %544 : vector<16x32xf32> to vector<16x32xbf16>
    %cst_216 = arith.constant dense<0.000000e+00> : vector<16x16xf32>
    %546 = tpu.matmul %545, %541, %cst_216 {dimension_numbers = #tpu.dot_dimension_numbers<[1], [1], [0], [0], [0, 0, 1, 0], [], []>} : vector<16x32xbf16>, vector<16x32xbf16>, vector<16x16xf32> -> vector<16x16xf32>
    %547 = arith.addf %546, %15 : vector<16x16xf32>
    %cst_217 = arith.constant dense<0xFF800000> : vector<16xf32>
    %548 = vector.multi_reduction <maximumf>, %547, %cst_217 [1] : vector<16x16xf32> to vector<16xf32>
    %549 = vector.shape_cast %548 : vector<16xf32> to vector<16x1xf32>
    %550 = vector.broadcast %549 : vector<16x1xf32> to vector<16x16xf32>
    %551 = arith.subf %547, %550 : vector<16x16xf32>
    %552 = math.exp %551 : vector<16x16xf32>
    %cst_218 = arith.constant dense<0.000000e+00> : vector<16xf32>
    %553 = vector.multi_reduction <add>, %552, %cst_218 [1] : vector<16x16xf32> to vector<16xf32>
    %554 = vector.shape_cast %553 : vector<16xf32> to vector<16x1xf32>
    %555 = tpu.reciprocal %554 {approx = true} : vector<16x1xf32> -> vector<16x1xf32>
    %556 = vector.broadcast %555 : vector<16x1xf32> to vector<16x16xf32>
    %557 = arith.mulf %552, %556 : vector<16x16xf32>
    %558 = arith.truncf %557 : vector<16x16xf32> to vector<16x16xbf16>
    %559 = vector.broadcast %23 : vector<1x32xf32> to vector<16x32xf32>
    %560 = arith.mulf %540, %559 : vector<16x32xf32>
    %561 = arith.truncf %560 : vector<16x32xf32> to vector<16x32xbf16>
    %cst_219 = arith.constant dense<0.000000e+00> : vector<16x32xf32>
    %562 = tpu.matmul %558, %561, %cst_219 {dimension_numbers = #tpu.dot_dimension_numbers<[1], [0], [0], [1], [0, 0, 1, 1], [], []>} : vector<16x16xbf16>, vector<16x32xbf16>, vector<16x32xf32> -> vector<16x32xf32>
    %563 = arith.addf %542, %562 : vector<16x32xf32>
    %564 = vector.broadcast %30 : vector<1x32xf32> to vector<16x32xf32>
    %565 = arith.mulf %526, %564 : vector<16x32xf32>
    %566 = arith.truncf %565 : vector<16x32xf32> to vector<16x32xbf16>
    %cst_220 = arith.constant dense<0.000000e+00> : vector<16x16xf32>
    %567 = tpu.matmul %566, %541, %cst_220 {dimension_numbers = #tpu.dot_dimension_numbers<[1], [1], [0], [0], [0, 0, 1, 0], [], []>} : vector<16x32xbf16>, vector<16x32xbf16>, vector<16x16xf32> -> vector<16x16xf32>
    %568 = arith.addf %567, %15 : vector<16x16xf32>
    %cst_221 = arith.constant dense<0xFF800000> : vector<16xf32>
    %569 = vector.multi_reduction <maximumf>, %568, %cst_221 [1] : vector<16x16xf32> to vector<16xf32>
    %570 = vector.shape_cast %569 : vector<16xf32> to vector<16x1xf32>
    %571 = vector.broadcast %570 : vector<16x1xf32> to vector<16x16xf32>
    %572 = arith.subf %568, %571 : vector<16x16xf32>
    %573 = math.exp %572 : vector<16x16xf32>
    %cst_222 = arith.constant dense<0.000000e+00> : vector<16xf32>
    %574 = vector.multi_reduction <add>, %573, %cst_222 [1] : vector<16x16xf32> to vector<16xf32>
    %575 = vector.shape_cast %574 : vector<16xf32> to vector<16x1xf32>
    %576 = tpu.reciprocal %575 {approx = true} : vector<16x1xf32> -> vector<16x1xf32>
    %577 = vector.broadcast %576 : vector<16x1xf32> to vector<16x16xf32>
    %578 = arith.mulf %573, %577 : vector<16x16xf32>
    %579 = arith.truncf %578 : vector<16x16xf32> to vector<16x16xbf16>
    %580 = vector.broadcast %30 : vector<1x32xf32> to vector<16x32xf32>
    %581 = arith.mulf %540, %580 : vector<16x32xf32>
    %582 = arith.truncf %581 : vector<16x32xf32> to vector<16x32xbf16>
    %cst_223 = arith.constant dense<0.000000e+00> : vector<16x32xf32>
    %583 = tpu.matmul %579, %582, %cst_223 {dimension_numbers = #tpu.dot_dimension_numbers<[1], [0], [0], [1], [0, 0, 1, 1], [], []>} : vector<16x16xbf16>, vector<16x32xbf16>, vector<16x32xf32> -> vector<16x32xf32>
    %584 = arith.addf %563, %583 : vector<16x32xf32>
    %585 = vector.broadcast %37 : vector<1x32xf32> to vector<16x32xf32>
    %586 = arith.mulf %526, %585 : vector<16x32xf32>
    %587 = arith.truncf %586 : vector<16x32xf32> to vector<16x32xbf16>
    %cst_224 = arith.constant dense<0.000000e+00> : vector<16x16xf32>
    %588 = tpu.matmul %587, %541, %cst_224 {dimension_numbers = #tpu.dot_dimension_numbers<[1], [1], [0], [0], [0, 0, 1, 0], [], []>} : vector<16x32xbf16>, vector<16x32xbf16>, vector<16x16xf32> -> vector<16x16xf32>
    %589 = arith.addf %588, %15 : vector<16x16xf32>
    %cst_225 = arith.constant dense<0xFF800000> : vector<16xf32>
    %590 = vector.multi_reduction <maximumf>, %589, %cst_225 [1] : vector<16x16xf32> to vector<16xf32>
    %591 = vector.shape_cast %590 : vector<16xf32> to vector<16x1xf32>
    %592 = vector.broadcast %591 : vector<16x1xf32> to vector<16x16xf32>
    %593 = arith.subf %589, %592 : vector<16x16xf32>
    %594 = math.exp %593 : vector<16x16xf32>
    %cst_226 = arith.constant dense<0.000000e+00> : vector<16xf32>
    %595 = vector.multi_reduction <add>, %594, %cst_226 [1] : vector<16x16xf32> to vector<16xf32>
    %596 = vector.shape_cast %595 : vector<16xf32> to vector<16x1xf32>
    %597 = tpu.reciprocal %596 {approx = true} : vector<16x1xf32> -> vector<16x1xf32>
    %598 = vector.broadcast %597 : vector<16x1xf32> to vector<16x16xf32>
    %599 = arith.mulf %594, %598 : vector<16x16xf32>
    %600 = arith.truncf %599 : vector<16x16xf32> to vector<16x16xbf16>
    %601 = vector.broadcast %37 : vector<1x32xf32> to vector<16x32xf32>
    %602 = arith.mulf %540, %601 : vector<16x32xf32>
    %603 = arith.truncf %602 : vector<16x32xf32> to vector<16x32xbf16>
    %cst_227 = arith.constant dense<0.000000e+00> : vector<16x32xf32>
    %604 = tpu.matmul %600, %603, %cst_227 {dimension_numbers = #tpu.dot_dimension_numbers<[1], [0], [0], [1], [0, 0, 1, 1], [], []>} : vector<16x16xbf16>, vector<16x32xbf16>, vector<16x32xf32> -> vector<16x32xf32>
    %605 = arith.addf %584, %604 : vector<16x32xf32>
    %606 = vector.broadcast %44 : vector<1x32xf32> to vector<16x32xf32>
    %607 = arith.mulf %526, %606 : vector<16x32xf32>
    %608 = arith.truncf %607 : vector<16x32xf32> to vector<16x32xbf16>
    %cst_228 = arith.constant dense<0.000000e+00> : vector<16x16xf32>
    %609 = tpu.matmul %608, %541, %cst_228 {dimension_numbers = #tpu.dot_dimension_numbers<[1], [1], [0], [0], [0, 0, 1, 0], [], []>} : vector<16x32xbf16>, vector<16x32xbf16>, vector<16x16xf32> -> vector<16x16xf32>
    %610 = arith.addf %609, %15 : vector<16x16xf32>
    %cst_229 = arith.constant dense<0xFF800000> : vector<16xf32>
    %611 = vector.multi_reduction <maximumf>, %610, %cst_229 [1] : vector<16x16xf32> to vector<16xf32>
    %612 = vector.shape_cast %611 : vector<16xf32> to vector<16x1xf32>
    %613 = vector.broadcast %612 : vector<16x1xf32> to vector<16x16xf32>
    %614 = arith.subf %610, %613 : vector<16x16xf32>
    %615 = math.exp %614 : vector<16x16xf32>
    %cst_230 = arith.constant dense<0.000000e+00> : vector<16xf32>
    %616 = vector.multi_reduction <add>, %615, %cst_230 [1] : vector<16x16xf32> to vector<16xf32>
    %617 = vector.shape_cast %616 : vector<16xf32> to vector<16x1xf32>
    %618 = tpu.reciprocal %617 {approx = true} : vector<16x1xf32> -> vector<16x1xf32>
    %619 = vector.broadcast %618 : vector<16x1xf32> to vector<16x16xf32>
    %620 = arith.mulf %615, %619 : vector<16x16xf32>
    %621 = arith.truncf %620 : vector<16x16xf32> to vector<16x16xbf16>
    %622 = vector.broadcast %44 : vector<1x32xf32> to vector<16x32xf32>
    %623 = arith.mulf %540, %622 : vector<16x32xf32>
    %624 = arith.truncf %623 : vector<16x32xf32> to vector<16x32xbf16>
    %cst_231 = arith.constant dense<0.000000e+00> : vector<16x32xf32>
    %625 = tpu.matmul %621, %624, %cst_231 {dimension_numbers = #tpu.dot_dimension_numbers<[1], [0], [0], [1], [0, 0, 1, 1], [], []>} : vector<16x16xbf16>, vector<16x32xbf16>, vector<16x32xf32> -> vector<16x32xf32>
    %626 = arith.addf %605, %625 : vector<16x32xf32>
    %627 = arith.truncf %626 : vector<16x32xf32> to vector<16x32xbf16>
    %c15 = arith.constant 15 : index
    %c0_232 = arith.constant 0 : index
    %c0_233 = arith.constant 0 : index
    %628 = vector.load %arg5[%c15, %c0_232, %c0_233] : memref<16x32x32xbf16, #tpu.memory_space<vmem>>, vector<1x32x32xbf16>
    %629 = vector.shape_cast %628 : vector<1x32x32xbf16> to vector<32x32xbf16>
    %cst_234 = arith.constant dense<0.000000e+00> : vector<16x32xf32>
    %630 = tpu.matmul %627, %629, %cst_234 {dimension_numbers = #tpu.dot_dimension_numbers<[1], [0], [0], [1], [0, 0, 1, 1], [], []>} : vector<16x32xbf16>, vector<32x32xbf16>, vector<16x32xf32> -> vector<16x32xf32>
    %c15_235 = arith.constant 15 : index
    %c0_236 = arith.constant 0 : index
    %c0_237 = arith.constant 0 : index
    %631 = vector.load %arg6[%c15_235, %c0_236, %c0_237] : memref<16x1x32xf32, #tpu.memory_space<vmem>>, vector<1x1x32xf32>
    %632 = vector.shape_cast %631 : vector<1x1x32xf32> to vector<1x32xf32>
    %633 = vector.broadcast %632 : vector<1x32xf32> to vector<16x32xf32>
    %634 = arith.addf %630, %633 : vector<16x32xf32>
    %635 = arith.addf %518, %634 : vector<16x32xf32>
    %c8_238 = arith.constant 8 : index
    %c0_239 = arith.constant 0 : index
    %c0_240 = arith.constant 0 : index
    %636 = vector.load %arg7[%c8_238, %c0_239, %c0_240] : memref<12x1x32xf32, #tpu.memory_space<vmem>>, vector<1x1x32xf32>
    %637 = vector.shape_cast %636 : vector<1x1x32xf32> to vector<1x32xf32>
    %c9_241 = arith.constant 9 : index
    %c0_242 = arith.constant 0 : index
    %c0_243 = arith.constant 0 : index
    %638 = vector.load %arg7[%c9_241, %c0_242, %c0_243] : memref<12x1x32xf32, #tpu.memory_space<vmem>>, vector<1x1x32xf32>
    %639 = vector.shape_cast %638 : vector<1x1x32xf32> to vector<1x32xf32>
    %cst_244 = arith.constant dense<0.000000e+00> : vector<16xf32>
    %640 = vector.multi_reduction <add>, %635, %cst_244 [1] : vector<16x32xf32> to vector<16xf32>
    %641 = vector.shape_cast %640 : vector<16xf32> to vector<16x1xf32>
    %cst_245 = arith.constant 3.200000e+01 : f32
    %642 = vector.broadcast %cst_245 : f32 to vector<16x1xf32>
    %643 = arith.divf %641, %642 : vector<16x1xf32>
    %644 = vector.broadcast %643 : vector<16x1xf32> to vector<16x32xf32>
    %645 = arith.subf %635, %644 : vector<16x32xf32>
    %646 = arith.mulf %645, %645 : vector<16x32xf32>
    %cst_246 = arith.constant dense<0.000000e+00> : vector<16xf32>
    %647 = vector.multi_reduction <add>, %646, %cst_246 [1] : vector<16x32xf32> to vector<16xf32>
    %648 = vector.shape_cast %647 : vector<16xf32> to vector<16x1xf32>
    %cst_247 = arith.constant 3.200000e+01 : f32
    %649 = vector.broadcast %cst_247 : f32 to vector<16x1xf32>
    %650 = arith.divf %648, %649 : vector<16x1xf32>
    %651 = vector.broadcast %643 : vector<16x1xf32> to vector<16x32xf32>
    %652 = arith.subf %635, %651 : vector<16x32xf32>
    %cst_248 = arith.constant 9.99999974E-6 : f32
    %653 = vector.broadcast %cst_248 : f32 to vector<16x1xf32>
    %654 = arith.addf %650, %653 : vector<16x1xf32>
    %655 = math.rsqrt %654 : vector<16x1xf32>
    %656 = vector.broadcast %655 : vector<16x1xf32> to vector<16x32xf32>
    %657 = arith.mulf %652, %656 : vector<16x32xf32>
    %658 = vector.broadcast %637 : vector<1x32xf32> to vector<16x32xf32>
    %659 = arith.mulf %657, %658 : vector<16x32xf32>
    %660 = vector.broadcast %639 : vector<1x32xf32> to vector<16x32xf32>
    %661 = arith.addf %659, %660 : vector<16x32xf32>
    %662 = arith.truncf %661 : vector<16x32xf32> to vector<16x32xbf16>
    %c1_249 = arith.constant 1 : index
    %c0_250 = arith.constant 0 : index
    %c0_251 = arith.constant 0 : index
    %663 = vector.load %arg8[%c1_249, %c0_250, %c0_251] : memref<2x32x128xbf16, #tpu.memory_space<vmem>>, vector<1x32x128xbf16>
    %664 = vector.shape_cast %663 : vector<1x32x128xbf16> to vector<32x128xbf16>
    %cst_252 = arith.constant dense<0.000000e+00> : vector<16x128xf32>
    %665 = tpu.matmul %662, %664, %cst_252 {dimension_numbers = #tpu.dot_dimension_numbers<[1], [0], [0], [1], [0, 0, 1, 1], [], []>} : vector<16x32xbf16>, vector<32x128xbf16>, vector<16x128xf32> -> vector<16x128xf32>
    %c1_253 = arith.constant 1 : index
    %c0_254 = arith.constant 0 : index
    %c0_255 = arith.constant 0 : index
    %666 = vector.load %arg9[%c1_253, %c0_254, %c0_255] : memref<2x1x128xf32, #tpu.memory_space<vmem>>, vector<1x1x128xf32>
    %667 = vector.shape_cast %666 : vector<1x1x128xf32> to vector<1x128xf32>
    %668 = vector.broadcast %667 : vector<1x128xf32> to vector<16x128xf32>
    %669 = arith.addf %665, %668 : vector<16x128xf32>
    %cst_256 = arith.constant 0.000000e+00 : f32
    %670 = vector.broadcast %cst_256 : f32 to vector<16x128xf32>
    %671 = arith.maximumf %669, %670 : vector<16x128xf32>
    %672 = arith.truncf %671 : vector<16x128xf32> to vector<16x128xbf16>
    %c1_257 = arith.constant 1 : index
    %c0_258 = arith.constant 0 : index
    %c0_259 = arith.constant 0 : index
    %673 = vector.load %arg10[%c1_257, %c0_258, %c0_259] : memref<2x128x32xbf16, #tpu.memory_space<vmem>>, vector<1x128x32xbf16>
    %674 = vector.shape_cast %673 : vector<1x128x32xbf16> to vector<128x32xbf16>
    %cst_260 = arith.constant dense<0.000000e+00> : vector<16x32xf32>
    %675 = tpu.matmul %672, %674, %cst_260 {dimension_numbers = #tpu.dot_dimension_numbers<[1], [0], [0], [1], [0, 0, 1, 1], [], []>} : vector<16x128xbf16>, vector<128x32xbf16>, vector<16x32xf32> -> vector<16x32xf32>
    %c1_261 = arith.constant 1 : index
    %c0_262 = arith.constant 0 : index
    %c0_263 = arith.constant 0 : index
    %676 = vector.load %arg11[%c1_261, %c0_262, %c0_263] : memref<2x1x32xf32, #tpu.memory_space<vmem>>, vector<1x1x32xf32>
    %677 = vector.shape_cast %676 : vector<1x1x32xf32> to vector<1x32xf32>
    %678 = vector.broadcast %677 : vector<1x32xf32> to vector<16x32xf32>
    %679 = arith.addf %675, %678 : vector<16x32xf32>
    %680 = arith.addf %661, %679 : vector<16x32xf32>
    %c10_264 = arith.constant 10 : index
    %c0_265 = arith.constant 0 : index
    %c0_266 = arith.constant 0 : index
    %681 = vector.load %arg7[%c10_264, %c0_265, %c0_266] : memref<12x1x32xf32, #tpu.memory_space<vmem>>, vector<1x1x32xf32>
    %682 = vector.shape_cast %681 : vector<1x1x32xf32> to vector<1x32xf32>
    %c11_267 = arith.constant 11 : index
    %c0_268 = arith.constant 0 : index
    %c0_269 = arith.constant 0 : index
    %683 = vector.load %arg7[%c11_267, %c0_268, %c0_269] : memref<12x1x32xf32, #tpu.memory_space<vmem>>, vector<1x1x32xf32>
    %684 = vector.shape_cast %683 : vector<1x1x32xf32> to vector<1x32xf32>
    %cst_270 = arith.constant dense<0.000000e+00> : vector<16xf32>
    %685 = vector.multi_reduction <add>, %680, %cst_270 [1] : vector<16x32xf32> to vector<16xf32>
    %686 = vector.shape_cast %685 : vector<16xf32> to vector<16x1xf32>
    %cst_271 = arith.constant 3.200000e+01 : f32
    %687 = vector.broadcast %cst_271 : f32 to vector<16x1xf32>
    %688 = arith.divf %686, %687 : vector<16x1xf32>
    %689 = vector.broadcast %688 : vector<16x1xf32> to vector<16x32xf32>
    %690 = arith.subf %680, %689 : vector<16x32xf32>
    %691 = arith.mulf %690, %690 : vector<16x32xf32>
    %cst_272 = arith.constant dense<0.000000e+00> : vector<16xf32>
    %692 = vector.multi_reduction <add>, %691, %cst_272 [1] : vector<16x32xf32> to vector<16xf32>
    %693 = vector.shape_cast %692 : vector<16xf32> to vector<16x1xf32>
    %cst_273 = arith.constant 3.200000e+01 : f32
    %694 = vector.broadcast %cst_273 : f32 to vector<16x1xf32>
    %695 = arith.divf %693, %694 : vector<16x1xf32>
    %696 = vector.broadcast %688 : vector<16x1xf32> to vector<16x32xf32>
    %697 = arith.subf %680, %696 : vector<16x32xf32>
    %cst_274 = arith.constant 9.99999974E-6 : f32
    %698 = vector.broadcast %cst_274 : f32 to vector<16x1xf32>
    %699 = arith.addf %695, %698 : vector<16x1xf32>
    %700 = math.rsqrt %699 : vector<16x1xf32>
    %701 = vector.broadcast %700 : vector<16x1xf32> to vector<16x32xf32>
    %702 = arith.mulf %697, %701 : vector<16x32xf32>
    %703 = vector.broadcast %682 : vector<1x32xf32> to vector<16x32xf32>
    %704 = arith.mulf %702, %703 : vector<16x32xf32>
    %705 = vector.broadcast %684 : vector<1x32xf32> to vector<16x32xf32>
    %706 = arith.addf %704, %705 : vector<16x32xf32>
    %707 = arith.truncf %706 : vector<16x32xf32> to vector<16x32xbf16>
    %cst_275 = arith.constant 0.000000e+00 : f32
    %708 = vector.broadcast %cst_275 : f32 to vector<16x32xf32>
    %c0_276 = arith.constant 0 : index
    %c0_277 = arith.constant 0 : index
    %c0_278 = arith.constant 0 : index
    %709 = vector.load %arg14[%c0_276, %c0_277, %c0_278] : memref<2x32x32xbf16, #tpu.memory_space<vmem>>, vector<1x32x32xbf16>
    %710 = vector.shape_cast %709 : vector<1x32x32xbf16> to vector<32x32xbf16>
    %cst_279 = arith.constant dense<0.000000e+00> : vector<16x32xf32>
    %711 = tpu.matmul %707, %710, %cst_279 {dimension_numbers = #tpu.dot_dimension_numbers<[1], [0], [0], [1], [0, 0, 1, 1], [], []>} : vector<16x32xbf16>, vector<32x32xbf16>, vector<16x32xf32> -> vector<16x32xf32>
    %c0_280 = arith.constant 0 : index
    %c0_281 = arith.constant 0 : index
    %c0_282 = arith.constant 0 : index
    %712 = vector.load %arg15[%c0_280, %c0_281, %c0_282] : memref<2x1x32xf32, #tpu.memory_space<vmem>>, vector<1x1x32xf32>
    %713 = vector.shape_cast %712 : vector<1x1x32xf32> to vector<1x32xf32>
    %714 = vector.broadcast %713 : vector<1x32xf32> to vector<16x32xf32>
    %715 = arith.addf %711, %714 : vector<16x32xf32>
    %c0_283 = arith.constant 0 : index
    %c0_284 = arith.constant 0 : index
    %c0_285 = arith.constant 0 : index
    %716 = vector.load %arg16[%c0_283, %c0_284, %c0_285] : memref<2x16x1xf32, #tpu.memory_space<vmem>>, vector<1x16x1xf32>
    %717 = vector.shape_cast %716 : vector<1x16x1xf32> to vector<16x1xf32>
    %718 = vector.broadcast %717 : vector<16x1xf32> to vector<16x32xf32>
    %719 = arith.mulf %718, %715 : vector<16x32xf32>
    %720 = arith.addf %708, %719 : vector<16x32xf32>
    %c1_286 = arith.constant 1 : index
    %c0_287 = arith.constant 0 : index
    %c0_288 = arith.constant 0 : index
    %721 = vector.load %arg14[%c1_286, %c0_287, %c0_288] : memref<2x32x32xbf16, #tpu.memory_space<vmem>>, vector<1x32x32xbf16>
    %722 = vector.shape_cast %721 : vector<1x32x32xbf16> to vector<32x32xbf16>
    %cst_289 = arith.constant dense<0.000000e+00> : vector<16x32xf32>
    %723 = tpu.matmul %707, %722, %cst_289 {dimension_numbers = #tpu.dot_dimension_numbers<[1], [0], [0], [1], [0, 0, 1, 1], [], []>} : vector<16x32xbf16>, vector<32x32xbf16>, vector<16x32xf32> -> vector<16x32xf32>
    %c1_290 = arith.constant 1 : index
    %c0_291 = arith.constant 0 : index
    %c0_292 = arith.constant 0 : index
    %724 = vector.load %arg15[%c1_290, %c0_291, %c0_292] : memref<2x1x32xf32, #tpu.memory_space<vmem>>, vector<1x1x32xf32>
    %725 = vector.shape_cast %724 : vector<1x1x32xf32> to vector<1x32xf32>
    %726 = vector.broadcast %725 : vector<1x32xf32> to vector<16x32xf32>
    %727 = arith.addf %723, %726 : vector<16x32xf32>
    %c1_293 = arith.constant 1 : index
    %c0_294 = arith.constant 0 : index
    %c0_295 = arith.constant 0 : index
    %728 = vector.load %arg16[%c1_293, %c0_294, %c0_295] : memref<2x16x1xf32, #tpu.memory_space<vmem>>, vector<1x16x1xf32>
    %729 = vector.shape_cast %728 : vector<1x16x1xf32> to vector<16x1xf32>
    %730 = vector.broadcast %729 : vector<16x1xf32> to vector<16x32xf32>
    %731 = arith.mulf %730, %727 : vector<16x32xf32>
    %732 = arith.addf %720, %731 : vector<16x32xf32>
    %733 = arith.addf %706, %732 : vector<16x32xf32>
    %c0_296 = arith.constant 0 : index
    %c0_297 = arith.constant 0 : index
    %734 = vector.load %arg18[%c0_296, %c0_297] : memref<16x32xf32, #tpu.memory_space<vmem>>, vector<16x32xf32>
    tpu.vector_store %arg18[%c0_296, %c0_297], %733 {strides = array<i32>} : memref<16x32xf32, #tpu.memory_space<vmem>>, vector<16x32xf32>,
    %735 = arith.truncf %733 : vector<16x32xf32> to vector<16x32xbf16>
    %c0_298 = arith.constant 0 : index
    %c0_299 = arith.constant 0 : index
    %736 = vector.load %arg12[%c0_298, %c0_299] : memref<32x128xbf16, #tpu.memory_space<vmem>>, vector<32x128xbf16>
    %cst_300 = arith.constant dense<0.000000e+00> : vector<16x128xf32>
    %737 = tpu.matmul %735, %736, %cst_300 {dimension_numbers = #tpu.dot_dimension_numbers<[1], [0], [0], [1], [0, 0, 1, 1], [], []>} : vector<16x32xbf16>, vector<32x128xbf16>, vector<16x128xf32> -> vector<16x128xf32>
    %c0_301 = arith.constant 0 : index
    %c0_302 = arith.constant 0 : index
    %738 = vector.load %arg13[%c0_301, %c0_302] : memref<1x128xf32, #tpu.memory_space<vmem>>, vector<1x128xf32>
    %739 = vector.broadcast %738 : vector<1x128xf32> to vector<16x128xf32>
    %740 = arith.addf %737, %739 : vector<16x128xf32>
    %c0_303 = arith.constant 0 : index
    %c0_304 = arith.constant 0 : index
    %741 = vector.load %arg17[%c0_303, %c0_304] : memref<16x128xf32, #tpu.memory_space<vmem>>, vector<16x128xf32>
    tpu.vector_store %arg17[%c0_303, %c0_304], %740 {strides = array<i32>} : memref<16x128xf32, #tpu.memory_space<vmem>>, vector<16x128xf32>,
    return
  }
  func.func @transform_0(%arg0: i32) -> (i32, i32) {
    %c0_i32 = arith.constant 0 : i32
    %c0_i32_0 = arith.constant 0 : i32
    return %arg0, %c0_i32 : i32, i32
  }
  func.func @transform_1(%arg0: i32) -> (i32, i32) {
    %c0_i32 = arith.constant 0 : i32
    %c0_i32_0 = arith.constant 0 : i32
    %c0_i32_1 = arith.constant 0 : i32
    return %c0_i32, %c0_i32_0 : i32, i32
  }
  func.func @transform_2(%arg0: i32) -> (i32, i32) {
    %c0_i32 = arith.constant 0 : i32
    %c0_i32_0 = arith.constant 0 : i32
    %c0_i32_1 = arith.constant 0 : i32
    return %c0_i32, %c0_i32_0 : i32, i32
  }
  func.func @transform_3(%arg0: i32) -> (i32, i32, i32) {
    %c0_i32 = arith.constant 0 : i32
    %c0_i32_0 = arith.constant 0 : i32
    %c0_i32_1 = arith.constant 0 : i32
    %c0_i32_2 = arith.constant 0 : i32
    return %c0_i32, %c0_i32_0, %c0_i32_1 : i32, i32, i32
  }
  func.func @transform_4(%arg0: i32) -> (i32, i32, i32) {
    %c0_i32 = arith.constant 0 : i32
    %c0_i32_0 = arith.constant 0 : i32
    %c0_i32_1 = arith.constant 0 : i32
    %c0_i32_2 = arith.constant 0 : i32
    return %c0_i32, %c0_i32_0, %c0_i32_1 : i32, i32, i32
  }
  func.func @transform_5(%arg0: i32) -> (i32, i32, i32) {
    %c0_i32 = arith.constant 0 : i32
    %c0_i32_0 = arith.constant 0 : i32
    %c0_i32_1 = arith.constant 0 : i32
    %c0_i32_2 = arith.constant 0 : i32
    return %c0_i32, %c0_i32_0, %c0_i32_1 : i32, i32, i32
  }
  func.func @transform_6(%arg0: i32) -> (i32, i32, i32) {
    %c0_i32 = arith.constant 0 : i32
    %c0_i32_0 = arith.constant 0 : i32
    %c0_i32_1 = arith.constant 0 : i32
    %c0_i32_2 = arith.constant 0 : i32
    return %c0_i32, %c0_i32_0, %c0_i32_1 : i32, i32, i32
  }
  func.func @transform_7(%arg0: i32) -> (i32, i32, i32) {
    %c0_i32 = arith.constant 0 : i32
    %c0_i32_0 = arith.constant 0 : i32
    %c0_i32_1 = arith.constant 0 : i32
    %c0_i32_2 = arith.constant 0 : i32
    return %c0_i32, %c0_i32_0, %c0_i32_1 : i32, i32, i32
  }
  func.func @transform_8(%arg0: i32) -> (i32, i32, i32) {
    %c0_i32 = arith.constant 0 : i32
    %c0_i32_0 = arith.constant 0 : i32
    %c0_i32_1 = arith.constant 0 : i32
    %c0_i32_2 = arith.constant 0 : i32
    return %c0_i32, %c0_i32_0, %c0_i32_1 : i32, i32, i32
  }
  func.func @transform_9(%arg0: i32) -> (i32, i32, i32) {
    %c0_i32 = arith.constant 0 : i32
    %c0_i32_0 = arith.constant 0 : i32
    %c0_i32_1 = arith.constant 0 : i32
    %c0_i32_2 = arith.constant 0 : i32
    return %c0_i32, %c0_i32_0, %c0_i32_1 : i32, i32, i32
  }
  func.func @transform_10(%arg0: i32) -> (i32, i32, i32) {
    %c0_i32 = arith.constant 0 : i32
    %c0_i32_0 = arith.constant 0 : i32
    %c0_i32_1 = arith.constant 0 : i32
    %c0_i32_2 = arith.constant 0 : i32
    return %c0_i32, %c0_i32_0, %c0_i32_1 : i32, i32, i32
  }
  func.func @transform_11(%arg0: i32) -> (i32, i32) {
    %c0_i32 = arith.constant 0 : i32
    %c0_i32_0 = arith.constant 0 : i32
    %c0_i32_1 = arith.constant 0 : i32
    return %c0_i32, %c0_i32_0 : i32, i32
  }
  func.func @transform_12(%arg0: i32) -> (i32, i32) {
    %c0_i32 = arith.constant 0 : i32
    %c0_i32_0 = arith.constant 0 : i32
    %c0_i32_1 = arith.constant 0 : i32
    return %c0_i32, %c0_i32_0 : i32, i32
  }
  func.func @transform_13(%arg0: i32) -> (i32, i32, i32) {
    %c0_i32 = arith.constant 0 : i32
    %c0_i32_0 = arith.constant 0 : i32
    %c0_i32_1 = arith.constant 0 : i32
    %c0_i32_2 = arith.constant 0 : i32
    return %c0_i32, %c0_i32_0, %c0_i32_1 : i32, i32, i32
  }
  func.func @transform_14(%arg0: i32) -> (i32, i32, i32) {
    %c0_i32 = arith.constant 0 : i32
    %c0_i32_0 = arith.constant 0 : i32
    %c0_i32_1 = arith.constant 0 : i32
    %c0_i32_2 = arith.constant 0 : i32
    return %c0_i32, %c0_i32_0, %c0_i32_1 : i32, i32, i32
  }
  func.func @transform_15(%arg0: i32) -> (i32, i32, i32) {
    %c0_i32 = arith.constant 0 : i32
    %c0_i32_0 = arith.constant 0 : i32
    %c0_i32_1 = arith.constant 0 : i32
    return %c0_i32, %arg0, %c0_i32_0 : i32, i32, i32
  }
  func.func @transform_16(%arg0: i32) -> (i32, i32) {
    %c0_i32 = arith.constant 0 : i32
    %c0_i32_0 = arith.constant 0 : i32
    return %arg0, %c0_i32 : i32, i32
  }
  func.func @transform_17(%arg0: i32) -> (i32, i32) {
    %c0_i32 = arith.constant 0 : i32
    %c0_i32_0 = arith.constant 0 : i32
    return %arg0, %c0_i32 : i32, i32
  }
}

</mosaic_0001>

<llo_original>
// kernel: tpu_custom_call.1
$region0: #{tpu_custom_call.1}
  #allocation0 [shape = 'u32[]', space=smem, size = 0x4, offset = 0x4, fixed_abs, tag = 'smem constant byte address 0x4 - core index']
  #allocation1 [shape = 'u32[144,128]{1,0:T(1,128)}', space=vmem, size = 0x12000, scoped, tag = 'internal scratch']
  %s0 = inlined_call_operand.vmem [shape: s32[16,1], index: 0, kind: input, shape index: {}]
  %s1 = inlined_call_operand.vmem [shape: bf16[128,32], index: 1, kind: input, shape index: {}]
  %s2 = inlined_call_operand.hbm [shape: f32[16,32], index: 2, kind: input, shape index: {}]
  %s3 = inlined_call_operand.hbm [shape: f32[2,16,16], index: 3, kind: input, shape index: {}]
  %s4 = inlined_call_operand.vmem [shape: bf16[16,32,32], index: 4, kind: input, shape index: {}]
  %s5 = inlined_call_operand.hbm [shape: f32[16,1,32], index: 5, kind: input, shape index: {}]
  %s6 = inlined_call_operand.hbm [shape: f32[12,1,32], index: 6, kind: input, shape index: {}]
  %s7 = inlined_call_operand.hbm [shape: bf16[2,32,128], index: 7, kind: input, shape index: {}]
  %s8 = inlined_call_operand.hbm [shape: f32[2,1,128], index: 8, kind: input, shape index: {}]
  %s9 = inlined_call_operand.vmem [shape: bf16[2,128,32], index: 9, kind: input, shape index: {}]
  %s10 = inlined_call_operand.vmem [shape: f32[2,1,32], index: 10, kind: input, shape index: {}]
  %s11 = inlined_call_operand.hbm [shape: bf16[32,128], index: 11, kind: input, shape index: {}]
  %s12 = inlined_call_operand.vmem [shape: f32[1,128], index: 12, kind: input, shape index: {}]
  %s13 = inlined_call_operand.vmem [shape: bf16[2,32,32], index: 13, kind: input, shape index: {}]
  %s14 = inlined_call_operand.vmem [shape: f32[2,1,32], index: 14, kind: input, shape index: {}]
  %s15 = inlined_call_operand.vmem [shape: f32[2,16,1], index: 15, kind: input, shape index: {}]
  %s16 = inlined_call_operand.hbm [shape: f32[16,128], index: 16, kind: output, shape index: {0}]
  %s17 = inlined_call_operand.hbm [shape: f32[16,32], index: 17, kind: output, shape index: {1}]
  %18 = xla_tuple %s16, %s17
  %s19 = sld [smem:[#allocation0]]
  $region110: #{tpu_custom_call.1} parent=0
    _
  %s21 = ssub.s32 1, %s19
  %s22 = scalar_select 0, %s21, %s19
  $region1: #{tpu_custom_call.1} parent=0
    #allocation2 [shape = 'u8[8192]{0}', space=vmem, size = 0x2000, scoped, tag = 'input window, operand 2, single buffered']
    #allocation3 [shape = 's32[1]{0}', space=sflag, size = 0x4, scoped, tag = 'scoped memory for tpu_custom_call.1']
    #allocation4 [shape = 's32[1]{0}', space=sflag, size = 0x4, scoped, tag = 'scoped memory for tpu_custom_call.1']
    #allocation5 [shape = 'u8[16384]{0}', space=vmem, size = 0x4000, scoped, tag = 'input window, operand 3, single buffered']
    #allocation6 [shape = 's32[1]{0}', space=sflag, size = 0x4, scoped, tag = 'scoped memory for tpu_custom_call.1']
    #allocation7 [shape = 'u8[8192]{0}', space=vmem, size = 0x2000, scoped, tag = 'input window, operand 5, single buffered']
    #allocation8 [shape = 'u8[6144]{0}', space=vmem, size = 0x1800, scoped, tag = 'input window, operand 6, single buffered']
    #allocation9 [shape = 's32[1]{0}', space=sflag, size = 0x4, scoped, tag = 'scoped memory for tpu_custom_call.1']
    #allocation10 [shape = 'u8[16384]{0}', space=vmem, size = 0x4000, scoped, tag = 'input window, operand 7, single buffered']
    #allocation11 [shape = 'u8[1024]{0}', space=vmem, size = 0x400, scoped, tag = 'input window, operand 8, single buffered']
    #allocation12 [shape = 's32[1]{0}', space=sflag, size = 0x4, scoped, tag = 'scoped memory for tpu_custom_call.1']
    #allocation13 [shape = 'u8[8192]{0}', space=vmem, size = 0x2000, scoped, tag = 'input window, operand 11, single buffered']
    #allocation14 [shape = 'u8[8192]{0}', space=vmem, size = 0x2000, scoped, tag = 'output window, operand 0, single buffered']
    #allocation15 [shape = 'u8[8192]{0}', space=vmem, size = 0x2000, scoped, tag = 'output window, operand 1, single buffered']
    #allocation16 [shape = 's32[1]{0}', space=sflag, size = 0x4, scoped, tag = 'scoped memory for tpu_custom_call.1']
    %23 = vsyncpa [#allocation3], 0
    %24 = vsyncpa [#allocation6], 0
    %25 = vsyncpa [#allocation9], 0
    %26 = vsyncpa [#allocation12], 0
    %27 = vsyncpa [#allocation4], 0
    %28 = vsyncpa [#allocation16], 0
    // Predicated region
    $region2: #{tpu_custom_call.1} parent=1 // pred_check
      _
    $region3: #{tpu_custom_call.1} parent=1 // pred_check_branch
      %30 = sbr.rel (0) target = $region5
    $region4: #{tpu_custom_call.1} parent=1 // pred_region
      _
    $region5: #{tpu_custom_call.1} parent=1 // pred_fallthru
      _
    // Predicated region
    $region6: #{tpu_custom_call.1} parent=1 // pred_check
      _
    $region7: #{tpu_custom_call.1} parent=1 // pred_check_branch
      %32 = sbr.rel (0) target = $region9
    $region8: #{tpu_custom_call.1} parent=1 // pred_region
      _
    $region9: #{tpu_custom_call.1} parent=1 // pred_fallthru
      _
    // Predicated region
    $region10: #{tpu_custom_call.1} parent=1 // pred_check
      _
    $region11: #{tpu_custom_call.1} parent=1 // pred_check_branch
      %34 = sbr.rel (0) target = $region13
    $region12: #{tpu_custom_call.1} parent=1 // pred_region
      %s36 = ssub.s32 256, 256
      %37 = vsyncadd [#allocation3], %s36
      %s38 = sshll.u32 [#allocation2], 4
      %s39 = int_to_ptr.vmem [resolvable:$true] %s38
      %44 = dma.hbm_to_vmem [thread:$0]  %s2, 256, %s39, [#allocation3], 128, 128, 8
    $region13: #{tpu_custom_call.1} parent=1 // pred_fallthru
      _
    // Predicated region
    $region14: #{tpu_custom_call.1} parent=1 // pred_check
      _
    $region15: #{tpu_custom_call.1} parent=1 // pred_check_branch
      %46 = sbr.rel (0) target = $region17
    $region16: #{tpu_custom_call.1} parent=1 // pred_region
      %s48 = ssub.s32 512, 512
      %49 = vsyncadd [#allocation6], %s48
      %s50 = sshll.u32 [#allocation5], 4
      %s51 = int_to_ptr.vmem [resolvable:$true] %s50
      %56 = dma.hbm_to_vmem [thread:$0]  %s3, 512, %s51, [#allocation6], 128, 128, 8
    $region17: #{tpu_custom_call.1} parent=1 // pred_fallthru
      _
    // Predicated region
    $region18: #{tpu_custom_call.1} parent=1 // pred_check
      _
    $region19: #{tpu_custom_call.1} parent=1 // pred_check_branch
      %58 = sbr.rel (0) target = $region21
    $region20: #{tpu_custom_call.1} parent=1 // pred_region
      _
    $region21: #{tpu_custom_call.1} parent=1 // pred_fallthru
      _
    // Predicated region
    $region22: #{tpu_custom_call.1} parent=1 // pred_check
      _
    $region23: #{tpu_custom_call.1} parent=1 // pred_check_branch
      %60 = sbr.rel (0) target = $region25
    $region24: #{tpu_custom_call.1} parent=1 // pred_region
      %s62 = ssub.s32 256, 256
      %63 = vsyncadd [#allocation6], %s62
      %s64 = sshll.u32 [#allocation7], 4
      %s65 = int_to_ptr.vmem [resolvable:$true] %s64
      %70 = dma.hbm_to_vmem [thread:$0]  %s5, 256, %s65, [#allocation6], 16, 16, 1
    $region25: #{tpu_custom_call.1} parent=1 // pred_fallthru
      _
    // Predicated region
    $region26: #{tpu_custom_call.1} parent=1 // pred_check
      _
    $region27: #{tpu_custom_call.1} parent=1 // pred_check_branch
      %72 = sbr.rel (0) target = $region29
    $region28: #{tpu_custom_call.1} parent=1 // pred_region
      %s74 = ssub.s32 192, 192
      %75 = vsyncadd [#allocation9], %s74
      %s76 = sshll.u32 [#allocation8], 4
      %s77 = int_to_ptr.vmem [resolvable:$true] %s76
      %82 = dma.hbm_to_vmem [thread:$0]  %s6, 192, %s77, [#allocation9], 16, 16, 1
    $region29: #{tpu_custom_call.1} parent=1 // pred_fallthru
      _
    // Predicated region
    $region30: #{tpu_custom_call.1} parent=1 // pred_check
      _
    $region31: #{tpu_custom_call.1} parent=1 // pred_check_branch
      %84 = sbr.rel (0) target = $region33
    $region32: #{tpu_custom_call.1} parent=1 // pred_region
      %s86 = ssub.s32 512, 512
      %87 = vsyncadd [#allocation9], %s86
      %s88 = sshll.u32 [#allocation10], 4
      %s89 = int_to_ptr.vmem [resolvable:$true] %s88
      %94 = dma.hbm_to_vmem [thread:$0]  %s7, 512, %s89, [#allocation9], 64, 64, 4
    $region33: #{tpu_custom_call.1} parent=1 // pred_fallthru
      _
    // Predicated region
    $region34: #{tpu_custom_call.1} parent=1 // pred_check
      _
    $region35: #{tpu_custom_call.1} parent=1 // pred_check_branch
      %96 = sbr.rel (0) target = $region37
    $region36: #{tpu_custom_call.1} parent=1 // pred_region
      %s98 = ssub.s32 32, 32
      %99 = vsyncadd [#allocation12], %s98
      %s100 = sshll.u32 [#allocation11], 4
      %s101 = int_to_ptr.vmem [resolvable:$true] %s100
      %106 = dma.hbm_to_vmem [thread:$0]  %s8, 32, %s101, [#allocation12], 16, 16, 1
    $region37: #{tpu_custom_call.1} parent=1 // pred_fallthru
      _
    // Predicated region
    $region38: #{tpu_custom_call.1} parent=1 // pred_check
      _
    $region39: #{tpu_custom_call.1} parent=1 // pred_check_branch
      %108 = sbr.rel (0) target = $region41
    $region40: #{tpu_custom_call.1} parent=1 // pred_region
      _
    $region41: #{tpu_custom_call.1} parent=1 // pred_fallthru
      _
    // Predicated region
    $region42: #{tpu_custom_call.1} parent=1 // pred_check
      _
    $region43: #{tpu_custom_call.1} parent=1 // pred_check_branch
      %110 = sbr.rel (0) target = $region45
    $region44: #{tpu_custom_call.1} parent=1 // pred_region
      _
    $region45: #{tpu_custom_call.1} parent=1 // pred_fallthru
      _
    // Predicated region
    $region46: #{tpu_custom_call.1} parent=1 // pred_check
      _
    $region47: #{tpu_custom_call.1} parent=1 // pred_check_branch
      %112 = sbr.rel (0) target = $region49
    $region48: #{tpu_custom_call.1} parent=1 // pred_region
      %s114 = ssub.s32 256, 256
      %115 = vsyncadd [#allocation12], %s114
      %s116 = sshll.u32 [#allocation13], 4
      %s117 = int_to_ptr.vmem [resolvable:$true] %s116
      %122 = dma.hbm_to_vmem [thread:$0]  %s11, 256, %s117, [#allocation12], 64, 64, 4
    $region49: #{tpu_custom_call.1} parent=1 // pred_fallthru
      _
    // Predicated region
    $region50: #{tpu_custom_call.1} parent=1 // pred_check
      _
    $region51: #{tpu_custom_call.1} parent=1 // pred_check_branch
      %124 = sbr.rel (0) target = $region53
    $region52: #{tpu_custom_call.1} parent=1 // pred_region
      _
    $region53: #{tpu_custom_call.1} parent=1 // pred_fallthru
      _
    // Predicated region
    $region54: #{tpu_custom_call.1} parent=1 // pred_check
      _
    $region55: #{tpu_custom_call.1} parent=1 // pred_check_branch
      %126 = sbr.rel (0) target = $region57
    $region56: #{tpu_custom_call.1} parent=1 // pred_region
      _
    $region57: #{tpu_custom_call.1} parent=1 // pred_fallthru
      _
    // Predicated region
    $region58: #{tpu_custom_call.1} parent=1 // pred_check
      _
    $region59: #{tpu_custom_call.1} parent=1 // pred_check_branch
      %128 = sbr.rel (0) target = $region61
    $region60: #{tpu_custom_call.1} parent=1 // pred_region
      _
    $region61: #{tpu_custom_call.1} parent=1 // pred_fallthru
      _
    // Predicated region
    $region62: #{tpu_custom_call.1} parent=1 // pred_check
      _
    $region63: #{tpu_custom_call.1} parent=1 // pred_check_branch
      %130 = sbr.rel (0) target = $region65
    $region64: #{tpu_custom_call.1} parent=1 // pred_region
      _
    $region65: #{tpu_custom_call.1} parent=1 // pred_fallthru
      _
    // Predicated region
    $region66: #{tpu_custom_call.1} parent=1 // pred_check
      _
    $region67: #{tpu_custom_call.1} parent=1 // pred_check_branch
      %132 = sbr.rel (0) target = $region69
    $region68: #{tpu_custom_call.1} parent=1 // pred_region
      %133 = dma.done [#allocation3], 256
    $region69: #{tpu_custom_call.1} parent=1 // pred_fallthru
      _
    // Predicated region
    $region70: #{tpu_custom_call.1} parent=1 // pred_check
      _
    $region71: #{tpu_custom_call.1} parent=1 // pred_check_branch
      %135 = sbr.rel (0) target = $region73
    $region72: #{tpu_custom_call.1} parent=1 // pred_region
      %136 = dma.done [#allocation6], 512
    $region73: #{tpu_custom_call.1} parent=1 // pred_fallthru
      _
    // Predicated region
    $region74: #{tpu_custom_call.1} parent=1 // pred_check
      _
    $region75: #{tpu_custom_call.1} parent=1 // pred_check_branch
      %138 = sbr.rel (0) target = $region77
    $region76: #{tpu_custom_call.1} parent=1 // pred_region
      %139 = dma.done [#allocation6], 256
    $region77: #{tpu_custom_call.1} parent=1 // pred_fallthru
      _
    // Predicated region
    $region78: #{tpu_custom_call.1} parent=1 // pred_check
      _
    $region79: #{tpu_custom_call.1} parent=1 // pred_check_branch
      %141 = sbr.rel (0) target = $region81
    $region80: #{tpu_custom_call.1} parent=1 // pred_region
      %142 = dma.done [#allocation9], 192
    $region81: #{tpu_custom_call.1} parent=1 // pred_fallthru
      _
    // Predicated region
    $region82: #{tpu_custom_call.1} parent=1 // pred_check
      _
    $region83: #{tpu_custom_call.1} parent=1 // pred_check_branch
      %144 = sbr.rel (0) target = $region85
    $region84: #{tpu_custom_call.1} parent=1 // pred_region
      %145 = dma.done [#allocation9], 512
    $region85: #{tpu_custom_call.1} parent=1 // pred_fallthru
      _
    // Predicated region
    $region86: #{tpu_custom_call.1} parent=1 // pred_check
      _
    $region87: #{tpu_custom_call.1} parent=1 // pred_check_branch
      %147 = sbr.rel (0) target = $region89
    $region88: #{tpu_custom_call.1} parent=1 // pred_region
      %148 = dma.done [#allocation12], 32
    $region89: #{tpu_custom_call.1} parent=1 // pred_fallthru
      _
    // Predicated region
    $region90: #{tpu_custom_call.1} parent=1 // pred_check
      _
    $region91: #{tpu_custom_call.1} parent=1 // pred_check_branch
      %150 = sbr.rel (0) target = $region93
    $region92: #{tpu_custom_call.1} parent=1 // pred_region
      %151 = dma.done [#allocation12], 256
    $region93: #{tpu_custom_call.1} parent=1 // pred_fallthru
      _
    %v153 = vld [vmem:[%s0] sm:$0xff]
    %v154 = vld [vmem:[%s0 + $0x8] sm:$0xff]
    %v155 = vlaneseq
    %v156 = vand.u32 %v155, 127
    %157 = vset.pattern.permute.xlu0 0
    %158 = vperm.xlu0 %157, %v153
    %v159 = vpop.permute.xlu0 %158
    %160 = vset.pattern.permute.xlu0 0
    %161 = vperm.xlu0 %160, %v154
    %v162 = vpop.permute.xlu0 %161
    %vm163 = vcmp.eq.s32.totalorder %v159, %v156
    %vm164 = vcmp.eq.s32.totalorder %v162, %v156
    %v165 = vsel %vm163, 1, 0
    %v166 = vsel %vm164, 1, 0
    %v167 = vcvt.s32.f32 %v165
    %v168 = vcvt.s32.f32 %v166
    %v169 = vpack.c.bf16 %v168, %v167
    %v170 = vld [vmem:[%s1] sm:$0xf]
    %v171 = vld [vmem:[%s1 + $0x4] sm:$0xf]
    %v172 = vld [vmem:[%s1 + $0x8] sm:$0xf]
    %v173 = vld [vmem:[%s1 + $0xc] sm:$0xf]
    %v174 = vld [vmem:[%s1 + $0x10] sm:$0xf]
    %v175 = vld [vmem:[%s1 + $0x14] sm:$0xf]
    %v176 = vld [vmem:[%s1 + $0x18] sm:$0xf]
    %v177 = vld [vmem:[%s1 + $0x1c] sm:$0xf]
    %v178 = vld [vmem:[%s1 + $0x20] sm:$0xf]
    %v179 = vld [vmem:[%s1 + $0x24] sm:$0xf]
    %v180 = vld [vmem:[%s1 + $0x28] sm:$0xf]
    %v181 = vld [vmem:[%s1 + $0x2c] sm:$0xf]
    %v182 = vld [vmem:[%s1 + $0x30] sm:$0xf]
    %v183 = vld [vmem:[%s1 + $0x34] sm:$0xf]
    %v184 = vld [vmem:[%s1 + $0x38] sm:$0xf]
    %v185 = vld [vmem:[%s1 + $0x3c] sm:$0xf]
    %v186 = vld [vmem:[#allocation2] sm:$0xff]
    %v187 = vld [vmem:[#allocation2 + $0x8] sm:$0xff]
    %v204 = vunpack.c.l.b16 %v170
    %v205 = vunpack.c.l.b16 %v171
    %v206 = vunpack.c.l.b16 %v172
    %v207 = vunpack.c.l.b16 %v173
    %v208 = vunpack.c.l.b16 %v174
    %v209 = vunpack.c.l.b16 %v175
    %v210 = vunpack.c.l.b16 %v176
    %v211 = vunpack.c.l.b16 %v177
    %v212 = vunpack.c.l.b16 %v178
    %v213 = vunpack.c.l.b16 %v179
    %v214 = vunpack.c.l.b16 %v180
    %v215 = vunpack.c.l.b16 %v181
    %v216 = vunpack.c.l.b16 %v182
    %v217 = vunpack.c.l.b16 %v183
    %v218 = vunpack.c.l.b16 %v184
    %v219 = vunpack.c.l.b16 %v185
    %v220 = vpack.c.b16 %v205, %v204
    %v221 = vpack.c.b16 %v207, %v206
    %v222 = vpack.c.b16 %v209, %v208
    %v223 = vpack.c.b16 %v211, %v210
    %v224 = vpack.c.b16 %v213, %v212
    %v225 = vpack.c.b16 %v215, %v214
    %v226 = vpack.c.b16 %v217, %v216
    %v227 = vpack.c.b16 %v219, %v218
    %236 = vmatprep.subr.bf16.mxu0 0
    %237 = vmatpush1.bf16.msra.mxu0 %v220
    %238 = vmatprep.subr.bf16.mxu0 0
    %239 = vmatpush1.bf16.msra.mxu0 %v221
    %240 = vmatprep.subr.bf16.mxu0 0
    %241 = vmatpush1.bf16.msra.mxu0 %v222
    %242 = vmatprep.subr.bf16.mxu0 0
    %243 = vmatpush1.bf16.msra.mxu0 %v223
    %244 = vmatprep.subr.bf16.mxu0 0
    %245 = vmatpush1.bf16.msra.mxu0 %v224
    %246 = vmatprep.subr.bf16.mxu0 0
    %247 = vmatpush1.bf16.msra.mxu0 %v225
    %248 = vmatprep.subr.bf16.mxu0 0
    %249 = vmatpush1.bf16.msra.mxu0 %v226
    %250 = vmatprep.subr.bf16.mxu0 0
    %251 = vmatpush1.bf16.msra.mxu0 %v227
    %252 = vmatprep.subr.bf16.mxu0 0
    %253 = vmatpush1.bf16.msra.mxu0 0
    %254 = vmatprep.subr.bf16.mxu0 0
    %255 = vmatpush1.bf16.msra.mxu0 0
    %256 = vmatprep.subr.bf16.mxu0 0
    %257 = vmatpush1.bf16.msra.mxu0 0
    %258 = vmatprep.subr.bf16.mxu0 0
    %259 = vmatpush1.bf16.msra.mxu0 0
    %260 = vmatprep.subr.bf16.mxu0 0
    %261 = vmatpush1.bf16.msra.mxu0 0
    %262 = vmatprep.subr.bf16.mxu0 0
    %263 = vmatpush1.bf16.msra.mxu0 0
    %264 = vmatprep.subr.bf16.mxu0 0
    %265 = vmatpush1.bf16.msra.mxu0 0
    %266 = vmatprep.subr.bf16.mxu0 0
    %267 = vmatpush1.bf16.msra.mxu0 0
    %268 = vmatprep.mubr.bf16.mxu0 0
    %269 = vmatmul.mubr.bf16.gmra.mrb[0].mxu0 %v169
    %v270 = vpop.f32.mrb[0].mxu0
    %v271 = vadd.f32 %v186, %v270
    %v272 = vpop.f32.mrb[0].mxu0
    %v273 = vpop.f32.mrb[0].mxu0
    %v274 = vadd.f32 %v187, %v273
    %v275 = vpop.f32.mrb[0].mxu0
    %276 = vdwg.mxu0
    %v277 = vpack.c.bf16 %v274, %v271
    %v278 = vld [vmem:[#allocation5] sm:$0xff]
    %v279 = vld [vmem:[#allocation5 + $0x8] sm:$0xff]
    %s280 = scalar_lea.vmem [#allocation5], 16
    %v281 = vld [vmem:[%s280] sm:$0xff]
    %v282 = vld [vmem:[%s280 + $0x8] sm:$0xff]
    %vm283 = vcmp.ge.s32.totalorder %v156, 0
    %vm284 = vcmp.lt.s32.totalorder %v156, 8
    %vm285 = vmand %vm283, %vm284
    %v286 = vsel %vm285, 1, 0
    %v287 = vcvt.s32.f32 %v286
    %vm288 = vcmp.ge.s32.totalorder %v156, 8
    %vm289 = vcmp.lt.s32.totalorder %v156, 16
    %vm290 = vmand %vm288, %vm289
    %v291 = vsel %vm290, 1, 0
    %v292 = vcvt.s32.f32 %v291
    %vm293 = vcmp.ge.s32.totalorder %v156, 16
    %vm294 = vcmp.lt.s32.totalorder %v156, 24
    %vm295 = vmand %vm293, %vm294
    %v296 = vsel %vm295, 1, 0
    %v297 = vcvt.s32.f32 %v296
    %vm298 = vcmp.ge.s32.totalorder %v156, 24
    %vm299 = vcmp.lt.s32.totalorder %v156, 32
    %vm300 = vmand %vm298, %vm299
    %v301 = vsel %vm300, 1, 0
    %v302 = vcvt.s32.f32 %v301
    %v303 = vld [vmem:[%s4] sm:$0xf]
    %v304 = vld [vmem:[%s4 + $0x4] sm:$0xf]
    %v305 = vld [vmem:[%s4 + $0x8] sm:$0xf]
    %v306 = vld [vmem:[%s4 + $0xc] sm:$0xf]
    %v307 = vld [vmem:[#allocation7] sm:$0x1]
    %v309 = vlaneseq
    %v310 = vshrl.u32 %v309, 7
    %v311 = vsub.s32 0, %v310
    %v312 = vrot.slane %v307, %v311
    %v318 = vunpack.c.l.b16 %v303
    %v319 = vunpack.c.l.b16 %v304
    %v320 = vunpack.c.l.b16 %v305
    %v321 = vunpack.c.l.b16 %v306
    %v322 = vpack.c.b16 %v319, %v318
    %v323 = vpack.c.b16 %v321, %v320
    %vm326 = vcmask 261120
    %v328 = vsel %vm326, %v277, 0
    %330 = vmatprep.subr.bf16.mxu0 0
    %331 = vmatpush1.bf16.msra.mxu0 %v322
    %332 = vmatprep.subr.bf16.mxu0 0
    %333 = vmatpush1.bf16.msra.mxu0 %v323
    %334 = vmatprep.subr.bf16.mxu0 0
    %335 = vmatpush1.bf16.msra.mxu0 0
    %336 = vmatprep.subr.bf16.mxu0 0
    %337 = vmatpush1.bf16.msra.mxu0 0
    %338 = vmatprep.subr.bf16.mxu0 0
    %339 = vmatpush1.bf16.msra.mxu0 0
    %340 = vmatprep.subr.bf16.mxu0 0
    %341 = vmatpush1.bf16.msra.mxu0 0
    %342 = vmatprep.subr.bf16.mxu0 0
    %343 = vmatpush1.bf16.msra.mxu0 0
    %344 = vmatprep.subr.bf16.mxu0 0
    %345 = vmatpush1.bf16.msra.mxu0 0
    %346 = vmatprep.subr.bf16.mxu0 0
    %347 = vmatpush1.bf16.msra.mxu0 0
    %348 = vmatprep.subr.bf16.mxu0 0
    %349 = vmatpush1.bf16.msra.mxu0 0
    %350 = vmatprep.subr.bf16.mxu0 0
    %351 = vmatpush1.bf16.msra.mxu0 0
    %352 = vmatprep.subr.bf16.mxu0 0
    %353 = vmatpush1.bf16.msra.mxu0 0
    %354 = vmatprep.subr.bf16.mxu0 0
    %355 = vmatpush1.bf16.msra.mxu0 0
    %356 = vmatprep.subr.bf16.mxu0 0
    %357 = vmatpush1.bf16.msra.mxu0 0
    %358 = vmatprep.subr.bf16.mxu0 0
    %359 = vmatpush1.bf16.msra.mxu0 0
    %360 = vmatprep.subr.bf16.mxu0 0
    %361 = vmatpush1.bf16.msra.mxu0 0
    %362 = vmatprep.mubr.bf16.mxu0 0
    %363 = vmatmul.mubr.bf16.gmra.mrb[0].mxu0 %v328
    %v364 = vpop.f32.mrb[0].mxu0
    %v365 = vadd.f32 %v312, %v364
    %v366 = vpop.f32.mrb[0].mxu0
    %v367 = vpop.f32.mrb[0].mxu0
    %v368 = vadd.f32 %v312, %v367
    %v369 = vpop.f32.mrb[0].mxu0
    %370 = vdwg.mxu0
    %s371 = scalar_lea.vmem %s4, 16
    %v372 = vld [vmem:[%s371] sm:$0xf]
    %v373 = vld [vmem:[%s371 + $0x4] sm:$0xf]
    %v374 = vld [vmem:[%s371 + $0x8] sm:$0xf]
    %v375 = vld [vmem:[%s371 + $0xc] sm:$0xf]
    %s376 = scalar_lea.vmem [#allocation7], 1
    %v377 = vld [vmem:[%s376] sm:$0x1]
    %v379 = vlaneseq
    %v380 = vshrl.u32 %v379, 7
    %v381 = vsub.s32 0, %v380
    %v382 = vrot.slane %v377, %v381
    %v388 = vunpack.c.l.b16 %v372
    %v389 = vunpack.c.l.b16 %v373
    %v390 = vunpack.c.l.b16 %v374
    %v391 = vunpack.c.l.b16 %v375
    %v392 = vpack.c.b16 %v389, %v388
    %v393 = vpack.c.b16 %v391, %v390
    %396 = vmatprep.subr.bf16.mxu0 0
    %397 = vmatpush1.bf16.msra.mxu0 %v392
    %398 = vmatprep.subr.bf16.mxu0 0
    %399 = vmatpush1.bf16.msra.mxu0 %v393
    %400 = vmatprep.subr.bf16.mxu0 0
    %401 = vmatpush1.bf16.msra.mxu0 0
    %402 = vmatprep.subr.bf16.mxu0 0
    %403 = vmatpush1.bf16.msra.mxu0 0
    %404 = vmatprep.subr.bf16.mxu0 0
    %405 = vmatpush1.bf16.msra.mxu0 0
    %406 = vmatprep.subr.bf16.mxu0 0
    %407 = vmatpush1.bf16.msra.mxu0 0
    %408 = vmatprep.subr.bf16.mxu0 0
    %409 = vmatpush1.bf16.msra.mxu0 0
    %410 = vmatprep.subr.bf16.mxu0 0
    %411 = vmatpush1.bf16.msra.mxu0 0
    %412 = vmatprep.subr.bf16.mxu0 0
    %413 = vmatpush1.bf16.msra.mxu0 0
    %414 = vmatprep.subr.bf16.mxu0 0
    %415 = vmatpush1.bf16.msra.mxu0 0
    %416 = vmatprep.subr.bf16.mxu0 0
    %417 = vmatpush1.bf16.msra.mxu0 0
    %418 = vmatprep.subr.bf16.mxu0 0
    %419 = vmatpush1.bf16.msra.mxu0 0
    %420 = vmatprep.subr.bf16.mxu0 0
    %421 = vmatpush1.bf16.msra.mxu0 0
    %422 = vmatprep.subr.bf16.mxu0 0
    %423 = vmatpush1.bf16.msra.mxu0 0
    %424 = vmatprep.subr.bf16.mxu0 0
    %425 = vmatpush1.bf16.msra.mxu0 0
    %426 = vmatprep.subr.bf16.mxu0 0
    %427 = vmatpush1.bf16.msra.mxu0 0
    %428 = vmatprep.mubr.bf16.mxu0 0
    %429 = vmatmul.mubr.bf16.gmra.mrb[0].mxu0 %v328
    %v430 = vpop.f32.mrb[0].mxu0
    %v431 = vadd.f32 %v382, %v430
    %v432 = vpop.f32.mrb[0].mxu0
    %v433 = vpop.f32.mrb[0].mxu0
    %v434 = vadd.f32 %v382, %v433
    %v435 = vpop.f32.mrb[0].mxu0
    %436 = vdwg.mxu0
    %s437 = scalar_lea.vmem %s4, 32
    %v438 = vld [vmem:[%s437] sm:$0xf]
    %v439 = vld [vmem:[%s437 + $0x4] sm:$0xf]
    %v440 = vld [vmem:[%s437 + $0x8] sm:$0xf]
    %v441 = vld [vmem:[%s437 + $0xc] sm:$0xf]
    %s442 = scalar_lea.vmem [#allocation7], 2
    %v443 = vld [vmem:[%s442] sm:$0x1]
    %v445 = vlaneseq
    %v446 = vshrl.u32 %v445, 7
    %v447 = vsub.s32 0, %v446
    %v448 = vrot.slane %v443, %v447
    %v454 = vunpack.c.l.b16 %v438
    %v455 = vunpack.c.l.b16 %v439
    %v456 = vunpack.c.l.b16 %v440
    %v457 = vunpack.c.l.b16 %v441
    %v458 = vpack.c.b16 %v455, %v454
    %v459 = vpack.c.b16 %v457, %v456
    %462 = vmatprep.subr.bf16.mxu0 0
    %463 = vmatpush1.bf16.msra.mxu0 %v458
    %464 = vmatprep.subr.bf16.mxu0 0
    %465 = vmatpush1.bf16.msra.mxu0 %v459
    %466 = vmatprep.subr.bf16.mxu0 0
    %467 = vmatpush1.bf16.msra.mxu0 0
    %468 = vmatprep.subr.bf16.mxu0 0
    %469 = vmatpush1.bf16.msra.mxu0 0
    %470 = vmatprep.subr.bf16.mxu0 0
    %471 = vmatpush1.bf16.msra.mxu0 0
    %472 = vmatprep.subr.bf16.mxu0 0
    %473 = vmatpush1.bf16.msra.mxu0 0
    %474 = vmatprep.subr.bf16.mxu0 0
    %475 = vmatpush1.bf16.msra.mxu0 0
    %476 = vmatprep.subr.bf16.mxu0 0
    %477 = vmatpush1.bf16.msra.mxu0 0
    %478 = vmatprep.subr.bf16.mxu0 0
    %479 = vmatpush1.bf16.msra.mxu0 0
    %480 = vmatprep.subr.bf16.mxu0 0
    %481 = vmatpush1.bf16.msra.mxu0 0
    %482 = vmatprep.subr.bf16.mxu0 0
    %483 = vmatpush1.bf16.msra.mxu0 0
    %484 = vmatprep.subr.bf16.mxu0 0
    %485 = vmatpush1.bf16.msra.mxu0 0
    %486 = vmatprep.subr.bf16.mxu0 0
    %487 = vmatpush1.bf16.msra.mxu0 0
    %488 = vmatprep.subr.bf16.mxu0 0
    %489 = vmatpush1.bf16.msra.mxu0 0
    %490 = vmatprep.subr.bf16.mxu0 0
    %491 = vmatpush1.bf16.msra.mxu0 0
    %492 = vmatprep.subr.bf16.mxu0 0
    %493 = vmatpush1.bf16.msra.mxu0 0
    %494 = vmatprep.mubr.bf16.mxu0 0
    %495 = vmatmul.mubr.bf16.gmra.mrb[0].mxu0 %v328
    %v496 = vpop.f32.mrb[0].mxu0
    %v497 = vadd.f32 %v448, %v496
    %v498 = vpop.f32.mrb[0].mxu0
    %v499 = vpop.f32.mrb[0].mxu0
    %v500 = vadd.f32 %v448, %v499
    %v501 = vpop.f32.mrb[0].mxu0
    %502 = vdwg.mxu0
    %v503 = vpack.c.bf16 %v434, %v431
    %v504 = vmul.f32 %v365, %v287
    %v505 = vmul.f32 %v368, %v287
    %v506 = vpack.c.bf16 %v505, %v504
    %v508 = vsel %vm326, %v506, 0
    %v511 = vsel %vm326, %v503, 0
    %513 = vmatprep.subr.bf16.mxu0 0
    %514 = vmatpush1.bf16.xpose.msra.mxu0 %v511
    %515 = vmatprep.subr.bf16.mxu0 0
    %516 = vmatpush1.bf16.xpose.msra.mxu0 0
    %517 = vmatprep.subr.bf16.mxu0 0
    %518 = vmatpush1.bf16.xpose.msra.mxu0 0
    %519 = vmatprep.subr.bf16.mxu0 0
    %520 = vmatpush1.bf16.xpose.msra.mxu0 0
    %521 = vmatprep.subr.bf16.mxu0 0
    %522 = vmatpush1.bf16.xpose.msra.mxu0 0
    %523 = vmatprep.subr.bf16.mxu0 0
    %524 = vmatpush1.bf16.xpose.msra.mxu0 0
    %525 = vmatprep.subr.bf16.mxu0 0
    %526 = vmatpush1.bf16.xpose.msra.mxu0 0
    %527 = vmatprep.subr.bf16.mxu0 0
    %528 = vmatpush1.bf16.xpose.msra.mxu0 0
    %529 = vmatprep.subr.bf16.mxu0 0
    %530 = vmatpush1.bf16.xpose.msra.mxu0 0
    %531 = vmatprep.subr.bf16.mxu0 0
    %532 = vmatpush1.bf16.xpose.msra.mxu0 0
    %533 = vmatprep.subr.bf16.mxu0 0
    %534 = vmatpush1.bf16.xpose.msra.mxu0 0
    %535 = vmatprep.subr.bf16.mxu0 0
    %536 = vmatpush1.bf16.xpose.msra.mxu0 0
    %537 = vmatprep.subr.bf16.mxu0 0
    %538 = vmatpush1.bf16.xpose.msra.mxu0 0
    %539 = vmatprep.subr.bf16.mxu0 0
    %540 = vmatpush1.bf16.xpose.msra.mxu0 0
    %541 = vmatprep.subr.bf16.mxu0 0
    %542 = vmatpush1.bf16.xpose.msra.mxu0 0
    %543 = vmatprep.subr.bf16.mxu0 0
    %544 = vmatpush1.bf16.xpose.msra.mxu0 0
    %545 = vmatprep.mubr.bf16.mxu0 0
    %546 = vmatmul.mubr.bf16.gmra.mrb[0].mxu0 %v508
    %v547 = vpop.f32.mrb[0].mxu0
    %v548 = vadd.f32 %v278, %v547
    %v549 = vpop.f32.mrb[0].mxu0
    %v550 = vpop.f32.mrb[0].mxu0
    %v551 = vadd.f32 %v279, %v550
    %v552 = vpop.f32.mrb[0].mxu0
    %553 = vdwg.mxu0
    %vm554 = vcmask 130048
    %v555 = vsel %vm554, %v548, -inf
    %556 = vmax.xlane.f32.xlu0 %v555
    %v557 = vpop.xlane.xlu0 %556
    %v558 = vsel %vm554, %v551, -inf
    %559 = vmax.xlane.f32.xlu0 %v558
    %v560 = vpop.xlane.xlu0 %559
    %v561 = vsub.f32 %v548, %v557
    %v562 = vsub.f32 %v551, %v560
    %v563 = vmul.f32 %v561, 1.442695
    %v564 = vpow.pop %v563
    %v565 = vmul.f32 %v562, 1.442695
    %v566 = vpow.pop %v565
    %v567 = vsel %vm554, %v564, 0.0
    %568 = vadd.xlane.f32.xlu0 %v567
    %v569 = vpop.xlane.xlu0 %568
    %v570 = vsel %vm554, %v566, 0.0
    %571 = vadd.xlane.f32.xlu0 %v570
    %v572 = vpop.xlane.xlu0 %571
    %v573 = vrcp.pop %v569
    %v574 = vrcp.pop %v572
    %v575 = vmul.f32 %v564, %v573
    %v576 = vmul.f32 %v566, %v574
    %v577 = vpack.c.bf16 %v576, %v575
    %v578 = vmul.f32 %v497, %v287
    %v579 = vmul.f32 %v500, %v287
    %v580 = vpack.c.bf16 %v579, %v578
    %v581 = vmul.f32 %v365, %v292
    %v582 = vmul.f32 %v368, %v292
    %v583 = vpack.c.bf16 %v582, %v581
    %v585 = vsel %vm326, %v583, 0
    %587 = vmatprep.subr.bf16.mxu0 0
    %588 = vmatpush1.bf16.xpose.msra.mxu0 %v511
    %589 = vmatprep.subr.bf16.mxu0 0
    %590 = vmatpush1.bf16.xpose.msra.mxu0 0
    %591 = vmatprep.subr.bf16.mxu0 0
    %592 = vmatpush1.bf16.xpose.msra.mxu0 0
    %593 = vmatprep.subr.bf16.mxu0 0
    %594 = vmatpush1.bf16.xpose.msra.mxu0 0
    %595 = vmatprep.subr.bf16.mxu0 0
    %596 = vmatpush1.bf16.xpose.msra.mxu0 0
    %597 = vmatprep.subr.bf16.mxu0 0
    %598 = vmatpush1.bf16.xpose.msra.mxu0 0
    %599 = vmatprep.subr.bf16.mxu0 0
    %600 = vmatpush1.bf16.xpose.msra.mxu0 0
    %601 = vmatprep.subr.bf16.mxu0 0
    %602 = vmatpush1.bf16.xpose.msra.mxu0 0
    %603 = vmatprep.subr.bf16.mxu0 0
    %604 = vmatpush1.bf16.xpose.msra.mxu0 0
    %605 = vmatprep.subr.bf16.mxu0 0
    %606 = vmatpush1.bf16.xpose.msra.mxu0 0
    %607 = vmatprep.subr.bf16.mxu0 0
    %608 = vmatpush1.bf16.xpose.msra.mxu0 0
    %609 = vmatprep.subr.bf16.mxu0 0
    %610 = vmatpush1.bf16.xpose.msra.mxu0 0
    %611 = vmatprep.subr.bf16.mxu0 0
    %612 = vmatpush1.bf16.xpose.msra.mxu0 0
    %613 = vmatprep.subr.bf16.mxu0 0
    %614 = vmatpush1.bf16.xpose.msra.mxu0 0
    %615 = vmatprep.subr.bf16.mxu0 0
    %616 = vmatpush1.bf16.xpose.msra.mxu0 0
    %617 = vmatprep.subr.bf16.mxu0 0
    %618 = vmatpush1.bf16.xpose.msra.mxu0 0
    %619 = vmatprep.mubr.bf16.mxu0 0
    %620 = vmatmul.mubr.bf16.gmra.mrb[0].mxu0 %v585
    %v621 = vpop.f32.mrb[0].mxu0
    %v622 = vadd.f32 %v278, %v621
    %v623 = vpop.f32.mrb[0].mxu0
    %v624 = vpop.f32.mrb[0].mxu0
    %v625 = vadd.f32 %v279, %v624
    %v626 = vpop.f32.mrb[0].mxu0
    %627 = vdwg.mxu0
    %v628 = vsel %vm554, %v622, -inf
    %629 = vmax.xlane.f32.xlu0 %v628
    %v630 = vpop.xlane.xlu0 %629
    %v631 = vsel %vm554, %v625, -inf
    %632 = vmax.xlane.f32.xlu0 %v631
    %v633 = vpop.xlane.xlu0 %632
    %v634 = vsub.f32 %v622, %v630
    %v635 = vsub.f32 %v625, %v633
    %v636 = vmul.f32 %v634, 1.442695
    %v637 = vpow.pop %v636
    %v638 = vmul.f32 %v635, 1.442695
    %v639 = vpow.pop %v638
    %v640 = vsel %vm554, %v637, 0.0
    %641 = vadd.xlane.f32.xlu0 %v640
    %v642 = vpop.xlane.xlu0 %641
    %v643 = vsel %vm554, %v639, 0.0
    %644 = vadd.xlane.f32.xlu0 %v643
    %v645 = vpop.xlane.xlu0 %644
    %v646 = vrcp.pop %v642
    %v647 = vrcp.pop %v645
    %v648 = vmul.f32 %v637, %v646
    %v649 = vmul.f32 %v639, %v647
    %v650 = vpack.c.bf16 %v649, %v648
    %v651 = vmul.f32 %v497, %v292
    %v652 = vmul.f32 %v500, %v292
    %v653 = vpack.c.bf16 %v652, %v651
    %v655 = vsel %vm554, %v650, 0
    %657 = vmatprep.subr.bf16.mxu0 0
    %658 = vmatpush1.bf16.msra.mxu0 %v653
    %659 = vmatprep.subr.bf16.mxu0 0
    %660 = vmatpush1.bf16.msra.mxu0 0
    %661 = vmatprep.subr.bf16.mxu0 0
    %662 = vmatpush1.bf16.msra.mxu0 0
    %663 = vmatprep.subr.bf16.mxu0 0
    %664 = vmatpush1.bf16.msra.mxu0 0
    %665 = vmatprep.subr.bf16.mxu0 0
    %666 = vmatpush1.bf16.msra.mxu0 0
    %667 = vmatprep.subr.bf16.mxu0 0
    %668 = vmatpush1.bf16.msra.mxu0 0
    %669 = vmatprep.subr.bf16.mxu0 0
    %670 = vmatpush1.bf16.msra.mxu0 0
    %671 = vmatprep.subr.bf16.mxu0 0
    %672 = vmatpush1.bf16.msra.mxu0 0
    %673 = vmatprep.subr.bf16.mxu0 0
    %674 = vmatpush1.bf16.msra.mxu0 0
    %675 = vmatprep.subr.bf16.mxu0 0
    %676 = vmatpush1.bf16.msra.mxu0 0
    %677 = vmatprep.subr.bf16.mxu0 0
    %678 = vmatpush1.bf16.msra.mxu0 0
    %679 = vmatprep.subr.bf16.mxu0 0
    %680 = vmatpush1.bf16.msra.mxu0 0
    %681 = vmatprep.subr.bf16.mxu0 0
    %682 = vmatpush1.bf16.msra.mxu0 0
    %683 = vmatprep.subr.bf16.mxu0 0
    %684 = vmatpush1.bf16.msra.mxu0 0
    %685 = vmatprep.subr.bf16.mxu0 0
    %686 = vmatpush1.bf16.msra.mxu0 0
    %687 = vmatprep.subr.bf16.mxu0 0
    %688 = vmatpush1.bf16.msra.mxu0 0
    %689 = vmatprep.mubr.bf16.mxu0 0
    %690 = vmatmul.mubr.bf16.gmra.mrb[0].mxu0 %v655
    %v691 = vpop.f32.mrb[0].mxu0
    %v692 = vadd.f32 0.0, %v691
    %v693 = vpop.f32.mrb[0].mxu0
    %v694 = vpop.f32.mrb[0].mxu0
    %v695 = vadd.f32 0.0, %v694
    %v696 = vpop.f32.mrb[0].mxu0
    %697 = vdwg.mxu0
    %v699 = vsel %vm554, %v577, 0
    %701 = vmatprep.subr.bf16.mxu0 0
    %702 = vmatpush1.bf16.msra.mxu0 %v580
    %703 = vmatprep.subr.bf16.mxu0 0
    %704 = vmatpush1.bf16.msra.mxu0 0
    %705 = vmatprep.subr.bf16.mxu0 0
    %706 = vmatpush1.bf16.msra.mxu0 0
    %707 = vmatprep.subr.bf16.mxu0 0
    %708 = vmatpush1.bf16.msra.mxu0 0
    %709 = vmatprep.subr.bf16.mxu0 0
    %710 = vmatpush1.bf16.msra.mxu0 0
    %711 = vmatprep.subr.bf16.mxu0 0
    %712 = vmatpush1.bf16.msra.mxu0 0
    %713 = vmatprep.subr.bf16.mxu0 0
    %714 = vmatpush1.bf16.msra.mxu0 0
    %715 = vmatprep.subr.bf16.mxu0 0
    %716 = vmatpush1.bf16.msra.mxu0 0
    %717 = vmatprep.subr.bf16.mxu0 0
    %718 = vmatpush1.bf16.msra.mxu0 0
    %719 = vmatprep.subr.bf16.mxu0 0
    %720 = vmatpush1.bf16.msra.mxu0 0
    %721 = vmatprep.subr.bf16.mxu0 0
    %722 = vmatpush1.bf16.msra.mxu0 0
    %723 = vmatprep.subr.bf16.mxu0 0
    %724 = vmatpush1.bf16.msra.mxu0 0
    %725 = vmatprep.subr.bf16.mxu0 0
    %726 = vmatpush1.bf16.msra.mxu0 0
    %727 = vmatprep.subr.bf16.mxu0 0
    %728 = vmatpush1.bf16.msra.mxu0 0
    %729 = vmatprep.subr.bf16.mxu0 0
    %730 = vmatpush1.bf16.msra.mxu0 0
    %731 = vmatprep.subr.bf16.mxu0 0
    %732 = vmatpush1.bf16.msra.mxu0 0
    %733 = vmatprep.mubr.bf16.mxu0 0
    %734 = vmatmul.mubr.bf16.gmra.mrb[0].mxu0 %v699
    %v735 = vpop.f32.mrb[0].mxu0
    %v736 = vadd.f32 %v692, %v735
    %v737 = vpop.f32.mrb[0].mxu0
    %v738 = vpop.f32.mrb[0].mxu0
    %v739 = vadd.f32 %v695, %v738
    %v740 = vpop.f32.mrb[0].mxu0
    %741 = vdwg.mxu0
    %v742 = vmul.f32 %v365, %v297
    %v743 = vmul.f32 %v368, %v297
    %v744 = vpack.c.bf16 %v743, %v742
    %v746 = vsel %vm326, %v744, 0
    %748 = vmatprep.subr.bf16.mxu0 0
    %749 = vmatpush1.bf16.xpose.msra.mxu0 %v511
    %750 = vmatprep.subr.bf16.mxu0 0
    %751 = vmatpush1.bf16.xpose.msra.mxu0 0
    %752 = vmatprep.subr.bf16.mxu0 0
    %753 = vmatpush1.bf16.xpose.msra.mxu0 0
    %754 = vmatprep.subr.bf16.mxu0 0
    %755 = vmatpush1.bf16.xpose.msra.mxu0 0
    %756 = vmatprep.subr.bf16.mxu0 0
    %757 = vmatpush1.bf16.xpose.msra.mxu0 0
    %758 = vmatprep.subr.bf16.mxu0 0
    %759 = vmatpush1.bf16.xpose.msra.mxu0 0
    %760 = vmatprep.subr.bf16.mxu0 0
    %761 = vmatpush1.bf16.xpose.msra.mxu0 0
    %762 = vmatprep.subr.bf16.mxu0 0
    %763 = vmatpush1.bf16.xpose.msra.mxu0 0
    %764 = vmatprep.subr.bf16.mxu0 0
    %765 = vmatpush1.bf16.xpose.msra.mxu0 0
    %766 = vmatprep.subr.bf16.mxu0 0
    %767 = vmatpush1.bf16.xpose.msra.mxu0 0
    %768 = vmatprep.subr.bf16.mxu0 0
    %769 = vmatpush1.bf16.xpose.msra.mxu0 0
    %770 = vmatprep.subr.bf16.mxu0 0
    %771 = vmatpush1.bf16.xpose.msra.mxu0 0
    %772 = vmatprep.subr.bf16.mxu0 0
    %773 = vmatpush1.bf16.xpose.msra.mxu0 0
    %774 = vmatprep.subr.bf16.mxu0 0
    %775 = vmatpush1.bf16.xpose.msra.mxu0 0
    %776 = vmatprep.subr.bf16.mxu0 0
    %777 = vmatpush1.bf16.xpose.msra.mxu0 0
    %778 = vmatprep.subr.bf16.mxu0 0
    %779 = vmatpush1.bf16.xpose.msra.mxu0 0
    %780 = vmatprep.mubr.bf16.mxu0 0
    %781 = vmatmul.mubr.bf16.gmra.mrb[0].mxu0 %v746
    %v782 = vpop.f32.mrb[0].mxu0
    %v783 = vadd.f32 %v278, %v782
    %v784 = vpop.f32.mrb[0].mxu0
    %v785 = vpop.f32.mrb[0].mxu0
    %v786 = vadd.f32 %v279, %v785
    %v787 = vpop.f32.mrb[0].mxu0
    %788 = vdwg.mxu0
    %v789 = vsel %vm554, %v783, -inf
    %790 = vmax.xlane.f32.xlu0 %v789
    %v791 = vpop.xlane.xlu0 %790
    %v792 = vsel %vm554, %v786, -inf
    %793 = vmax.xlane.f32.xlu0 %v792
    %v794 = vpop.xlane.xlu0 %793
    %v795 = vsub.f32 %v783, %v791
    %v796 = vsub.f32 %v786, %v794
    %v797 = vmul.f32 %v795, 1.442695
    %v798 = vpow.pop %v797
    %v799 = vmul.f32 %v796, 1.442695
    %v800 = vpow.pop %v799
    %v801 = vsel %vm554, %v798, 0.0
    %802 = vadd.xlane.f32.xlu0 %v801
    %v803 = vpop.xlane.xlu0 %802
    %v804 = vsel %vm554, %v800, 0.0
    %805 = vadd.xlane.f32.xlu0 %v804
    %v806 = vpop.xlane.xlu0 %805
    %v807 = vrcp.pop %v803
    %v808 = vrcp.pop %v806
    %v809 = vmul.f32 %v798, %v807
    %v810 = vmul.f32 %v800, %v808
    %v811 = vpack.c.bf16 %v810, %v809
    %v812 = vmul.f32 %v497, %v297
    %v813 = vmul.f32 %v500, %v297
    %v814 = vpack.c.bf16 %v813, %v812
    %v816 = vsel %vm554, %v811, 0
    %818 = vmatprep.subr.bf16.mxu0 0
    %819 = vmatpush1.bf16.msra.mxu0 %v814
    %820 = vmatprep.subr.bf16.mxu0 0
    %821 = vmatpush1.bf16.msra.mxu0 0
    %822 = vmatprep.subr.bf16.mxu0 0
    %823 = vmatpush1.bf16.msra.mxu0 0
    %824 = vmatprep.subr.bf16.mxu0 0
    %825 = vmatpush1.bf16.msra.mxu0 0
    %826 = vmatprep.subr.bf16.mxu0 0
    %827 = vmatpush1.bf16.msra.mxu0 0
    %828 = vmatprep.subr.bf16.mxu0 0
    %829 = vmatpush1.bf16.msra.mxu0 0
    %830 = vmatprep.subr.bf16.mxu0 0
    %831 = vmatpush1.bf16.msra.mxu0 0
    %832 = vmatprep.subr.bf16.mxu0 0
    %833 = vmatpush1.bf16.msra.mxu0 0
    %834 = vmatprep.subr.bf16.mxu0 0
    %835 = vmatpush1.bf16.msra.mxu0 0
    %836 = vmatprep.subr.bf16.mxu0 0
    %837 = vmatpush1.bf16.msra.mxu0 0
    %838 = vmatprep.subr.bf16.mxu0 0
    %839 = vmatpush1.bf16.msra.mxu0 0
    %840 = vmatprep.subr.bf16.mxu0 0
    %841 = vmatpush1.bf16.msra.mxu0 0
    %842 = vmatprep.subr.bf16.mxu0 0
    %843 = vmatpush1.bf16.msra.mxu0 0
    %844 = vmatprep.subr.bf16.mxu0 0
    %845 = vmatpush1.bf16.msra.mxu0 0
    %846 = vmatprep.subr.bf16.mxu0 0
    %847 = vmatpush1.bf16.msra.mxu0 0
    %848 = vmatprep.subr.bf16.mxu0 0
    %849 = vmatpush1.bf16.msra.mxu0 0
    %850 = vmatprep.mubr.bf16.mxu0 0
    %851 = vmatmul.mubr.bf16.gmra.mrb[0].mxu0 %v816
    %v852 = vpop.f32.mrb[0].mxu0
    %v853 = vadd.f32 0.0, %v852
    %v854 = vpop.f32.mrb[0].mxu0
    %v855 = vpop.f32.mrb[0].mxu0
    %v856 = vadd.f32 0.0, %v855
    %v857 = vpop.f32.mrb[0].mxu0
    %858 = vdwg.mxu0
    %v859 = vadd.f32 %v736, %v853
    %v860 = vadd.f32 %v739, %v856
    %v861 = vmul.f32 %v365, %v302
    %v862 = vmul.f32 %v368, %v302
    %v863 = vpack.c.bf16 %v862, %v861
    %v865 = vsel %vm326, %v863, 0
    %867 = vmatprep.subr.bf16.mxu0 0
    %868 = vmatpush1.bf16.xpose.msra.mxu0 %v511
    %869 = vmatprep.subr.bf16.mxu0 0
    %870 = vmatpush1.bf16.xpose.msra.mxu0 0
    %871 = vmatprep.subr.bf16.mxu0 0
    %872 = vmatpush1.bf16.xpose.msra.mxu0 0
    %873 = vmatprep.subr.bf16.mxu0 0
    %874 = vmatpush1.bf16.xpose.msra.mxu0 0
    %875 = vmatprep.subr.bf16.mxu0 0
    %876 = vmatpush1.bf16.xpose.msra.mxu0 0
    %877 = vmatprep.subr.bf16.mxu0 0
    %878 = vmatpush1.bf16.xpose.msra.mxu0 0
    %879 = vmatprep.subr.bf16.mxu0 0
    %880 = vmatpush1.bf16.xpose.msra.mxu0 0
    %881 = vmatprep.subr.bf16.mxu0 0
    %882 = vmatpush1.bf16.xpose.msra.mxu0 0
    %883 = vmatprep.subr.bf16.mxu0 0
    %884 = vmatpush1.bf16.xpose.msra.mxu0 0
    %885 = vmatprep.subr.bf16.mxu0 0
    %886 = vmatpush1.bf16.xpose.msra.mxu0 0
    %887 = vmatprep.subr.bf16.mxu0 0
    %888 = vmatpush1.bf16.xpose.msra.mxu0 0
    %889 = vmatprep.subr.bf16.mxu0 0
    %890 = vmatpush1.bf16.xpose.msra.mxu0 0
    %891 = vmatprep.subr.bf16.mxu0 0
    %892 = vmatpush1.bf16.xpose.msra.mxu0 0
    %893 = vmatprep.subr.bf16.mxu0 0
    %894 = vmatpush1.bf16.xpose.msra.mxu0 0
    %895 = vmatprep.subr.bf16.mxu0 0
    %896 = vmatpush1.bf16.xpose.msra.mxu0 0
    %897 = vmatprep.subr.bf16.mxu0 0
    %898 = vmatpush1.bf16.xpose.msra.mxu0 0
    %899 = vmatprep.mubr.bf16.mxu0 0
    %900 = vmatmul.mubr.bf16.gmra.mrb[0].mxu0 %v865
    %v901 = vpop.f32.mrb[0].mxu0
    %v902 = vadd.f32 %v278, %v901
    %v903 = vpop.f32.mrb[0].mxu0
    %v904 = vpop.f32.mrb[0].mxu0
    %v905 = vadd.f32 %v279, %v904
    %v906 = vpop.f32.mrb[0].mxu0
    %907 = vdwg.mxu0
    %v908 = vsel %vm554, %v902, -inf
    %909 = vmax.xlane.f32.xlu0 %v908
    %v910 = vpop.xlane.xlu0 %909
    %v911 = vsel %vm554, %v905, -inf
    %912 = vmax.xlane.f32.xlu0 %v911
    %v913 = vpop.xlane.xlu0 %912
    %v914 = vsub.f32 %v902, %v910
    %v915 = vsub.f32 %v905, %v913
    %v916 = vmul.f32 %v914, 1.442695
    %v917 = vpow.pop %v916
    %v918 = vmul.f32 %v915, 1.442695
    %v919 = vpow.pop %v918
    %v920 = vsel %vm554, %v917, 0.0
    %921 = vadd.xlane.f32.xlu0 %v920
    %v922 = vpop.xlane.xlu0 %921
    %v923 = vsel %vm554, %v919, 0.0
    %924 = vadd.xlane.f32.xlu0 %v923
    %v925 = vpop.xlane.xlu0 %924
    %v926 = vrcp.pop %v922
    %v927 = vrcp.pop %v925
    %v928 = vmul.f32 %v917, %v926
    %v929 = vmul.f32 %v919, %v927
    %v930 = vpack.c.bf16 %v929, %v928
    %v931 = vmul.f32 %v497, %v302
    %v932 = vmul.f32 %v500, %v302
    %v933 = vpack.c.bf16 %v932, %v931
    %v935 = vsel %vm554, %v930, 0
    %937 = vmatprep.subr.bf16.mxu0 0
    %938 = vmatpush1.bf16.msra.mxu0 %v933
    %939 = vmatprep.subr.bf16.mxu0 0
    %940 = vmatpush1.bf16.msra.mxu0 0
    %941 = vmatprep.subr.bf16.mxu0 0
    %942 = vmatpush1.bf16.msra.mxu0 0
    %943 = vmatprep.subr.bf16.mxu0 0
    %944 = vmatpush1.bf16.msra.mxu0 0
    %945 = vmatprep.subr.bf16.mxu0 0
    %946 = vmatpush1.bf16.msra.mxu0 0
    %947 = vmatprep.subr.bf16.mxu0 0
    %948 = vmatpush1.bf16.msra.mxu0 0
    %949 = vmatprep.subr.bf16.mxu0 0
    %950 = vmatpush1.bf16.msra.mxu0 0
    %951 = vmatprep.subr.bf16.mxu0 0
    %952 = vmatpush1.bf16.msra.mxu0 0
    %953 = vmatprep.subr.bf16.mxu0 0
    %954 = vmatpush1.bf16.msra.mxu0 0
    %955 = vmatprep.subr.bf16.mxu0 0
    %956 = vmatpush1.bf16.msra.mxu0 0
    %957 = vmatprep.subr.bf16.mxu0 0
    %958 = vmatpush1.bf16.msra.mxu0 0
    %959 = vmatprep.subr.bf16.mxu0 0
    %960 = vmatpush1.bf16.msra.mxu0 0
    %961 = vmatprep.subr.bf16.mxu0 0
    %962 = vmatpush1.bf16.msra.mxu0 0
    %963 = vmatprep.subr.bf16.mxu0 0
    %964 = vmatpush1.bf16.msra.mxu0 0
    %965 = vmatprep.subr.bf16.mxu0 0
    %966 = vmatpush1.bf16.msra.mxu0 0
    %967 = vmatprep.subr.bf16.mxu0 0
    %968 = vmatpush1.bf16.msra.mxu0 0
    %969 = vmatprep.mubr.bf16.mxu0 0
    %970 = vmatmul.mubr.bf16.gmra.mrb[0].mxu0 %v935
    %v971 = vpop.f32.mrb[0].mxu0
    %v972 = vadd.f32 0.0, %v971
    %v973 = vpop.f32.mrb[0].mxu0
    %v974 = vpop.f32.mrb[0].mxu0
    %v975 = vadd.f32 0.0, %v974
    %v976 = vpop.f32.mrb[0].mxu0
    %977 = vdwg.mxu0
    %v978 = vadd.f32 %v859, %v972
    %v979 = vadd.f32 %v860, %v975
    %v980 = vpack.c.bf16 %v979, %v978
    %s981 = scalar_lea.vmem %s4, 48
    %v982 = vld [vmem:[%s981] sm:$0xf]
    %v983 = vld [vmem:[%s981 + $0x4] sm:$0xf]
    %v984 = vld [vmem:[%s981 + $0x8] sm:$0xf]
    %v985 = vld [vmem:[%s981 + $0xc] sm:$0xf]
    %s986 = scalar_lea.vmem [#allocation7], 3
    %v987 = vld [vmem:[%s986] sm:$0x1]
    %v989 = vlaneseq
    %v990 = vshrl.u32 %v989, 7
    %v991 = vsub.s32 0, %v990
    %v992 = vrot.slane %v987, %v991
    %v998 = vunpack.c.l.b16 %v982
    %v999 = vunpack.c.l.b16 %v983
    %v1000 = vunpack.c.l.b16 %v984
    %v1001 = vunpack.c.l.b16 %v985
    %v1002 = vpack.c.b16 %v999, %v998
    %v1003 = vpack.c.b16 %v1001, %v1000
    %v1007 = vsel %vm326, %v980, 0
    %1009 = vmatprep.subr.bf16.mxu0 0
    %1010 = vmatpush1.bf16.msra.mxu0 %v1002
    %1011 = vmatprep.subr.bf16.mxu0 0
    %1012 = vmatpush1.bf16.msra.mxu0 %v1003
    %1013 = vmatprep.subr.bf16.mxu0 0
    %1014 = vmatpush1.bf16.msra.mxu0 0
    %1015 = vmatprep.subr.bf16.mxu0 0
    %1016 = vmatpush1.bf16.msra.mxu0 0
    %1017 = vmatprep.subr.bf16.mxu0 0
    %1018 = vmatpush1.bf16.msra.mxu0 0
    %1019 = vmatprep.subr.bf16.mxu0 0
    %1020 = vmatpush1.bf16.msra.mxu0 0
    %1021 = vmatprep.subr.bf16.mxu0 0
    %1022 = vmatpush1.bf16.msra.mxu0 0
    %1023 = vmatprep.subr.bf16.mxu0 0
    %1024 = vmatpush1.bf16.msra.mxu0 0
    %1025 = vmatprep.subr.bf16.mxu0 0
    %1026 = vmatpush1.bf16.msra.mxu0 0
    %1027 = vmatprep.subr.bf16.mxu0 0
    %1028 = vmatpush1.bf16.msra.mxu0 0
    %1029 = vmatprep.subr.bf16.mxu0 0
    %1030 = vmatpush1.bf16.msra.mxu0 0
    %1031 = vmatprep.subr.bf16.mxu0 0
    %1032 = vmatpush1.bf16.msra.mxu0 0
    %1033 = vmatprep.subr.bf16.mxu0 0
    %1034 = vmatpush1.bf16.msra.mxu0 0
    %1035 = vmatprep.subr.bf16.mxu0 0
    %1036 = vmatpush1.bf16.msra.mxu0 0
    %1037 = vmatprep.subr.bf16.mxu0 0
    %1038 = vmatpush1.bf16.msra.mxu0 0
    %1039 = vmatprep.subr.bf16.mxu0 0
    %1040 = vmatpush1.bf16.msra.mxu0 0
    %1041 = vmatprep.mubr.bf16.mxu0 0
    %1042 = vmatmul.mubr.bf16.gmra.mrb[0].mxu0 %v1007
    %v1043 = vpop.f32.mrb[0].mxu0
    %v1044 = vadd.f32 %v992, %v1043
    %v1045 = vpop.f32.mrb[0].mxu0
    %v1046 = vpop.f32.mrb[0].mxu0
    %v1047 = vadd.f32 %v992, %v1046
    %v1048 = vpop.f32.mrb[0].mxu0
    %1049 = vdwg.mxu0
    %v1050 = vadd.f32 %v271, %v1044
    %v1051 = vadd.f32 %v274, %v1047
    %v1052 = vld [vmem:[#allocation8] sm:$0x1]
    %s1053 = scalar_lea.vmem [#allocation8], 1
    %v1054 = vld [vmem:[%s1053] sm:$0x1]
    %v1055 = vsel %vm326, %v1050, 0.0
    %1056 = vadd.xlane.f32.xlu0 %v1055
    %v1057 = vpop.xlane.xlu0 %1056
    %v1058 = vsel %vm326, %v1051, 0.0
    %1059 = vadd.xlane.f32.xlu0 %v1058
    %v1060 = vpop.xlane.xlu0 %1059
    %v1061 = vrcp.pop 32.0
    %v1062 = vmul.f32 %v1057, %v1061
    %v1063 = vmul.f32 %v1060, %v1061
    %v1064 = vsub.f32 %v1050, %v1062
    %v1065 = vsub.f32 %v1051, %v1063
    %v1066 = vmul.f32 %v1064, %v1064
    %v1067 = vmul.f32 %v1065, %v1065
    %v1068 = vsel %vm326, %v1066, 0.0
    %1069 = vadd.xlane.f32.xlu0 %v1068
    %v1070 = vpop.xlane.xlu0 %1069
    %v1071 = vsel %vm326, %v1067, 0.0
    %1072 = vadd.xlane.f32.xlu0 %v1071
    %v1073 = vpop.xlane.xlu0 %1072
    %v1074 = vmul.f32 %v1070, %v1061
    %v1075 = vmul.f32 %v1073, %v1061
    %v1076 = vadd.f32 %v1074, 1e-05
    %v1077 = vadd.f32 %v1075, 1e-05
    %v1078 = vrsqrt.pop %v1076
    %v1079 = vrsqrt.pop %v1077
    %v1080 = vmul.f32 %v1064, %v1078
    %v1081 = vmul.f32 %v1065, %v1079
    %v1083 = vlaneseq
    %v1084 = vshrl.u32 %v1083, 7
    %v1085 = vsub.s32 0, %v1084
    %v1086 = vrot.slane %v1052, %v1085
    %v1088 = vmul.f32 %v1080, %v1086
    %v1089 = vmul.f32 %v1081, %v1086
    %v1091 = vlaneseq
    %v1092 = vshrl.u32 %v1091, 7
    %v1093 = vsub.s32 0, %v1092
    %v1094 = vrot.slane %v1054, %v1093
    %v1096 = vadd.f32 %v1088, %v1094
    %v1097 = vadd.f32 %v1089, %v1094
    %v1098 = vpack.c.bf16 %v1097, %v1096
    %s1099 = scalar_lea.vmem %s4, 64
    %v1100 = vld [vmem:[%s1099] sm:$0xf]
    %v1101 = vld [vmem:[%s1099 + $0x4] sm:$0xf]
    %v1102 = vld [vmem:[%s1099 + $0x8] sm:$0xf]
    %v1103 = vld [vmem:[%s1099 + $0xc] sm:$0xf]
    %s1104 = scalar_lea.vmem [#allocation7], 4
    %v1105 = vld [vmem:[%s1104] sm:$0x1]
    %v1107 = vlaneseq
    %v1108 = vshrl.u32 %v1107, 7
    %v1109 = vsub.s32 0, %v1108
    %v1110 = vrot.slane %v1105, %v1109
    %v1116 = vunpack.c.l.b16 %v1100
    %v1117 = vunpack.c.l.b16 %v1101
    %v1118 = vunpack.c.l.b16 %v1102
    %v1119 = vunpack.c.l.b16 %v1103
    %v1120 = vpack.c.b16 %v1117, %v1116
    %v1121 = vpack.c.b16 %v1119, %v1118
    %v1125 = vsel %vm326, %v1098, 0
    %1127 = vmatprep.subr.bf16.mxu0 0
    %1128 = vmatpush1.bf16.msra.mxu0 %v1120
    %1129 = vmatprep.subr.bf16.mxu0 0
    %1130 = vmatpush1.bf16.msra.mxu0 %v1121
    %1131 = vmatprep.subr.bf16.mxu0 0
    %1132 = vmatpush1.bf16.msra.mxu0 0
    %1133 = vmatprep.subr.bf16.mxu0 0
    %1134 = vmatpush1.bf16.msra.mxu0 0
    %1135 = vmatprep.subr.bf16.mxu0 0
    %1136 = vmatpush1.bf16.msra.mxu0 0
    %1137 = vmatprep.subr.bf16.mxu0 0
    %1138 = vmatpush1.bf16.msra.mxu0 0
    %1139 = vmatprep.subr.bf16.mxu0 0
    %1140 = vmatpush1.bf16.msra.mxu0 0
    %1141 = vmatprep.subr.bf16.mxu0 0
    %1142 = vmatpush1.bf16.msra.mxu0 0
    %1143 = vmatprep.subr.bf16.mxu0 0
    %1144 = vmatpush1.bf16.msra.mxu0 0
    %1145 = vmatprep.subr.bf16.mxu0 0
    %1146 = vmatpush1.bf16.msra.mxu0 0
    %1147 = vmatprep.subr.bf16.mxu0 0
    %1148 = vmatpush1.bf16.msra.mxu0 0
    %1149 = vmatprep.subr.bf16.mxu0 0
    %1150 = vmatpush1.bf16.msra.mxu0 0
    %1151 = vmatprep.subr.bf16.mxu0 0
    %1152 = vmatpush1.bf16.msra.mxu0 0
    %1153 = vmatprep.subr.bf16.mxu0 0
    %1154 = vmatpush1.bf16.msra.mxu0 0
    %1155 = vmatprep.subr.bf16.mxu0 0
    %1156 = vmatpush1.bf16.msra.mxu0 0
    %1157 = vmatprep.subr.bf16.mxu0 0
    %1158 = vmatpush1.bf16.msra.mxu0 0
    %1159 = vmatprep.mubr.bf16.mxu0 0
    %1160 = vmatmul.mubr.bf16.gmra.mrb[0].mxu0 %v1125
    %v1161 = vpop.f32.mrb[0].mxu0
    %v1162 = vadd.f32 %v1110, %v1161
    %v1163 = vpop.f32.mrb[0].mxu0
    %v1164 = vpop.f32.mrb[0].mxu0
    %v1165 = vadd.f32 %v1110, %v1164
    %v1166 = vpop.f32.mrb[0].mxu0
    %1167 = vdwg.mxu0
    %s1168 = scalar_lea.vmem %s4, 80
    %v1169 = vld [vmem:[%s1168] sm:$0xf]
    %v1170 = vld [vmem:[%s1168 + $0x4] sm:$0xf]
    %v1171 = vld [vmem:[%s1168 + $0x8] sm:$0xf]
    %v1172 = vld [vmem:[%s1168 + $0xc] sm:$0xf]
    %s1173 = scalar_lea.vmem [#allocation7], 5
    %v1174 = vld [vmem:[%s1173] sm:$0x1]
    %v1176 = vlaneseq
    %v1177 = vshrl.u32 %v1176, 7
    %v1178 = vsub.s32 0, %v1177
    %v1179 = vrot.slane %v1174, %v1178
    %v1185 = vunpack.c.l.b16 %v1169
    %v1186 = vunpack.c.l.b16 %v1170
    %v1187 = vunpack.c.l.b16 %v1171
    %v1188 = vunpack.c.l.b16 %v1172
    %v1189 = vpack.c.b16 %v1186, %v1185
    %v1190 = vpack.c.b16 %v1188, %v1187
    %1193 = vmatprep.subr.bf16.mxu0 0
    %1194 = vmatpush1.bf16.msra.mxu0 %v1189
    %1195 = vmatprep.subr.bf16.mxu0 0
    %1196 = vmatpush1.bf16.msra.mxu0 %v1190
    %1197 = vmatprep.subr.bf16.mxu0 0
    %1198 = vmatpush1.bf16.msra.mxu0 0
    %1199 = vmatprep.subr.bf16.mxu0 0
    %1200 = vmatpush1.bf16.msra.mxu0 0
    %1201 = vmatprep.subr.bf16.mxu0 0
    %1202 = vmatpush1.bf16.msra.mxu0 0
    %1203 = vmatprep.subr.bf16.mxu0 0
    %1204 = vmatpush1.bf16.msra.mxu0 0
    %1205 = vmatprep.subr.bf16.mxu0 0
    %1206 = vmatpush1.bf16.msra.mxu0 0
    %1207 = vmatprep.subr.bf16.mxu0 0
    %1208 = vmatpush1.bf16.msra.mxu0 0
    %1209 = vmatprep.subr.bf16.mxu0 0
    %1210 = vmatpush1.bf16.msra.mxu0 0
    %1211 = vmatprep.subr.bf16.mxu0 0
    %1212 = vmatpush1.bf16.msra.mxu0 0
    %1213 = vmatprep.subr.bf16.mxu0 0
    %1214 = vmatpush1.bf16.msra.mxu0 0
    %1215 = vmatprep.subr.bf16.mxu0 0
    %1216 = vmatpush1.bf16.msra.mxu0 0
    %1217 = vmatprep.subr.bf16.mxu0 0
    %1218 = vmatpush1.bf16.msra.mxu0 0
    %1219 = vmatprep.subr.bf16.mxu0 0
    %1220 = vmatpush1.bf16.msra.mxu0 0
    %1221 = vmatprep.subr.bf16.mxu0 0
    %1222 = vmatpush1.bf16.msra.mxu0 0
    %1223 = vmatprep.subr.bf16.mxu0 0
    %1224 = vmatpush1.bf16.msra.mxu0 0
    %1225 = vmatprep.mubr.bf16.mxu0 0
    %1226 = vmatmul.mubr.bf16.gmra.mrb[0].mxu0 %v328
    %v1227 = vpop.f32.mrb[0].mxu0
    %v1228 = vadd.f32 %v1179, %v1227
    %v1229 = vpop.f32.mrb[0].mxu0
    %v1230 = vpop.f32.mrb[0].mxu0
    %v1231 = vadd.f32 %v1179, %v1230
    %v1232 = vpop.f32.mrb[0].mxu0
    %1233 = vdwg.mxu0
    %s1234 = scalar_lea.vmem %s4, 96
    %v1235 = vld [vmem:[%s1234] sm:$0xf]
    %v1236 = vld [vmem:[%s1234 + $0x4] sm:$0xf]
    %v1237 = vld [vmem:[%s1234 + $0x8] sm:$0xf]
    %v1238 = vld [vmem:[%s1234 + $0xc] sm:$0xf]
    %s1239 = scalar_lea.vmem [#allocation7], 6
    %v1240 = vld [vmem:[%s1239] sm:$0x1]
    %v1242 = vlaneseq
    %v1243 = vshrl.u32 %v1242, 7
    %v1244 = vsub.s32 0, %v1243
    %v1245 = vrot.slane %v1240, %v1244
    %v1251 = vunpack.c.l.b16 %v1235
    %v1252 = vunpack.c.l.b16 %v1236
    %v1253 = vunpack.c.l.b16 %v1237
    %v1254 = vunpack.c.l.b16 %v1238
    %v1255 = vpack.c.b16 %v1252, %v1251
    %v1256 = vpack.c.b16 %v1254, %v1253
    %1259 = vmatprep.subr.bf16.mxu0 0
    %1260 = vmatpush1.bf16.msra.mxu0 %v1255
    %1261 = vmatprep.subr.bf16.mxu0 0
    %1262 = vmatpush1.bf16.msra.mxu0 %v1256
    %1263 = vmatprep.subr.bf16.mxu0 0
    %1264 = vmatpush1.bf16.msra.mxu0 0
    %1265 = vmatprep.subr.bf16.mxu0 0
    %1266 = vmatpush1.bf16.msra.mxu0 0
    %1267 = vmatprep.subr.bf16.mxu0 0
    %1268 = vmatpush1.bf16.msra.mxu0 0
    %1269 = vmatprep.subr.bf16.mxu0 0
    %1270 = vmatpush1.bf16.msra.mxu0 0
    %1271 = vmatprep.subr.bf16.mxu0 0
    %1272 = vmatpush1.bf16.msra.mxu0 0
    %1273 = vmatprep.subr.bf16.mxu0 0
    %1274 = vmatpush1.bf16.msra.mxu0 0
    %1275 = vmatprep.subr.bf16.mxu0 0
    %1276 = vmatpush1.bf16.msra.mxu0 0
    %1277 = vmatprep.subr.bf16.mxu0 0
    %1278 = vmatpush1.bf16.msra.mxu0 0
    %1279 = vmatprep.subr.bf16.mxu0 0
    %1280 = vmatpush1.bf16.msra.mxu0 0
    %1281 = vmatprep.subr.bf16.mxu0 0
    %1282 = vmatpush1.bf16.msra.mxu0 0
    %1283 = vmatprep.subr.bf16.mxu0 0
    %1284 = vmatpush1.bf16.msra.mxu0 0
    %1285 = vmatprep.subr.bf16.mxu0 0
    %1286 = vmatpush1.bf16.msra.mxu0 0
    %1287 = vmatprep.subr.bf16.mxu0 0
    %1288 = vmatpush1.bf16.msra.mxu0 0
    %1289 = vmatprep.subr.bf16.mxu0 0
    %1290 = vmatpush1.bf16.msra.mxu0 0
    %1291 = vmatprep.mubr.bf16.mxu0 0
    %1292 = vmatmul.mubr.bf16.gmra.mrb[0].mxu0 %v328
    %v1293 = vpop.f32.mrb[0].mxu0
    %v1294 = vadd.f32 %v1245, %v1293
    %v1295 = vpop.f32.mrb[0].mxu0
    %v1296 = vpop.f32.mrb[0].mxu0
    %v1297 = vadd.f32 %v1245, %v1296
    %v1298 = vpop.f32.mrb[0].mxu0
    %1299 = vdwg.mxu0
    %v1300 = vpack.c.bf16 %v1231, %v1228
    %v1301 = vmul.f32 %v1162, %v287
    %v1302 = vmul.f32 %v1165, %v287
    %v1303 = vpack.c.bf16 %v1302, %v1301
    %v1305 = vsel %vm326, %v1303, 0
    %v1308 = vsel %vm326, %v1300, 0
    %1310 = vmatprep.subr.bf16.mxu0 0
    %1311 = vmatpush1.bf16.xpose.msra.mxu0 %v1308
    %1312 = vmatprep.subr.bf16.mxu0 0
    %1313 = vmatpush1.bf16.xpose.msra.mxu0 0
    %1314 = vmatprep.subr.bf16.mxu0 0
    %1315 = vmatpush1.bf16.xpose.msra.mxu0 0
    %1316 = vmatprep.subr.bf16.mxu0 0
    %1317 = vmatpush1.bf16.xpose.msra.mxu0 0
    %1318 = vmatprep.subr.bf16.mxu0 0
    %1319 = vmatpush1.bf16.xpose.msra.mxu0 0
    %1320 = vmatprep.subr.bf16.mxu0 0
    %1321 = vmatpush1.bf16.xpose.msra.mxu0 0
    %1322 = vmatprep.subr.bf16.mxu0 0
    %1323 = vmatpush1.bf16.xpose.msra.mxu0 0
    %1324 = vmatprep.subr.bf16.mxu0 0
    %1325 = vmatpush1.bf16.xpose.msra.mxu0 0
    %1326 = vmatprep.subr.bf16.mxu0 0
    %1327 = vmatpush1.bf16.xpose.msra.mxu0 0
    %1328 = vmatprep.subr.bf16.mxu0 0
    %1329 = vmatpush1.bf16.xpose.msra.mxu0 0
    %1330 = vmatprep.subr.bf16.mxu0 0
    %1331 = vmatpush1.bf16.xpose.msra.mxu0 0
    %1332 = vmatprep.subr.bf16.mxu0 0
    %1333 = vmatpush1.bf16.xpose.msra.mxu0 0
    %1334 = vmatprep.subr.bf16.mxu0 0
    %1335 = vmatpush1.bf16.xpose.msra.mxu0 0
    %1336 = vmatprep.subr.bf16.mxu0 0
    %1337 = vmatpush1.bf16.xpose.msra.mxu0 0
    %1338 = vmatprep.subr.bf16.mxu0 0
    %1339 = vmatpush1.bf16.xpose.msra.mxu0 0
    %1340 = vmatprep.subr.bf16.mxu0 0
    %1341 = vmatpush1.bf16.xpose.msra.mxu0 0
    %1342 = vmatprep.mubr.bf16.mxu0 0
    %1343 = vmatmul.mubr.bf16.gmra.mrb[0].mxu0 %v1305
    %v1344 = vpop.f32.mrb[0].mxu0
    %v1345 = vadd.f32 %v281, %v1344
    %v1346 = vpop.f32.mrb[0].mxu0
    %v1347 = vpop.f32.mrb[0].mxu0
    %v1348 = vadd.f32 %v282, %v1347
    %v1349 = vpop.f32.mrb[0].mxu0
    %1350 = vdwg.mxu0
    %v1351 = vsel %vm554, %v1345, -inf
    %1352 = vmax.xlane.f32.xlu0 %v1351
    %v1353 = vpop.xlane.xlu0 %1352
    %v1354 = vsel %vm554, %v1348, -inf
    %1355 = vmax.xlane.f32.xlu0 %v1354
    %v1356 = vpop.xlane.xlu0 %1355
    %v1357 = vsub.f32 %v1345, %v1353
    %v1358 = vsub.f32 %v1348, %v1356
    %v1359 = vmul.f32 %v1357, 1.442695
    %v1360 = vpow.pop %v1359
    %v1361 = vmul.f32 %v1358, 1.442695
    %v1362 = vpow.pop %v1361
    %v1363 = vsel %vm554, %v1360, 0.0
    %1364 = vadd.xlane.f32.xlu0 %v1363
    %v1365 = vpop.xlane.xlu0 %1364
    %v1366 = vsel %vm554, %v1362, 0.0
    %1367 = vadd.xlane.f32.xlu0 %v1366
    %v1368 = vpop.xlane.xlu0 %1367
    %v1369 = vrcp.pop %v1365
    %v1370 = vrcp.pop %v1368
    %v1371 = vmul.f32 %v1360, %v1369
    %v1372 = vmul.f32 %v1362, %v1370
    %v1373 = vpack.c.bf16 %v1372, %v1371
    %v1374 = vmul.f32 %v1294, %v287
    %v1375 = vmul.f32 %v1297, %v287
    %v1376 = vpack.c.bf16 %v1375, %v1374
    %v1377 = vmul.f32 %v1162, %v292
    %v1378 = vmul.f32 %v1165, %v292
    %v1379 = vpack.c.bf16 %v1378, %v1377
    %v1381 = vsel %vm326, %v1379, 0
    %1383 = vmatprep.subr.bf16.mxu0 0
    %1384 = vmatpush1.bf16.xpose.msra.mxu0 %v1308
    %1385 = vmatprep.subr.bf16.mxu0 0
    %1386 = vmatpush1.bf16.xpose.msra.mxu0 0
    %1387 = vmatprep.subr.bf16.mxu0 0
    %1388 = vmatpush1.bf16.xpose.msra.mxu0 0
    %1389 = vmatprep.subr.bf16.mxu0 0
    %1390 = vmatpush1.bf16.xpose.msra.mxu0 0
    %1391 = vmatprep.subr.bf16.mxu0 0
    %1392 = vmatpush1.bf16.xpose.msra.mxu0 0
    %1393 = vmatprep.subr.bf16.mxu0 0
    %1394 = vmatpush1.bf16.xpose.msra.mxu0 0
    %1395 = vmatprep.subr.bf16.mxu0 0
    %1396 = vmatpush1.bf16.xpose.msra.mxu0 0
    %1397 = vmatprep.subr.bf16.mxu0 0
    %1398 = vmatpush1.bf16.xpose.msra.mxu0 0
    %1399 = vmatprep.subr.bf16.mxu0 0
    %1400 = vmatpush1.bf16.xpose.msra.mxu0 0
    %1401 = vmatprep.subr.bf16.mxu0 0
    %1402 = vmatpush1.bf16.xpose.msra.mxu0 0
    %1403 = vmatprep.subr.bf16.mxu0 0
    %1404 = vmatpush1.bf16.xpose.msra.mxu0 0
    %1405 = vmatprep.subr.bf16.mxu0 0
    %1406 = vmatpush1.bf16.xpose.msra.mxu0 0
    %1407 = vmatprep.subr.bf16.mxu0 0
    %1408 = vmatpush1.bf16.xpose.msra.mxu0 0
    %1409 = vmatprep.subr.bf16.mxu0 0
    %1410 = vmatpush1.bf16.xpose.msra.mxu0 0
    %1411 = vmatprep.subr.bf16.mxu0 0
    %1412 = vmatpush1.bf16.xpose.msra.mxu0 0
    %1413 = vmatprep.subr.bf16.mxu0 0
    %1414 = vmatpush1.bf16.xpose.msra.mxu0 0
    %1415 = vmatprep.mubr.bf16.mxu0 0
    %1416 = vmatmul.mubr.bf16.gmra.mrb[0].mxu0 %v1381
    %v1417 = vpop.f32.mrb[0].mxu0
    %v1418 = vadd.f32 %v281, %v1417
    %v1419 = vpop.f32.mrb[0].mxu0
    %v1420 = vpop.f32.mrb[0].mxu0
    %v1421 = vadd.f32 %v282, %v1420
    %v1422 = vpop.f32.mrb[0].mxu0
    %1423 = vdwg.mxu0
    %v1424 = vsel %vm554, %v1418, -inf
    %1425 = vmax.xlane.f32.xlu0 %v1424
    %v1426 = vpop.xlane.xlu0 %1425
    %v1427 = vsel %vm554, %v1421, -inf
    %1428 = vmax.xlane.f32.xlu0 %v1427
    %v1429 = vpop.xlane.xlu0 %1428
    %v1430 = vsub.f32 %v1418, %v1426
    %v1431 = vsub.f32 %v1421, %v1429
    %v1432 = vmul.f32 %v1430, 1.442695
    %v1433 = vpow.pop %v1432
    %v1434 = vmul.f32 %v1431, 1.442695
    %v1435 = vpow.pop %v1434
    %v1436 = vsel %vm554, %v1433, 0.0
    %1437 = vadd.xlane.f32.xlu0 %v1436
    %v1438 = vpop.xlane.xlu0 %1437
    %v1439 = vsel %vm554, %v1435, 0.0
    %1440 = vadd.xlane.f32.xlu0 %v1439
    %v1441 = vpop.xlane.xlu0 %1440
    %v1442 = vrcp.pop %v1438
    %v1443 = vrcp.pop %v1441
    %v1444 = vmul.f32 %v1433, %v1442
    %v1445 = vmul.f32 %v1435, %v1443
    %v1446 = vpack.c.bf16 %v1445, %v1444
    %v1447 = vmul.f32 %v1294, %v292
    %v1448 = vmul.f32 %v1297, %v292
    %v1449 = vpack.c.bf16 %v1448, %v1447
    %v1451 = vsel %vm554, %v1446, 0
    %1453 = vmatprep.subr.bf16.mxu0 0
    %1454 = vmatpush1.bf16.msra.mxu0 %v1449
    %1455 = vmatprep.subr.bf16.mxu0 0
    %1456 = vmatpush1.bf16.msra.mxu0 0
    %1457 = vmatprep.subr.bf16.mxu0 0
    %1458 = vmatpush1.bf16.msra.mxu0 0
    %1459 = vmatprep.subr.bf16.mxu0 0
    %1460 = vmatpush1.bf16.msra.mxu0 0
    %1461 = vmatprep.subr.bf16.mxu0 0
    %1462 = vmatpush1.bf16.msra.mxu0 0
    %1463 = vmatprep.subr.bf16.mxu0 0
    %1464 = vmatpush1.bf16.msra.mxu0 0
    %1465 = vmatprep.subr.bf16.mxu0 0
    %1466 = vmatpush1.bf16.msra.mxu0 0
    %1467 = vmatprep.subr.bf16.mxu0 0
    %1468 = vmatpush1.bf16.msra.mxu0 0
    %1469 = vmatprep.subr.bf16.mxu0 0
    %1470 = vmatpush1.bf16.msra.mxu0 0
    %1471 = vmatprep.subr.bf16.mxu0 0
    %1472 = vmatpush1.bf16.msra.mxu0 0
    %1473 = vmatprep.subr.bf16.mxu0 0
    %1474 = vmatpush1.bf16.msra.mxu0 0
    %1475 = vmatprep.subr.bf16.mxu0 0
    %1476 = vmatpush1.bf16.msra.mxu0 0
    %1477 = vmatprep.subr.bf16.mxu0 0
    %1478 = vmatpush1.bf16.msra.mxu0 0
    %1479 = vmatprep.subr.bf16.mxu0 0
    %1480 = vmatpush1.bf16.msra.mxu0 0
    %1481 = vmatprep.subr.bf16.mxu0 0
    %1482 = vmatpush1.bf16.msra.mxu0 0
    %1483 = vmatprep.subr.bf16.mxu0 0
    %1484 = vmatpush1.bf16.msra.mxu0 0
    %1485 = vmatprep.mubr.bf16.mxu0 0
    %1486 = vmatmul.mubr.bf16.gmra.mrb[0].mxu0 %v1451
    %v1487 = vpop.f32.mrb[0].mxu0
    %v1488 = vadd.f32 0.0, %v1487
    %v1489 = vpop.f32.mrb[0].mxu0
    %v1490 = vpop.f32.mrb[0].mxu0
    %v1491 = vadd.f32 0.0, %v1490
    %v1492 = vpop.f32.mrb[0].mxu0
    %1493 = vdwg.mxu0
    %v1495 = vsel %vm554, %v1373, 0
    %1497 = vmatprep.subr.bf16.mxu0 0
    %1498 = vmatpush1.bf16.msra.mxu0 %v1376
    %1499 = vmatprep.subr.bf16.mxu0 0
    %1500 = vmatpush1.bf16.msra.mxu0 0
    %1501 = vmatprep.subr.bf16.mxu0 0
    %1502 = vmatpush1.bf16.msra.mxu0 0
    %1503 = vmatprep.subr.bf16.mxu0 0
    %1504 = vmatpush1.bf16.msra.mxu0 0
    %1505 = vmatprep.subr.bf16.mxu0 0
    %1506 = vmatpush1.bf16.msra.mxu0 0
    %1507 = vmatprep.subr.bf16.mxu0 0
    %1508 = vmatpush1.bf16.msra.mxu0 0
    %1509 = vmatprep.subr.bf16.mxu0 0
    %1510 = vmatpush1.bf16.msra.mxu0 0
    %1511 = vmatprep.subr.bf16.mxu0 0
    %1512 = vmatpush1.bf16.msra.mxu0 0
    %1513 = vmatprep.subr.bf16.mxu0 0
    %1514 = vmatpush1.bf16.msra.mxu0 0
    %1515 = vmatprep.subr.bf16.mxu0 0
    %1516 = vmatpush1.bf16.msra.mxu0 0
    %1517 = vmatprep.subr.bf16.mxu0 0
    %1518 = vmatpush1.bf16.msra.mxu0 0
    %1519 = vmatprep.subr.bf16.mxu0 0
    %1520 = vmatpush1.bf16.msra.mxu0 0
    %1521 = vmatprep.subr.bf16.mxu0 0
    %1522 = vmatpush1.bf16.msra.mxu0 0
    %1523 = vmatprep.subr.bf16.mxu0 0
    %1524 = vmatpush1.bf16.msra.mxu0 0
    %1525 = vmatprep.subr.bf16.mxu0 0
    %1526 = vmatpush1.bf16.msra.mxu0 0
    %1527 = vmatprep.subr.bf16.mxu0 0
    %1528 = vmatpush1.bf16.msra.mxu0 0
    %1529 = vmatprep.mubr.bf16.mxu0 0
    %1530 = vmatmul.mubr.bf16.gmra.mrb[0].mxu0 %v1495
    %v1531 = vpop.f32.mrb[0].mxu0
    %v1532 = vadd.f32 %v1488, %v1531
    %v1533 = vpop.f32.mrb[0].mxu0
    %v1534 = vpop.f32.mrb[0].mxu0
    %v1535 = vadd.f32 %v1491, %v1534
    %v1536 = vpop.f32.mrb[0].mxu0
    %1537 = vdwg.mxu0
    %v1538 = vmul.f32 %v1162, %v297
    %v1539 = vmul.f32 %v1165, %v297
    %v1540 = vpack.c.bf16 %v1539, %v1538
    %v1542 = vsel %vm326, %v1540, 0
    %1544 = vmatprep.subr.bf16.mxu0 0
    %1545 = vmatpush1.bf16.xpose.msra.mxu0 %v1308
    %1546 = vmatprep.subr.bf16.mxu0 0
    %1547 = vmatpush1.bf16.xpose.msra.mxu0 0
    %1548 = vmatprep.subr.bf16.mxu0 0
    %1549 = vmatpush1.bf16.xpose.msra.mxu0 0
    %1550 = vmatprep.subr.bf16.mxu0 0
    %1551 = vmatpush1.bf16.xpose.msra.mxu0 0
    %1552 = vmatprep.subr.bf16.mxu0 0
    %1553 = vmatpush1.bf16.xpose.msra.mxu0 0
    %1554 = vmatprep.subr.bf16.mxu0 0
    %1555 = vmatpush1.bf16.xpose.msra.mxu0 0
    %1556 = vmatprep.subr.bf16.mxu0 0
    %1557 = vmatpush1.bf16.xpose.msra.mxu0 0
    %1558 = vmatprep.subr.bf16.mxu0 0
    %1559 = vmatpush1.bf16.xpose.msra.mxu0 0
    %1560 = vmatprep.subr.bf16.mxu0 0
    %1561 = vmatpush1.bf16.xpose.msra.mxu0 0
    %1562 = vmatprep.subr.bf16.mxu0 0
    %1563 = vmatpush1.bf16.xpose.msra.mxu0 0
    %1564 = vmatprep.subr.bf16.mxu0 0
    %1565 = vmatpush1.bf16.xpose.msra.mxu0 0
    %1566 = vmatprep.subr.bf16.mxu0 0
    %1567 = vmatpush1.bf16.xpose.msra.mxu0 0
    %1568 = vmatprep.subr.bf16.mxu0 0
    %1569 = vmatpush1.bf16.xpose.msra.mxu0 0
    %1570 = vmatprep.subr.bf16.mxu0 0
    %1571 = vmatpush1.bf16.xpose.msra.mxu0 0
    %1572 = vmatprep.subr.bf16.mxu0 0
    %1573 = vmatpush1.bf16.xpose.msra.mxu0 0
    %1574 = vmatprep.subr.bf16.mxu0 0
    %1575 = vmatpush1.bf16.xpose.msra.mxu0 0
    %1576 = vmatprep.mubr.bf16.mxu0 0
    %1577 = vmatmul.mubr.bf16.gmra.mrb[0].mxu0 %v1542
    %v1578 = vpop.f32.mrb[0].mxu0
    %v1579 = vadd.f32 %v281, %v1578
    %v1580 = vpop.f32.mrb[0].mxu0
    %v1581 = vpop.f32.mrb[0].mxu0
    %v1582 = vadd.f32 %v282, %v1581
    %v1583 = vpop.f32.mrb[0].mxu0
    %1584 = vdwg.mxu0
    %v1585 = vsel %vm554, %v1579, -inf
    %1586 = vmax.xlane.f32.xlu0 %v1585
    %v1587 = vpop.xlane.xlu0 %1586
    %v1588 = vsel %vm554, %v1582, -inf
    %1589 = vmax.xlane.f32.xlu0 %v1588
    %v1590 = vpop.xlane.xlu0 %1589
    %v1591 = vsub.f32 %v1579, %v1587
    %v1592 = vsub.f32 %v1582, %v1590
    %v1593 = vmul.f32 %v1591, 1.442695
    %v1594 = vpow.pop %v1593
    %v1595 = vmul.f32 %v1592, 1.442695
    %v1596 = vpow.pop %v1595
    %v1597 = vsel %vm554, %v1594, 0.0
    %1598 = vadd.xlane.f32.xlu0 %v1597
    %v1599 = vpop.xlane.xlu0 %1598
    %v1600 = vsel %vm554, %v1596, 0.0
    %1601 = vadd.xlane.f32.xlu0 %v1600
    %v1602 = vpop.xlane.xlu0 %1601
    %v1603 = vrcp.pop %v1599
    %v1604 = vrcp.pop %v1602
    %v1605 = vmul.f32 %v1594, %v1603
    %v1606 = vmul.f32 %v1596, %v1604
    %v1607 = vpack.c.bf16 %v1606, %v1605
    %v1608 = vmul.f32 %v1294, %v297
    %v1609 = vmul.f32 %v1297, %v297
    %v1610 = vpack.c.bf16 %v1609, %v1608
    %v1612 = vsel %vm554, %v1607, 0
    %1614 = vmatprep.subr.bf16.mxu0 0
    %1615 = vmatpush1.bf16.msra.mxu0 %v1610
    %1616 = vmatprep.subr.bf16.mxu0 0
    %1617 = vmatpush1.bf16.msra.mxu0 0
    %1618 = vmatprep.subr.bf16.mxu0 0
    %1619 = vmatpush1.bf16.msra.mxu0 0
    %1620 = vmatprep.subr.bf16.mxu0 0
    %1621 = vmatpush1.bf16.msra.mxu0 0
    %1622 = vmatprep.subr.bf16.mxu0 0
    %1623 = vmatpush1.bf16.msra.mxu0 0
    %1624 = vmatprep.subr.bf16.mxu0 0
    %1625 = vmatpush1.bf16.msra.mxu0 0
    %1626 = vmatprep.subr.bf16.mxu0 0
    %1627 = vmatpush1.bf16.msra.mxu0 0
    %1628 = vmatprep.subr.bf16.mxu0 0
    %1629 = vmatpush1.bf16.msra.mxu0 0
    %1630 = vmatprep.subr.bf16.mxu0 0
    %1631 = vmatpush1.bf16.msra.mxu0 0
    %1632 = vmatprep.subr.bf16.mxu0 0
    %1633 = vmatpush1.bf16.msra.mxu0 0
    %1634 = vmatprep.subr.bf16.mxu0 0
    %1635 = vmatpush1.bf16.msra.mxu0 0
    %1636 = vmatprep.subr.bf16.mxu0 0
    %1637 = vmatpush1.bf16.msra.mxu0 0
    %1638 = vmatprep.subr.bf16.mxu0 0
    %1639 = vmatpush1.bf16.msra.mxu0 0
    %1640 = vmatprep.subr.bf16.mxu0 0
    %1641 = vmatpush1.bf16.msra.mxu0 0
    %1642 = vmatprep.subr.bf16.mxu0 0
    %1643 = vmatpush1.bf16.msra.mxu0 0
    %1644 = vmatprep.subr.bf16.mxu0 0
    %1645 = vmatpush1.bf16.msra.mxu0 0
    %1646 = vmatprep.mubr.bf16.mxu0 0
    %1647 = vmatmul.mubr.bf16.gmra.mrb[0].mxu0 %v1612
    %v1648 = vpop.f32.mrb[0].mxu0
    %v1649 = vadd.f32 0.0, %v1648
    %v1650 = vpop.f32.mrb[0].mxu0
    %v1651 = vpop.f32.mrb[0].mxu0
    %v1652 = vadd.f32 0.0, %v1651
    %v1653 = vpop.f32.mrb[0].mxu0
    %1654 = vdwg.mxu0
    %v1655 = vadd.f32 %v1532, %v1649
    %v1656 = vadd.f32 %v1535, %v1652
    %v1657 = vmul.f32 %v1162, %v302
    %v1658 = vmul.f32 %v1165, %v302
    %v1659 = vpack.c.bf16 %v1658, %v1657
    %v1661 = vsel %vm326, %v1659, 0
    %1663 = vmatprep.subr.bf16.mxu0 0
    %1664 = vmatpush1.bf16.xpose.msra.mxu0 %v1308
    %1665 = vmatprep.subr.bf16.mxu0 0
    %1666 = vmatpush1.bf16.xpose.msra.mxu0 0
    %1667 = vmatprep.subr.bf16.mxu0 0
    %1668 = vmatpush1.bf16.xpose.msra.mxu0 0
    %1669 = vmatprep.subr.bf16.mxu0 0
    %1670 = vmatpush1.bf16.xpose.msra.mxu0 0
    %1671 = vmatprep.subr.bf16.mxu0 0
    %1672 = vmatpush1.bf16.xpose.msra.mxu0 0
    %1673 = vmatprep.subr.bf16.mxu0 0
    %1674 = vmatpush1.bf16.xpose.msra.mxu0 0
    %1675 = vmatprep.subr.bf16.mxu0 0
    %1676 = vmatpush1.bf16.xpose.msra.mxu0 0
    %1677 = vmatprep.subr.bf16.mxu0 0
    %1678 = vmatpush1.bf16.xpose.msra.mxu0 0
    %1679 = vmatprep.subr.bf16.mxu0 0
    %1680 = vmatpush1.bf16.xpose.msra.mxu0 0
    %1681 = vmatprep.subr.bf16.mxu0 0
    %1682 = vmatpush1.bf16.xpose.msra.mxu0 0
    %1683 = vmatprep.subr.bf16.mxu0 0
    %1684 = vmatpush1.bf16.xpose.msra.mxu0 0
    %1685 = vmatprep.subr.bf16.mxu0 0
    %1686 = vmatpush1.bf16.xpose.msra.mxu0 0
    %1687 = vmatprep.subr.bf16.mxu0 0
    %1688 = vmatpush1.bf16.xpose.msra.mxu0 0
    %1689 = vmatprep.subr.bf16.mxu0 0
    %1690 = vmatpush1.bf16.xpose.msra.mxu0 0
    %1691 = vmatprep.subr.bf16.mxu0 0
    %1692 = vmatpush1.bf16.xpose.msra.mxu0 0
    %1693 = vmatprep.subr.bf16.mxu0 0
    %1694 = vmatpush1.bf16.xpose.msra.mxu0 0
    %1695 = vmatprep.mubr.bf16.mxu0 0
    %1696 = vmatmul.mubr.bf16.gmra.mrb[0].mxu0 %v1661
    %v1697 = vpop.f32.mrb[0].mxu0
    %v1698 = vadd.f32 %v281, %v1697
    %v1699 = vpop.f32.mrb[0].mxu0
    %v1700 = vpop.f32.mrb[0].mxu0
    %v1701 = vadd.f32 %v282, %v1700
    %v1702 = vpop.f32.mrb[0].mxu0
    %1703 = vdwg.mxu0
    %v1704 = vsel %vm554, %v1698, -inf
    %1705 = vmax.xlane.f32.xlu0 %v1704
    %v1706 = vpop.xlane.xlu0 %1705
    %v1707 = vsel %vm554, %v1701, -inf
    %1708 = vmax.xlane.f32.xlu0 %v1707
    %v1709 = vpop.xlane.xlu0 %1708
    %v1710 = vsub.f32 %v1698, %v1706
    %v1711 = vsub.f32 %v1701, %v1709
    %v1712 = vmul.f32 %v1710, 1.442695
    %v1713 = vpow.pop %v1712
    %v1714 = vmul.f32 %v1711, 1.442695
    %v1715 = vpow.pop %v1714
    %v1716 = vsel %vm554, %v1713, 0.0
    %1717 = vadd.xlane.f32.xlu0 %v1716
    %v1718 = vpop.xlane.xlu0 %1717
    %v1719 = vsel %vm554, %v1715, 0.0
    %1720 = vadd.xlane.f32.xlu0 %v1719
    %v1721 = vpop.xlane.xlu0 %1720
    %v1722 = vrcp.pop %v1718
    %v1723 = vrcp.pop %v1721
    %v1724 = vmul.f32 %v1713, %v1722
    %v1725 = vmul.f32 %v1715, %v1723
    %v1726 = vpack.c.bf16 %v1725, %v1724
    %v1727 = vmul.f32 %v1294, %v302
    %v1728 = vmul.f32 %v1297, %v302
    %v1729 = vpack.c.bf16 %v1728, %v1727
    %v1731 = vsel %vm554, %v1726, 0
    %1733 = vmatprep.subr.bf16.mxu0 0
    %1734 = vmatpush1.bf16.msra.mxu0 %v1729
    %1735 = vmatprep.subr.bf16.mxu0 0
    %1736 = vmatpush1.bf16.msra.mxu0 0
    %1737 = vmatprep.subr.bf16.mxu0 0
    %1738 = vmatpush1.bf16.msra.mxu0 0
    %1739 = vmatprep.subr.bf16.mxu0 0
    %1740 = vmatpush1.bf16.msra.mxu0 0
    %1741 = vmatprep.subr.bf16.mxu0 0
    %1742 = vmatpush1.bf16.msra.mxu0 0
    %1743 = vmatprep.subr.bf16.mxu0 0
    %1744 = vmatpush1.bf16.msra.mxu0 0
    %1745 = vmatprep.subr.bf16.mxu0 0
    %1746 = vmatpush1.bf16.msra.mxu0 0
    %1747 = vmatprep.subr.bf16.mxu0 0
    %1748 = vmatpush1.bf16.msra.mxu0 0
    %1749 = vmatprep.subr.bf16.mxu0 0
    %1750 = vmatpush1.bf16.msra.mxu0 0
    %1751 = vmatprep.subr.bf16.mxu0 0
    %1752 = vmatpush1.bf16.msra.mxu0 0
    %1753 = vmatprep.subr.bf16.mxu0 0
    %1754 = vmatpush1.bf16.msra.mxu0 0
    %1755 = vmatprep.subr.bf16.mxu0 0
    %1756 = vmatpush1.bf16.msra.mxu0 0
    %1757 = vmatprep.subr.bf16.mxu0 0
    %1758 = vmatpush1.bf16.msra.mxu0 0
    %1759 = vmatprep.subr.bf16.mxu0 0
    %1760 = vmatpush1.bf16.msra.mxu0 0
    %1761 = vmatprep.subr.bf16.mxu0 0
    %1762 = vmatpush1.bf16.msra.mxu0 0
    %1763 = vmatprep.subr.bf16.mxu0 0
    %1764 = vmatpush1.bf16.msra.mxu0 0
    %1765 = vmatprep.mubr.bf16.mxu0 0
    %1766 = vmatmul.mubr.bf16.gmra.mrb[0].mxu0 %v1731
    %v1767 = vpop.f32.mrb[0].mxu0
    %v1768 = vadd.f32 0.0, %v1767
    %v1769 = vpop.f32.mrb[0].mxu0
    %v1770 = vpop.f32.mrb[0].mxu0
    %v1771 = vadd.f32 0.0, %v1770
    %v1772 = vpop.f32.mrb[0].mxu0
    %1773 = vdwg.mxu0
    %v1774 = vadd.f32 %v1655, %v1768
    %v1775 = vadd.f32 %v1656, %v1771
    %v1776 = vpack.c.bf16 %v1775, %v1774
    %s1777 = scalar_lea.vmem %s4, 112
    %v1778 = vld [vmem:[%s1777] sm:$0xf]
    %v1779 = vld [vmem:[%s1777 + $0x4] sm:$0xf]
    %v1780 = vld [vmem:[%s1777 + $0x8] sm:$0xf]
    %v1781 = vld [vmem:[%s1777 + $0xc] sm:$0xf]
    %s1782 = scalar_lea.vmem [#allocation7], 7
    %v1783 = vld [vmem:[%s1782] sm:$0x1]
    %v1785 = vlaneseq
    %v1786 = vshrl.u32 %v1785, 7
    %v1787 = vsub.s32 0, %v1786
    %v1788 = vrot.slane %v1783, %v1787
    %v1794 = vunpack.c.l.b16 %v1778
    %v1795 = vunpack.c.l.b16 %v1779
    %v1796 = vunpack.c.l.b16 %v1780
    %v1797 = vunpack.c.l.b16 %v1781
    %v1798 = vpack.c.b16 %v1795, %v1794
    %v1799 = vpack.c.b16 %v1797, %v1796
    %v1803 = vsel %vm326, %v1776, 0
    %1805 = vmatprep.subr.bf16.mxu0 0
    %1806 = vmatpush1.bf16.msra.mxu0 %v1798
    %1807 = vmatprep.subr.bf16.mxu0 0
    %1808 = vmatpush1.bf16.msra.mxu0 %v1799
    %1809 = vmatprep.subr.bf16.mxu0 0
    %1810 = vmatpush1.bf16.msra.mxu0 0
    %1811 = vmatprep.subr.bf16.mxu0 0
    %1812 = vmatpush1.bf16.msra.mxu0 0
    %1813 = vmatprep.subr.bf16.mxu0 0
    %1814 = vmatpush1.bf16.msra.mxu0 0
    %1815 = vmatprep.subr.bf16.mxu0 0
    %1816 = vmatpush1.bf16.msra.mxu0 0
    %1817 = vmatprep.subr.bf16.mxu0 0
    %1818 = vmatpush1.bf16.msra.mxu0 0
    %1819 = vmatprep.subr.bf16.mxu0 0
    %1820 = vmatpush1.bf16.msra.mxu0 0
    %1821 = vmatprep.subr.bf16.mxu0 0
    %1822 = vmatpush1.bf16.msra.mxu0 0
    %1823 = vmatprep.subr.bf16.mxu0 0
    %1824 = vmatpush1.bf16.msra.mxu0 0
    %1825 = vmatprep.subr.bf16.mxu0 0
    %1826 = vmatpush1.bf16.msra.mxu0 0
    %1827 = vmatprep.subr.bf16.mxu0 0
    %1828 = vmatpush1.bf16.msra.mxu0 0
    %1829 = vmatprep.subr.bf16.mxu0 0
    %1830 = vmatpush1.bf16.msra.mxu0 0
    %1831 = vmatprep.subr.bf16.mxu0 0
    %1832 = vmatpush1.bf16.msra.mxu0 0
    %1833 = vmatprep.subr.bf16.mxu0 0
    %1834 = vmatpush1.bf16.msra.mxu0 0
    %1835 = vmatprep.subr.bf16.mxu0 0
    %1836 = vmatpush1.bf16.msra.mxu0 0
    %1837 = vmatprep.mubr.bf16.mxu0 0
    %1838 = vmatmul.mubr.bf16.gmra.mrb[0].mxu0 %v1803
    %v1839 = vpop.f32.mrb[0].mxu0
    %v1840 = vadd.f32 %v1788, %v1839
    %v1841 = vpop.f32.mrb[0].mxu0
    %v1842 = vpop.f32.mrb[0].mxu0
    %v1843 = vadd.f32 %v1788, %v1842
    %v1844 = vpop.f32.mrb[0].mxu0
    %1845 = vdwg.mxu0
    %v1846 = vadd.f32 %v1096, %v1840
    %v1847 = vadd.f32 %v1097, %v1843
    %s1848 = scalar_lea.vmem [#allocation8], 2
    %v1849 = vld [vmem:[%s1848] sm:$0x1]
    %s1850 = scalar_lea.vmem [#allocation8], 3
    %v1851 = vld [vmem:[%s1850] sm:$0x1]
    %v1852 = vsel %vm326, %v1846, 0.0
    %1853 = vadd.xlane.f32.xlu0 %v1852
    %v1854 = vpop.xlane.xlu0 %1853
    %v1855 = vsel %vm326, %v1847, 0.0
    %1856 = vadd.xlane.f32.xlu0 %v1855
    %v1857 = vpop.xlane.xlu0 %1856
    %v1858 = vmul.f32 %v1854, %v1061
    %v1859 = vmul.f32 %v1857, %v1061
    %v1860 = vsub.f32 %v1846, %v1858
    %v1861 = vsub.f32 %v1847, %v1859
    %v1862 = vmul.f32 %v1860, %v1860
    %v1863 = vmul.f32 %v1861, %v1861
    %v1864 = vsel %vm326, %v1862, 0.0
    %1865 = vadd.xlane.f32.xlu0 %v1864
    %v1866 = vpop.xlane.xlu0 %1865
    %v1867 = vsel %vm326, %v1863, 0.0
    %1868 = vadd.xlane.f32.xlu0 %v1867
    %v1869 = vpop.xlane.xlu0 %1868
    %v1870 = vmul.f32 %v1866, %v1061
    %v1871 = vmul.f32 %v1869, %v1061
    %v1872 = vadd.f32 %v1870, 1e-05
    %v1873 = vadd.f32 %v1871, 1e-05
    %v1874 = vrsqrt.pop %v1872
    %v1875 = vrsqrt.pop %v1873
    %v1876 = vmul.f32 %v1860, %v1874
    %v1877 = vmul.f32 %v1861, %v1875
    %v1879 = vlaneseq
    %v1880 = vshrl.u32 %v1879, 7
    %v1881 = vsub.s32 0, %v1880
    %v1882 = vrot.slane %v1849, %v1881
    %v1884 = vmul.f32 %v1876, %v1882
    %v1885 = vmul.f32 %v1877, %v1882
    %v1887 = vlaneseq
    %v1888 = vshrl.u32 %v1887, 7
    %v1889 = vsub.s32 0, %v1888
    %v1890 = vrot.slane %v1851, %v1889
    %v1892 = vadd.f32 %v1884, %v1890
    %v1893 = vadd.f32 %v1885, %v1890
    %v1894 = vpack.c.bf16 %v1893, %v1892
    %v1895 = vld [vmem:[#allocation10] sm:$0xf]
    %v1896 = vld [vmem:[#allocation10 + $0x4] sm:$0xf]
    %v1897 = vld [vmem:[#allocation10 + $0x8] sm:$0xf]
    %v1898 = vld [vmem:[#allocation10 + $0xc] sm:$0xf]
    %v1899 = vld [vmem:[#allocation11] sm:$0x1]
    %v1901 = vlaneseq
    %v1902 = vshrl.u32 %v1901, 7
    %v1903 = vsub.s32 0, %v1902
    %v1904 = vrot.slane %v1899, %v1903
    %v1910 = vunpack.c.l.b16 %v1895
    %v1911 = vunpack.c.l.b16 %v1896
    %v1912 = vunpack.c.l.b16 %v1897
    %v1913 = vunpack.c.l.b16 %v1898
    %v1914 = vpack.c.b16 %v1911, %v1910
    %v1915 = vpack.c.b16 %v1913, %v1912
    %v1919 = vsel %vm326, %v1894, 0
    %1921 = vmatprep.subr.bf16.mxu0 0
    %1922 = vmatpush1.bf16.msra.mxu0 %v1914
    %1923 = vmatprep.subr.bf16.mxu0 0
    %1924 = vmatpush1.bf16.msra.mxu0 %v1915
    %1925 = vmatprep.subr.bf16.mxu0 0
    %1926 = vmatpush1.bf16.msra.mxu0 0
    %1927 = vmatprep.subr.bf16.mxu0 0
    %1928 = vmatpush1.bf16.msra.mxu0 0
    %1929 = vmatprep.subr.bf16.mxu0 0
    %1930 = vmatpush1.bf16.msra.mxu0 0
    %1931 = vmatprep.subr.bf16.mxu0 0
    %1932 = vmatpush1.bf16.msra.mxu0 0
    %1933 = vmatprep.subr.bf16.mxu0 0
    %1934 = vmatpush1.bf16.msra.mxu0 0
    %1935 = vmatprep.subr.bf16.mxu0 0
    %1936 = vmatpush1.bf16.msra.mxu0 0
    %1937 = vmatprep.subr.bf16.mxu0 0
    %1938 = vmatpush1.bf16.msra.mxu0 0
    %1939 = vmatprep.subr.bf16.mxu0 0
    %1940 = vmatpush1.bf16.msra.mxu0 0
    %1941 = vmatprep.subr.bf16.mxu0 0
    %1942 = vmatpush1.bf16.msra.mxu0 0
    %1943 = vmatprep.subr.bf16.mxu0 0
    %1944 = vmatpush1.bf16.msra.mxu0 0
    %1945 = vmatprep.subr.bf16.mxu0 0
    %1946 = vmatpush1.bf16.msra.mxu0 0
    %1947 = vmatprep.subr.bf16.mxu0 0
    %1948 = vmatpush1.bf16.msra.mxu0 0
    %1949 = vmatprep.subr.bf16.mxu0 0
    %1950 = vmatpush1.bf16.msra.mxu0 0
    %1951 = vmatprep.subr.bf16.mxu0 0
    %1952 = vmatpush1.bf16.msra.mxu0 0
    %1953 = vmatprep.mubr.bf16.mxu0 0
    %1954 = vmatmul.mubr.bf16.gmra.mrb[0].mxu0 %v1919
    %v1955 = vpop.f32.mrb[0].mxu0
    %v1956 = vadd.f32 %v1904, %v1955
    %v1957 = vpop.f32.mrb[0].mxu0
    %v1958 = vpop.f32.mrb[0].mxu0
    %v1959 = vadd.f32 %v1904, %v1958
    %v1960 = vpop.f32.mrb[0].mxu0
    %1961 = vdwg.mxu0
    %v1962 = vmax.f32 %v1956, 0.0
    %v1963 = vmax.f32 %v1959, 0.0
    %v1964 = vpack.c.bf16 %v1963, %v1962
    %v1965 = vld [vmem:[%s9] sm:$0xf]
    %v1966 = vld [vmem:[%s9 + $0x4] sm:$0xf]
    %v1967 = vld [vmem:[%s9 + $0x8] sm:$0xf]
    %v1968 = vld [vmem:[%s9 + $0xc] sm:$0xf]
    %v1969 = vld [vmem:[%s9 + $0x10] sm:$0xf]
    %v1970 = vld [vmem:[%s9 + $0x14] sm:$0xf]
    %v1971 = vld [vmem:[%s9 + $0x18] sm:$0xf]
    %v1972 = vld [vmem:[%s9 + $0x1c] sm:$0xf]
    %v1973 = vld [vmem:[%s9 + $0x20] sm:$0xf]
    %v1974 = vld [vmem:[%s9 + $0x24] sm:$0xf]
    %v1975 = vld [vmem:[%s9 + $0x28] sm:$0xf]
    %v1976 = vld [vmem:[%s9 + $0x2c] sm:$0xf]
    %v1977 = vld [vmem:[%s9 + $0x30] sm:$0xf]
    %v1978 = vld [vmem:[%s9 + $0x34] sm:$0xf]
    %v1979 = vld [vmem:[%s9 + $0x38] sm:$0xf]
    %v1980 = vld [vmem:[%s9 + $0x3c] sm:$0xf]
    %v1981 = vld [vmem:[%s10] sm:$0x1]
    %v1983 = vlaneseq
    %v1984 = vshrl.u32 %v1983, 7
    %v1985 = vsub.s32 0, %v1984
    %v1986 = vrot.slane %v1981, %v1985
    %v2004 = vunpack.c.l.b16 %v1965
    %v2005 = vunpack.c.l.b16 %v1966
    %v2006 = vunpack.c.l.b16 %v1967
    %v2007 = vunpack.c.l.b16 %v1968
    %v2008 = vunpack.c.l.b16 %v1969
    %v2009 = vunpack.c.l.b16 %v1970
    %v2010 = vunpack.c.l.b16 %v1971
    %v2011 = vunpack.c.l.b16 %v1972
    %v2012 = vunpack.c.l.b16 %v1973
    %v2013 = vunpack.c.l.b16 %v1974
    %v2014 = vunpack.c.l.b16 %v1975
    %v2015 = vunpack.c.l.b16 %v1976
    %v2016 = vunpack.c.l.b16 %v1977
    %v2017 = vunpack.c.l.b16 %v1978
    %v2018 = vunpack.c.l.b16 %v1979
    %v2019 = vunpack.c.l.b16 %v1980
    %v2020 = vpack.c.b16 %v2005, %v2004
    %v2021 = vpack.c.b16 %v2007, %v2006
    %v2022 = vpack.c.b16 %v2009, %v2008
    %v2023 = vpack.c.b16 %v2011, %v2010
    %v2024 = vpack.c.b16 %v2013, %v2012
    %v2025 = vpack.c.b16 %v2015, %v2014
    %v2026 = vpack.c.b16 %v2017, %v2016
    %v2027 = vpack.c.b16 %v2019, %v2018
    %2036 = vmatprep.subr.bf16.mxu0 0
    %2037 = vmatpush1.bf16.msra.mxu0 %v2020
    %2038 = vmatprep.subr.bf16.mxu0 0
    %2039 = vmatpush1.bf16.msra.mxu0 %v2021
    %2040 = vmatprep.subr.bf16.mxu0 0
    %2041 = vmatpush1.bf16.msra.mxu0 %v2022
    %2042 = vmatprep.subr.bf16.mxu0 0
    %2043 = vmatpush1.bf16.msra.mxu0 %v2023
    %2044 = vmatprep.subr.bf16.mxu0 0
    %2045 = vmatpush1.bf16.msra.mxu0 %v2024
    %2046 = vmatprep.subr.bf16.mxu0 0
    %2047 = vmatpush1.bf16.msra.mxu0 %v2025
    %2048 = vmatprep.subr.bf16.mxu0 0
    %2049 = vmatpush1.bf16.msra.mxu0 %v2026
    %2050 = vmatprep.subr.bf16.mxu0 0
    %2051 = vmatpush1.bf16.msra.mxu0 %v2027
    %2052 = vmatprep.subr.bf16.mxu0 0
    %2053 = vmatpush1.bf16.msra.mxu0 0
    %2054 = vmatprep.subr.bf16.mxu0 0
    %2055 = vmatpush1.bf16.msra.mxu0 0
    %2056 = vmatprep.subr.bf16.mxu0 0
    %2057 = vmatpush1.bf16.msra.mxu0 0
    %2058 = vmatprep.subr.bf16.mxu0 0
    %2059 = vmatpush1.bf16.msra.mxu0 0
    %2060 = vmatprep.subr.bf16.mxu0 0
    %2061 = vmatpush1.bf16.msra.mxu0 0
    %2062 = vmatprep.subr.bf16.mxu0 0
    %2063 = vmatpush1.bf16.msra.mxu0 0
    %2064 = vmatprep.subr.bf16.mxu0 0
    %2065 = vmatpush1.bf16.msra.mxu0 0
    %2066 = vmatprep.subr.bf16.mxu0 0
    %2067 = vmatpush1.bf16.msra.mxu0 0
    %2068 = vmatprep.mubr.bf16.mxu0 0
    %2069 = vmatmul.mubr.bf16.gmra.mrb[0].mxu0 %v1964
    %v2070 = vpop.f32.mrb[0].mxu0
    %v2071 = vadd.f32 %v1986, %v2070
    %v2072 = vpop.f32.mrb[0].mxu0
    %v2073 = vpop.f32.mrb[0].mxu0
    %v2074 = vadd.f32 %v1986, %v2073
    %v2075 = vpop.f32.mrb[0].mxu0
    %2076 = vdwg.mxu0
    %v2077 = vadd.f32 %v1892, %v2071
    %v2078 = vadd.f32 %v1893, %v2074
    %s2079 = scalar_lea.vmem [#allocation8], 4
    %v2080 = vld [vmem:[%s2079] sm:$0x1]
    %s2081 = scalar_lea.vmem [#allocation8], 5
    %v2082 = vld [vmem:[%s2081] sm:$0x1]
    %v2083 = vsel %vm326, %v2077, 0.0
    %2084 = vadd.xlane.f32.xlu0 %v2083
    %v2085 = vpop.xlane.xlu0 %2084
    %v2086 = vsel %vm326, %v2078, 0.0
    %2087 = vadd.xlane.f32.xlu0 %v2086
    %v2088 = vpop.xlane.xlu0 %2087
    %v2089 = vmul.f32 %v2085, %v1061
    %v2090 = vmul.f32 %v2088, %v1061
    %v2091 = vsub.f32 %v2077, %v2089
    %v2092 = vsub.f32 %v2078, %v2090
    %v2093 = vmul.f32 %v2091, %v2091
    %v2094 = vmul.f32 %v2092, %v2092
    %v2095 = vsel %vm326, %v2093, 0.0
    %2096 = vadd.xlane.f32.xlu0 %v2095
    %v2097 = vpop.xlane.xlu0 %2096
    %v2098 = vsel %vm326, %v2094, 0.0
    %2099 = vadd.xlane.f32.xlu0 %v2098
    %v2100 = vpop.xlane.xlu0 %2099
    %v2101 = vmul.f32 %v2097, %v1061
    %v2102 = vmul.f32 %v2100, %v1061
    %v2103 = vadd.f32 %v2101, 1e-05
    %v2104 = vadd.f32 %v2102, 1e-05
    %v2105 = vrsqrt.pop %v2103
    %v2106 = vrsqrt.pop %v2104
    %v2107 = vmul.f32 %v2091, %v2105
    %v2108 = vmul.f32 %v2092, %v2106
    %v2110 = vlaneseq
    %v2111 = vshrl.u32 %v2110, 7
    %v2112 = vsub.s32 0, %v2111
    %v2113 = vrot.slane %v2080, %v2112
    %v2115 = vmul.f32 %v2107, %v2113
    %v2116 = vmul.f32 %v2108, %v2113
    %v2118 = vlaneseq
    %v2119 = vshrl.u32 %v2118, 7
    %v2120 = vsub.s32 0, %v2119
    %v2121 = vrot.slane %v2082, %v2120
    %v2123 = vadd.f32 %v2115, %v2121
    %v2124 = vadd.f32 %v2116, %v2121
    %v2125 = vpack.c.bf16 %v2124, %v2123
    %s2126 = scalar_lea.vmem %s4, 128
    %v2127 = vld [vmem:[%s2126] sm:$0xf]
    %v2128 = vld [vmem:[%s2126 + $0x4] sm:$0xf]
    %v2129 = vld [vmem:[%s2126 + $0x8] sm:$0xf]
    %v2130 = vld [vmem:[%s2126 + $0xc] sm:$0xf]
    %s2131 = scalar_lea.vmem [#allocation7], 8
    %v2132 = vld [vmem:[%s2131] sm:$0x1]
    %v2134 = vlaneseq
    %v2135 = vshrl.u32 %v2134, 7
    %v2136 = vsub.s32 0, %v2135
    %v2137 = vrot.slane %v2132, %v2136
    %v2143 = vunpack.c.l.b16 %v2127
    %v2144 = vunpack.c.l.b16 %v2128
    %v2145 = vunpack.c.l.b16 %v2129
    %v2146 = vunpack.c.l.b16 %v2130
    %v2147 = vpack.c.b16 %v2144, %v2143
    %v2148 = vpack.c.b16 %v2146, %v2145
    %v2152 = vsel %vm326, %v2125, 0
    %2154 = vmatprep.subr.bf16.mxu0 0
    %2155 = vmatpush1.bf16.msra.mxu0 %v2147
    %2156 = vmatprep.subr.bf16.mxu0 0
    %2157 = vmatpush1.bf16.msra.mxu0 %v2148
    %2158 = vmatprep.subr.bf16.mxu0 0
    %2159 = vmatpush1.bf16.msra.mxu0 0
    %2160 = vmatprep.subr.bf16.mxu0 0
    %2161 = vmatpush1.bf16.msra.mxu0 0
    %2162 = vmatprep.subr.bf16.mxu0 0
    %2163 = vmatpush1.bf16.msra.mxu0 0
    %2164 = vmatprep.subr.bf16.mxu0 0
    %2165 = vmatpush1.bf16.msra.mxu0 0
    %2166 = vmatprep.subr.bf16.mxu0 0
    %2167 = vmatpush1.bf16.msra.mxu0 0
    %2168 = vmatprep.subr.bf16.mxu0 0
    %2169 = vmatpush1.bf16.msra.mxu0 0
    %2170 = vmatprep.subr.bf16.mxu0 0
    %2171 = vmatpush1.bf16.msra.mxu0 0
    %2172 = vmatprep.subr.bf16.mxu0 0
    %2173 = vmatpush1.bf16.msra.mxu0 0
    %2174 = vmatprep.subr.bf16.mxu0 0
    %2175 = vmatpush1.bf16.msra.mxu0 0
    %2176 = vmatprep.subr.bf16.mxu0 0
    %2177 = vmatpush1.bf16.msra.mxu0 0
    %2178 = vmatprep.subr.bf16.mxu0 0
    %2179 = vmatpush1.bf16.msra.mxu0 0
    %2180 = vmatprep.subr.bf16.mxu0 0
    %2181 = vmatpush1.bf16.msra.mxu0 0
    %2182 = vmatprep.subr.bf16.mxu0 0
    %2183 = vmatpush1.bf16.msra.mxu0 0
    %2184 = vmatprep.subr.bf16.mxu0 0
    %2185 = vmatpush1.bf16.msra.mxu0 0
    %2186 = vmatprep.mubr.bf16.mxu0 0
    %2187 = vmatmul.mubr.bf16.gmra.mrb[0].mxu0 %v2152
    %v2188 = vpop.f32.mrb[0].mxu0
    %v2189 = vadd.f32 %v2137, %v2188
    %v2190 = vpop.f32.mrb[0].mxu0
    %v2191 = vpop.f32.mrb[0].mxu0
    %v2192 = vadd.f32 %v2137, %v2191
    %v2193 = vpop.f32.mrb[0].mxu0
    %2194 = vdwg.mxu0
    %s2195 = scalar_lea.vmem %s4, 144
    %v2196 = vld [vmem:[%s2195] sm:$0xf]
    %v2197 = vld [vmem:[%s2195 + $0x4] sm:$0xf]
    %v2198 = vld [vmem:[%s2195 + $0x8] sm:$0xf]
    %v2199 = vld [vmem:[%s2195 + $0xc] sm:$0xf]
    %s2200 = scalar_lea.vmem [#allocation7], 9
    %v2201 = vld [vmem:[%s2200] sm:$0x1]
    %v2203 = vlaneseq
    %v2204 = vshrl.u32 %v2203, 7
    %v2205 = vsub.s32 0, %v2204
    %v2206 = vrot.slane %v2201, %v2205
    %v2212 = vunpack.c.l.b16 %v2196
    %v2213 = vunpack.c.l.b16 %v2197
    %v2214 = vunpack.c.l.b16 %v2198
    %v2215 = vunpack.c.l.b16 %v2199
    %v2216 = vpack.c.b16 %v2213, %v2212
    %v2217 = vpack.c.b16 %v2215, %v2214
    %2220 = vmatprep.subr.bf16.mxu0 0
    %2221 = vmatpush1.bf16.msra.mxu0 %v2216
    %2222 = vmatprep.subr.bf16.mxu0 0
    %2223 = vmatpush1.bf16.msra.mxu0 %v2217
    %2224 = vmatprep.subr.bf16.mxu0 0
    %2225 = vmatpush1.bf16.msra.mxu0 0
    %2226 = vmatprep.subr.bf16.mxu0 0
    %2227 = vmatpush1.bf16.msra.mxu0 0
    %2228 = vmatprep.subr.bf16.mxu0 0
    %2229 = vmatpush1.bf16.msra.mxu0 0
    %2230 = vmatprep.subr.bf16.mxu0 0
    %2231 = vmatpush1.bf16.msra.mxu0 0
    %2232 = vmatprep.subr.bf16.mxu0 0
    %2233 = vmatpush1.bf16.msra.mxu0 0
    %2234 = vmatprep.subr.bf16.mxu0 0
    %2235 = vmatpush1.bf16.msra.mxu0 0
    %2236 = vmatprep.subr.bf16.mxu0 0
    %2237 = vmatpush1.bf16.msra.mxu0 0
    %2238 = vmatprep.subr.bf16.mxu0 0
    %2239 = vmatpush1.bf16.msra.mxu0 0
    %2240 = vmatprep.subr.bf16.mxu0 0
    %2241 = vmatpush1.bf16.msra.mxu0 0
    %2242 = vmatprep.subr.bf16.mxu0 0
    %2243 = vmatpush1.bf16.msra.mxu0 0
    %2244 = vmatprep.subr.bf16.mxu0 0
    %2245 = vmatpush1.bf16.msra.mxu0 0
    %2246 = vmatprep.subr.bf16.mxu0 0
    %2247 = vmatpush1.bf16.msra.mxu0 0
    %2248 = vmatprep.subr.bf16.mxu0 0
    %2249 = vmatpush1.bf16.msra.mxu0 0
    %2250 = vmatprep.subr.bf16.mxu0 0
    %2251 = vmatpush1.bf16.msra.mxu0 0
    %2252 = vmatprep.mubr.bf16.mxu0 0
    %2253 = vmatmul.mubr.bf16.gmra.mrb[0].mxu0 %v2152
    %v2254 = vpop.f32.mrb[0].mxu0
    %v2255 = vadd.f32 %v2206, %v2254
    %v2256 = vpop.f32.mrb[0].mxu0
    %v2257 = vpop.f32.mrb[0].mxu0
    %v2258 = vadd.f32 %v2206, %v2257
    %v2259 = vpop.f32.mrb[0].mxu0
    %2260 = vdwg.mxu0
    %s2261 = scalar_lea.vmem %s4, 160
    %v2262 = vld [vmem:[%s2261] sm:$0xf]
    %v2263 = vld [vmem:[%s2261 + $0x4] sm:$0xf]
    %v2264 = vld [vmem:[%s2261 + $0x8] sm:$0xf]
    %v2265 = vld [vmem:[%s2261 + $0xc] sm:$0xf]
    %s2266 = scalar_lea.vmem [#allocation7], 10
    %v2267 = vld [vmem:[%s2266] sm:$0x1]
    %v2269 = vlaneseq
    %v2270 = vshrl.u32 %v2269, 7
    %v2271 = vsub.s32 0, %v2270
    %v2272 = vrot.slane %v2267, %v2271
    %v2278 = vunpack.c.l.b16 %v2262
    %v2279 = vunpack.c.l.b16 %v2263
    %v2280 = vunpack.c.l.b16 %v2264
    %v2281 = vunpack.c.l.b16 %v2265
    %v2282 = vpack.c.b16 %v2279, %v2278
    %v2283 = vpack.c.b16 %v2281, %v2280
    %2286 = vmatprep.subr.bf16.mxu0 0
    %2287 = vmatpush1.bf16.msra.mxu0 %v2282
    %2288 = vmatprep.subr.bf16.mxu0 0
    %2289 = vmatpush1.bf16.msra.mxu0 %v2283
    %2290 = vmatprep.subr.bf16.mxu0 0
    %2291 = vmatpush1.bf16.msra.mxu0 0
    %2292 = vmatprep.subr.bf16.mxu0 0
    %2293 = vmatpush1.bf16.msra.mxu0 0
    %2294 = vmatprep.subr.bf16.mxu0 0
    %2295 = vmatpush1.bf16.msra.mxu0 0
    %2296 = vmatprep.subr.bf16.mxu0 0
    %2297 = vmatpush1.bf16.msra.mxu0 0
    %2298 = vmatprep.subr.bf16.mxu0 0
    %2299 = vmatpush1.bf16.msra.mxu0 0
    %2300 = vmatprep.subr.bf16.mxu0 0
    %2301 = vmatpush1.bf16.msra.mxu0 0
    %2302 = vmatprep.subr.bf16.mxu0 0
    %2303 = vmatpush1.bf16.msra.mxu0 0
    %2304 = vmatprep.subr.bf16.mxu0 0
    %2305 = vmatpush1.bf16.msra.mxu0 0
    %2306 = vmatprep.subr.bf16.mxu0 0
    %2307 = vmatpush1.bf16.msra.mxu0 0
    %2308 = vmatprep.subr.bf16.mxu0 0
    %2309 = vmatpush1.bf16.msra.mxu0 0
    %2310 = vmatprep.subr.bf16.mxu0 0
    %2311 = vmatpush1.bf16.msra.mxu0 0
    %2312 = vmatprep.subr.bf16.mxu0 0
    %2313 = vmatpush1.bf16.msra.mxu0 0
    %2314 = vmatprep.subr.bf16.mxu0 0
    %2315 = vmatpush1.bf16.msra.mxu0 0
    %2316 = vmatprep.subr.bf16.mxu0 0
    %2317 = vmatpush1.bf16.msra.mxu0 0
    %2318 = vmatprep.mubr.bf16.mxu0 0
    %2319 = vmatmul.mubr.bf16.gmra.mrb[0].mxu0 %v2152
    %v2320 = vpop.f32.mrb[0].mxu0
    %v2321 = vadd.f32 %v2272, %v2320
    %v2322 = vpop.f32.mrb[0].mxu0
    %v2323 = vpop.f32.mrb[0].mxu0
    %v2324 = vadd.f32 %v2272, %v2323
    %v2325 = vpop.f32.mrb[0].mxu0
    %2326 = vdwg.mxu0
    %v2327 = vpack.c.bf16 %v2258, %v2255
    %v2328 = vmul.f32 %v2189, %v287
    %v2329 = vmul.f32 %v2192, %v287
    %v2330 = vpack.c.bf16 %v2329, %v2328
    %v2332 = vsel %vm326, %v2330, 0
    %v2335 = vsel %vm326, %v2327, 0
    %2337 = vmatprep.subr.bf16.mxu0 0
    %2338 = vmatpush1.bf16.xpose.msra.mxu0 %v2335
    %2339 = vmatprep.subr.bf16.mxu0 0
    %2340 = vmatpush1.bf16.xpose.msra.mxu0 0
    %2341 = vmatprep.subr.bf16.mxu0 0
    %2342 = vmatpush1.bf16.xpose.msra.mxu0 0
    %2343 = vmatprep.subr.bf16.mxu0 0
    %2344 = vmatpush1.bf16.xpose.msra.mxu0 0
    %2345 = vmatprep.subr.bf16.mxu0 0
    %2346 = vmatpush1.bf16.xpose.msra.mxu0 0
    %2347 = vmatprep.subr.bf16.mxu0 0
    %2348 = vmatpush1.bf16.xpose.msra.mxu0 0
    %2349 = vmatprep.subr.bf16.mxu0 0
    %2350 = vmatpush1.bf16.xpose.msra.mxu0 0
    %2351 = vmatprep.subr.bf16.mxu0 0
    %2352 = vmatpush1.bf16.xpose.msra.mxu0 0
    %2353 = vmatprep.subr.bf16.mxu0 0
    %2354 = vmatpush1.bf16.xpose.msra.mxu0 0
    %2355 = vmatprep.subr.bf16.mxu0 0
    %2356 = vmatpush1.bf16.xpose.msra.mxu0 0
    %2357 = vmatprep.subr.bf16.mxu0 0
    %2358 = vmatpush1.bf16.xpose.msra.mxu0 0
    %2359 = vmatprep.subr.bf16.mxu0 0
    %2360 = vmatpush1.bf16.xpose.msra.mxu0 0
    %2361 = vmatprep.subr.bf16.mxu0 0
    %2362 = vmatpush1.bf16.xpose.msra.mxu0 0
    %2363 = vmatprep.subr.bf16.mxu0 0
    %2364 = vmatpush1.bf16.xpose.msra.mxu0 0
    %2365 = vmatprep.subr.bf16.mxu0 0
    %2366 = vmatpush1.bf16.xpose.msra.mxu0 0
    %2367 = vmatprep.subr.bf16.mxu0 0
    %2368 = vmatpush1.bf16.xpose.msra.mxu0 0
    %2369 = vmatprep.mubr.bf16.mxu0 0
    %2370 = vmatmul.mubr.bf16.gmra.mrb[0].mxu0 %v2332
    %v2371 = vpop.f32.mrb[0].mxu0
    %v2372 = vadd.f32 %v278, %v2371
    %v2373 = vpop.f32.mrb[0].mxu0
    %v2374 = vpop.f32.mrb[0].mxu0
    %v2375 = vadd.f32 %v279, %v2374
    %v2376 = vpop.f32.mrb[0].mxu0
    %2377 = vdwg.mxu0
    %v2378 = vsel %vm554, %v2372, -inf
    %2379 = vmax.xlane.f32.xlu0 %v2378
    %v2380 = vpop.xlane.xlu0 %2379
    %v2381 = vsel %vm554, %v2375, -inf
    %2382 = vmax.xlane.f32.xlu0 %v2381
    %v2383 = vpop.xlane.xlu0 %2382
    %v2384 = vsub.f32 %v2372, %v2380
    %v2385 = vsub.f32 %v2375, %v2383
    %v2386 = vmul.f32 %v2384, 1.442695
    %v2387 = vpow.pop %v2386
    %v2388 = vmul.f32 %v2385, 1.442695
    %v2389 = vpow.pop %v2388
    %v2390 = vsel %vm554, %v2387, 0.0
    %2391 = vadd.xlane.f32.xlu0 %v2390
    %v2392 = vpop.xlane.xlu0 %2391
    %v2393 = vsel %vm554, %v2389, 0.0
    %2394 = vadd.xlane.f32.xlu0 %v2393
    %v2395 = vpop.xlane.xlu0 %2394
    %v2396 = vrcp.pop %v2392
    %v2397 = vrcp.pop %v2395
    %v2398 = vmul.f32 %v2387, %v2396
    %v2399 = vmul.f32 %v2389, %v2397
    %v2400 = vpack.c.bf16 %v2399, %v2398
    %v2401 = vmul.f32 %v2321, %v287
    %v2402 = vmul.f32 %v2324, %v287
    %v2403 = vpack.c.bf16 %v2402, %v2401
    %v2404 = vmul.f32 %v2189, %v292
    %v2405 = vmul.f32 %v2192, %v292
    %v2406 = vpack.c.bf16 %v2405, %v2404
    %v2408 = vsel %vm326, %v2406, 0
    %2410 = vmatprep.subr.bf16.mxu0 0
    %2411 = vmatpush1.bf16.xpose.msra.mxu0 %v2335
    %2412 = vmatprep.subr.bf16.mxu0 0
    %2413 = vmatpush1.bf16.xpose.msra.mxu0 0
    %2414 = vmatprep.subr.bf16.mxu0 0
    %2415 = vmatpush1.bf16.xpose.msra.mxu0 0
    %2416 = vmatprep.subr.bf16.mxu0 0
    %2417 = vmatpush1.bf16.xpose.msra.mxu0 0
    %2418 = vmatprep.subr.bf16.mxu0 0
    %2419 = vmatpush1.bf16.xpose.msra.mxu0 0
    %2420 = vmatprep.subr.bf16.mxu0 0
    %2421 = vmatpush1.bf16.xpose.msra.mxu0 0
    %2422 = vmatprep.subr.bf16.mxu0 0
    %2423 = vmatpush1.bf16.xpose.msra.mxu0 0
    %2424 = vmatprep.subr.bf16.mxu0 0
    %2425 = vmatpush1.bf16.xpose.msra.mxu0 0
    %2426 = vmatprep.subr.bf16.mxu0 0
    %2427 = vmatpush1.bf16.xpose.msra.mxu0 0
    %2428 = vmatprep.subr.bf16.mxu0 0
    %2429 = vmatpush1.bf16.xpose.msra.mxu0 0
    %2430 = vmatprep.subr.bf16.mxu0 0
    %2431 = vmatpush1.bf16.xpose.msra.mxu0 0
    %2432 = vmatprep.subr.bf16.mxu0 0
    %2433 = vmatpush1.bf16.xpose.msra.mxu0 0
    %2434 = vmatprep.subr.bf16.mxu0 0
    %2435 = vmatpush1.bf16.xpose.msra.mxu0 0
    %2436 = vmatprep.subr.bf16.mxu0 0
    %2437 = vmatpush1.bf16.xpose.msra.mxu0 0
    %2438 = vmatprep.subr.bf16.mxu0 0
    %2439 = vmatpush1.bf16.xpose.msra.mxu0 0
    %2440 = vmatprep.subr.bf16.mxu0 0
    %2441 = vmatpush1.bf16.xpose.msra.mxu0 0
    %2442 = vmatprep.mubr.bf16.mxu0 0
    %2443 = vmatmul.mubr.bf16.gmra.mrb[0].mxu0 %v2408
    %v2444 = vpop.f32.mrb[0].mxu0
    %v2445 = vadd.f32 %v278, %v2444
    %v2446 = vpop.f32.mrb[0].mxu0
    %v2447 = vpop.f32.mrb[0].mxu0
    %v2448 = vadd.f32 %v279, %v2447
    %v2449 = vpop.f32.mrb[0].mxu0
    %2450 = vdwg.mxu0
    %v2451 = vsel %vm554, %v2445, -inf
    %2452 = vmax.xlane.f32.xlu0 %v2451
    %v2453 = vpop.xlane.xlu0 %2452
    %v2454 = vsel %vm554, %v2448, -inf
    %2455 = vmax.xlane.f32.xlu0 %v2454
    %v2456 = vpop.xlane.xlu0 %2455
    %v2457 = vsub.f32 %v2445, %v2453
    %v2458 = vsub.f32 %v2448, %v2456
    %v2459 = vmul.f32 %v2457, 1.442695
    %v2460 = vpow.pop %v2459
    %v2461 = vmul.f32 %v2458, 1.442695
    %v2462 = vpow.pop %v2461
    %v2463 = vsel %vm554, %v2460, 0.0
    %2464 = vadd.xlane.f32.xlu0 %v2463
    %v2465 = vpop.xlane.xlu0 %2464
    %v2466 = vsel %vm554, %v2462, 0.0
    %2467 = vadd.xlane.f32.xlu0 %v2466
    %v2468 = vpop.xlane.xlu0 %2467
    %v2469 = vrcp.pop %v2465
    %v2470 = vrcp.pop %v2468
    %v2471 = vmul.f32 %v2460, %v2469
    %v2472 = vmul.f32 %v2462, %v2470
    %v2473 = vpack.c.bf16 %v2472, %v2471
    %v2474 = vmul.f32 %v2321, %v292
    %v2475 = vmul.f32 %v2324, %v292
    %v2476 = vpack.c.bf16 %v2475, %v2474
    %v2478 = vsel %vm554, %v2473, 0
    %2480 = vmatprep.subr.bf16.mxu0 0
    %2481 = vmatpush1.bf16.msra.mxu0 %v2476
    %2482 = vmatprep.subr.bf16.mxu0 0
    %2483 = vmatpush1.bf16.msra.mxu0 0
    %2484 = vmatprep.subr.bf16.mxu0 0
    %2485 = vmatpush1.bf16.msra.mxu0 0
    %2486 = vmatprep.subr.bf16.mxu0 0
    %2487 = vmatpush1.bf16.msra.mxu0 0
    %2488 = vmatprep.subr.bf16.mxu0 0
    %2489 = vmatpush1.bf16.msra.mxu0 0
    %2490 = vmatprep.subr.bf16.mxu0 0
    %2491 = vmatpush1.bf16.msra.mxu0 0
    %2492 = vmatprep.subr.bf16.mxu0 0
    %2493 = vmatpush1.bf16.msra.mxu0 0
    %2494 = vmatprep.subr.bf16.mxu0 0
    %2495 = vmatpush1.bf16.msra.mxu0 0
    %2496 = vmatprep.subr.bf16.mxu0 0
    %2497 = vmatpush1.bf16.msra.mxu0 0
    %2498 = vmatprep.subr.bf16.mxu0 0
    %2499 = vmatpush1.bf16.msra.mxu0 0
    %2500 = vmatprep.subr.bf16.mxu0 0
    %2501 = vmatpush1.bf16.msra.mxu0 0
    %2502 = vmatprep.subr.bf16.mxu0 0
    %2503 = vmatpush1.bf16.msra.mxu0 0
    %2504 = vmatprep.subr.bf16.mxu0 0
    %2505 = vmatpush1.bf16.msra.mxu0 0
    %2506 = vmatprep.subr.bf16.mxu0 0
    %2507 = vmatpush1.bf16.msra.mxu0 0
    %2508 = vmatprep.subr.bf16.mxu0 0
    %2509 = vmatpush1.bf16.msra.mxu0 0
    %2510 = vmatprep.subr.bf16.mxu0 0
    %2511 = vmatpush1.bf16.msra.mxu0 0
    %2512 = vmatprep.mubr.bf16.mxu0 0
    %2513 = vmatmul.mubr.bf16.gmra.mrb[0].mxu0 %v2478
    %v2514 = vpop.f32.mrb[0].mxu0
    %v2515 = vadd.f32 0.0, %v2514
    %v2516 = vpop.f32.mrb[0].mxu0
    %v2517 = vpop.f32.mrb[0].mxu0
    %v2518 = vadd.f32 0.0, %v2517
    %v2519 = vpop.f32.mrb[0].mxu0
    %2520 = vdwg.mxu0
    %v2522 = vsel %vm554, %v2400, 0
    %2524 = vmatprep.subr.bf16.mxu0 0
    %2525 = vmatpush1.bf16.msra.mxu0 %v2403
    %2526 = vmatprep.subr.bf16.mxu0 0
    %2527 = vmatpush1.bf16.msra.mxu0 0
    %2528 = vmatprep.subr.bf16.mxu0 0
    %2529 = vmatpush1.bf16.msra.mxu0 0
    %2530 = vmatprep.subr.bf16.mxu0 0
    %2531 = vmatpush1.bf16.msra.mxu0 0
    %2532 = vmatprep.subr.bf16.mxu0 0
    %2533 = vmatpush1.bf16.msra.mxu0 0
    %2534 = vmatprep.subr.bf16.mxu0 0
    %2535 = vmatpush1.bf16.msra.mxu0 0
    %2536 = vmatprep.subr.bf16.mxu0 0
    %2537 = vmatpush1.bf16.msra.mxu0 0
    %2538 = vmatprep.subr.bf16.mxu0 0
    %2539 = vmatpush1.bf16.msra.mxu0 0
    %2540 = vmatprep.subr.bf16.mxu0 0
    %2541 = vmatpush1.bf16.msra.mxu0 0
    %2542 = vmatprep.subr.bf16.mxu0 0
    %2543 = vmatpush1.bf16.msra.mxu0 0
    %2544 = vmatprep.subr.bf16.mxu0 0
    %2545 = vmatpush1.bf16.msra.mxu0 0
    %2546 = vmatprep.subr.bf16.mxu0 0
    %2547 = vmatpush1.bf16.msra.mxu0 0
    %2548 = vmatprep.subr.bf16.mxu0 0
    %2549 = vmatpush1.bf16.msra.mxu0 0
    %2550 = vmatprep.subr.bf16.mxu0 0
    %2551 = vmatpush1.bf16.msra.mxu0 0
    %2552 = vmatprep.subr.bf16.mxu0 0
    %2553 = vmatpush1.bf16.msra.mxu0 0
    %2554 = vmatprep.subr.bf16.mxu0 0
    %2555 = vmatpush1.bf16.msra.mxu0 0
    %2556 = vmatprep.mubr.bf16.mxu0 0
    %2557 = vmatmul.mubr.bf16.gmra.mrb[0].mxu0 %v2522
    %v2558 = vpop.f32.mrb[0].mxu0
    %v2559 = vadd.f32 %v2515, %v2558
    %v2560 = vpop.f32.mrb[0].mxu0
    %v2561 = vpop.f32.mrb[0].mxu0
    %v2562 = vadd.f32 %v2518, %v2561
    %v2563 = vpop.f32.mrb[0].mxu0
    %2564 = vdwg.mxu0
    %v2565 = vmul.f32 %v2189, %v297
    %v2566 = vmul.f32 %v2192, %v297
    %v2567 = vpack.c.bf16 %v2566, %v2565
    %v2569 = vsel %vm326, %v2567, 0
    %2571 = vmatprep.subr.bf16.mxu0 0
    %2572 = vmatpush1.bf16.xpose.msra.mxu0 %v2335
    %2573 = vmatprep.subr.bf16.mxu0 0
    %2574 = vmatpush1.bf16.xpose.msra.mxu0 0
    %2575 = vmatprep.subr.bf16.mxu0 0
    %2576 = vmatpush1.bf16.xpose.msra.mxu0 0
    %2577 = vmatprep.subr.bf16.mxu0 0
    %2578 = vmatpush1.bf16.xpose.msra.mxu0 0
    %2579 = vmatprep.subr.bf16.mxu0 0
    %2580 = vmatpush1.bf16.xpose.msra.mxu0 0
    %2581 = vmatprep.subr.bf16.mxu0 0
    %2582 = vmatpush1.bf16.xpose.msra.mxu0 0
    %2583 = vmatprep.subr.bf16.mxu0 0
    %2584 = vmatpush1.bf16.xpose.msra.mxu0 0
    %2585 = vmatprep.subr.bf16.mxu0 0
    %2586 = vmatpush1.bf16.xpose.msra.mxu0 0
    %2587 = vmatprep.subr.bf16.mxu0 0
    %2588 = vmatpush1.bf16.xpose.msra.mxu0 0
    %2589 = vmatprep.subr.bf16.mxu0 0
    %2590 = vmatpush1.bf16.xpose.msra.mxu0 0
    %2591 = vmatprep.subr.bf16.mxu0 0
    %2592 = vmatpush1.bf16.xpose.msra.mxu0 0
    %2593 = vmatprep.subr.bf16.mxu0 0
    %2594 = vmatpush1.bf16.xpose.msra.mxu0 0
    %2595 = vmatprep.subr.bf16.mxu0 0
    %2596 = vmatpush1.bf16.xpose.msra.mxu0 0
    %2597 = vmatprep.subr.bf16.mxu0 0
    %2598 = vmatpush1.bf16.xpose.msra.mxu0 0
    %2599 = vmatprep.subr.bf16.mxu0 0
    %2600 = vmatpush1.bf16.xpose.msra.mxu0 0
    %2601 = vmatprep.subr.bf16.mxu0 0
    %2602 = vmatpush1.bf16.xpose.msra.mxu0 0
    %2603 = vmatprep.mubr.bf16.mxu0 0
    %2604 = vmatmul.mubr.bf16.gmra.mrb[0].mxu0 %v2569
    %v2605 = vpop.f32.mrb[0].mxu0
    %v2606 = vadd.f32 %v278, %v2605
    %v2607 = vpop.f32.mrb[0].mxu0
    %v2608 = vpop.f32.mrb[0].mxu0
    %v2609 = vadd.f32 %v279, %v2608
    %v2610 = vpop.f32.mrb[0].mxu0
    %2611 = vdwg.mxu0
    %v2612 = vsel %vm554, %v2606, -inf
    %2613 = vmax.xlane.f32.xlu0 %v2612
    %v2614 = vpop.xlane.xlu0 %2613
    %v2615 = vsel %vm554, %v2609, -inf
    %2616 = vmax.xlane.f32.xlu0 %v2615
    %v2617 = vpop.xlane.xlu0 %2616
    %v2618 = vsub.f32 %v2606, %v2614
    %v2619 = vsub.f32 %v2609, %v2617
    %v2620 = vmul.f32 %v2618, 1.442695
    %v2621 = vpow.pop %v2620
    %v2622 = vmul.f32 %v2619, 1.442695
    %v2623 = vpow.pop %v2622
    %v2624 = vsel %vm554, %v2621, 0.0
    %2625 = vadd.xlane.f32.xlu0 %v2624
    %v2626 = vpop.xlane.xlu0 %2625
    %v2627 = vsel %vm554, %v2623, 0.0
    %2628 = vadd.xlane.f32.xlu0 %v2627
    %v2629 = vpop.xlane.xlu0 %2628
    %v2630 = vrcp.pop %v2626
    %v2631 = vrcp.pop %v2629
    %v2632 = vmul.f32 %v2621, %v2630
    %v2633 = vmul.f32 %v2623, %v2631
    %v2634 = vpack.c.bf16 %v2633, %v2632
    %v2635 = vmul.f32 %v2321, %v297
    %v2636 = vmul.f32 %v2324, %v297
    %v2637 = vpack.c.bf16 %v2636, %v2635
    %v2639 = vsel %vm554, %v2634, 0
    %2641 = vmatprep.subr.bf16.mxu0 0
    %2642 = vmatpush1.bf16.msra.mxu0 %v2637
    %2643 = vmatprep.subr.bf16.mxu0 0
    %2644 = vmatpush1.bf16.msra.mxu0 0
    %2645 = vmatprep.subr.bf16.mxu0 0
    %2646 = vmatpush1.bf16.msra.mxu0 0
    %2647 = vmatprep.subr.bf16.mxu0 0
    %2648 = vmatpush1.bf16.msra.mxu0 0
    %2649 = vmatprep.subr.bf16.mxu0 0
    %2650 = vmatpush1.bf16.msra.mxu0 0
    %2651 = vmatprep.subr.bf16.mxu0 0
    %2652 = vmatpush1.bf16.msra.mxu0 0
    %2653 = vmatprep.subr.bf16.mxu0 0
    %2654 = vmatpush1.bf16.msra.mxu0 0
    %2655 = vmatprep.subr.bf16.mxu0 0
    %2656 = vmatpush1.bf16.msra.mxu0 0
    %2657 = vmatprep.subr.bf16.mxu0 0
    %2658 = vmatpush1.bf16.msra.mxu0 0
    %2659 = vmatprep.subr.bf16.mxu0 0
    %2660 = vmatpush1.bf16.msra.mxu0 0
    %2661 = vmatprep.subr.bf16.mxu0 0
    %2662 = vmatpush1.bf16.msra.mxu0 0
    %2663 = vmatprep.subr.bf16.mxu0 0
    %2664 = vmatpush1.bf16.msra.mxu0 0
    %2665 = vmatprep.subr.bf16.mxu0 0
    %2666 = vmatpush1.bf16.msra.mxu0 0
    %2667 = vmatprep.subr.bf16.mxu0 0
    %2668 = vmatpush1.bf16.msra.mxu0 0
    %2669 = vmatprep.subr.bf16.mxu0 0
    %2670 = vmatpush1.bf16.msra.mxu0 0
    %2671 = vmatprep.subr.bf16.mxu0 0
    %2672 = vmatpush1.bf16.msra.mxu0 0
    %2673 = vmatprep.mubr.bf16.mxu0 0
    %2674 = vmatmul.mubr.bf16.gmra.mrb[0].mxu0 %v2639
    %v2675 = vpop.f32.mrb[0].mxu0
    %v2676 = vadd.f32 0.0, %v2675
    %v2677 = vpop.f32.mrb[0].mxu0
    %v2678 = vpop.f32.mrb[0].mxu0
    %v2679 = vadd.f32 0.0, %v2678
    %v2680 = vpop.f32.mrb[0].mxu0
    %2681 = vdwg.mxu0
    %v2682 = vadd.f32 %v2559, %v2676
    %v2683 = vadd.f32 %v2562, %v2679
    %v2684 = vmul.f32 %v2189, %v302
    %v2685 = vmul.f32 %v2192, %v302
    %v2686 = vpack.c.bf16 %v2685, %v2684
    %v2688 = vsel %vm326, %v2686, 0
    %2690 = vmatprep.subr.bf16.mxu0 0
    %2691 = vmatpush1.bf16.xpose.msra.mxu0 %v2335
    %2692 = vmatprep.subr.bf16.mxu0 0
    %2693 = vmatpush1.bf16.xpose.msra.mxu0 0
    %2694 = vmatprep.subr.bf16.mxu0 0
    %2695 = vmatpush1.bf16.xpose.msra.mxu0 0
    %2696 = vmatprep.subr.bf16.mxu0 0
    %2697 = vmatpush1.bf16.xpose.msra.mxu0 0
    %2698 = vmatprep.subr.bf16.mxu0 0
    %2699 = vmatpush1.bf16.xpose.msra.mxu0 0
    %2700 = vmatprep.subr.bf16.mxu0 0
    %2701 = vmatpush1.bf16.xpose.msra.mxu0 0
    %2702 = vmatprep.subr.bf16.mxu0 0
    %2703 = vmatpush1.bf16.xpose.msra.mxu0 0
    %2704 = vmatprep.subr.bf16.mxu0 0
    %2705 = vmatpush1.bf16.xpose.msra.mxu0 0
    %2706 = vmatprep.subr.bf16.mxu0 0
    %2707 = vmatpush1.bf16.xpose.msra.mxu0 0
    %2708 = vmatprep.subr.bf16.mxu0 0
    %2709 = vmatpush1.bf16.xpose.msra.mxu0 0
    %2710 = vmatprep.subr.bf16.mxu0 0
    %2711 = vmatpush1.bf16.xpose.msra.mxu0 0
    %2712 = vmatprep.subr.bf16.mxu0 0
    %2713 = vmatpush1.bf16.xpose.msra.mxu0 0
    %2714 = vmatprep.subr.bf16.mxu0 0
    %2715 = vmatpush1.bf16.xpose.msra.mxu0 0
    %2716 = vmatprep.subr.bf16.mxu0 0
    %2717 = vmatpush1.bf16.xpose.msra.mxu0 0
    %2718 = vmatprep.subr.bf16.mxu0 0
    %2719 = vmatpush1.bf16.xpose.msra.mxu0 0
    %2720 = vmatprep.subr.bf16.mxu0 0
    %2721 = vmatpush1.bf16.xpose.msra.mxu0 0
    %2722 = vmatprep.mubr.bf16.mxu0 0
    %2723 = vmatmul.mubr.bf16.gmra.mrb[0].mxu0 %v2688
    %v2724 = vpop.f32.mrb[0].mxu0
    %v2725 = vadd.f32 %v278, %v2724
    %v2726 = vpop.f32.mrb[0].mxu0
    %v2727 = vpop.f32.mrb[0].mxu0
    %v2728 = vadd.f32 %v279, %v2727
    %v2729 = vpop.f32.mrb[0].mxu0
    %2730 = vdwg.mxu0
    %v2731 = vsel %vm554, %v2725, -inf
    %2732 = vmax.xlane.f32.xlu0 %v2731
    %v2733 = vpop.xlane.xlu0 %2732
    %v2734 = vsel %vm554, %v2728, -inf
    %2735 = vmax.xlane.f32.xlu0 %v2734
    %v2736 = vpop.xlane.xlu0 %2735
    %v2737 = vsub.f32 %v2725, %v2733
    %v2738 = vsub.f32 %v2728, %v2736
    %v2739 = vmul.f32 %v2737, 1.442695
    %v2740 = vpow.pop %v2739
    %v2741 = vmul.f32 %v2738, 1.442695
    %v2742 = vpow.pop %v2741
    %v2743 = vsel %vm554, %v2740, 0.0
    %2744 = vadd.xlane.f32.xlu0 %v2743
    %v2745 = vpop.xlane.xlu0 %2744
    %v2746 = vsel %vm554, %v2742, 0.0
    %2747 = vadd.xlane.f32.xlu0 %v2746
    %v2748 = vpop.xlane.xlu0 %2747
    %v2749 = vrcp.pop %v2745
    %v2750 = vrcp.pop %v2748
    %v2751 = vmul.f32 %v2740, %v2749
    %v2752 = vmul.f32 %v2742, %v2750
    %v2753 = vpack.c.bf16 %v2752, %v2751
    %v2754 = vmul.f32 %v2321, %v302
    %v2755 = vmul.f32 %v2324, %v302
    %v2756 = vpack.c.bf16 %v2755, %v2754
    %v2758 = vsel %vm554, %v2753, 0
    %2760 = vmatprep.subr.bf16.mxu0 0
    %2761 = vmatpush1.bf16.msra.mxu0 %v2756
    %2762 = vmatprep.subr.bf16.mxu0 0
    %2763 = vmatpush1.bf16.msra.mxu0 0
    %2764 = vmatprep.subr.bf16.mxu0 0
    %2765 = vmatpush1.bf16.msra.mxu0 0
    %2766 = vmatprep.subr.bf16.mxu0 0
    %2767 = vmatpush1.bf16.msra.mxu0 0
    %2768 = vmatprep.subr.bf16.mxu0 0
    %2769 = vmatpush1.bf16.msra.mxu0 0
    %2770 = vmatprep.subr.bf16.mxu0 0
    %2771 = vmatpush1.bf16.msra.mxu0 0
    %2772 = vmatprep.subr.bf16.mxu0 0
    %2773 = vmatpush1.bf16.msra.mxu0 0
    %2774 = vmatprep.subr.bf16.mxu0 0
    %2775 = vmatpush1.bf16.msra.mxu0 0
    %2776 = vmatprep.subr.bf16.mxu0 0
    %2777 = vmatpush1.bf16.msra.mxu0 0
    %2778 = vmatprep.subr.bf16.mxu0 0
    %2779 = vmatpush1.bf16.msra.mxu0 0
    %2780 = vmatprep.subr.bf16.mxu0 0
    %2781 = vmatpush1.bf16.msra.mxu0 0
    %2782 = vmatprep.subr.bf16.mxu0 0
    %2783 = vmatpush1.bf16.msra.mxu0 0
    %2784 = vmatprep.subr.bf16.mxu0 0
    %2785 = vmatpush1.bf16.msra.mxu0 0
    %2786 = vmatprep.subr.bf16.mxu0 0
    %2787 = vmatpush1.bf16.msra.mxu0 0
    %2788 = vmatprep.subr.bf16.mxu0 0
    %2789 = vmatpush1.bf16.msra.mxu0 0
    %2790 = vmatprep.subr.bf16.mxu0 0
    %2791 = vmatpush1.bf16.msra.mxu0 0
    %2792 = vmatprep.mubr.bf16.mxu0 0
    %2793 = vmatmul.mubr.bf16.gmra.mrb[0].mxu0 %v2758
    %v2794 = vpop.f32.mrb[0].mxu0
    %v2795 = vadd.f32 0.0, %v2794
    %v2796 = vpop.f32.mrb[0].mxu0
    %v2797 = vpop.f32.mrb[0].mxu0
    %v2798 = vadd.f32 0.0, %v2797
    %v2799 = vpop.f32.mrb[0].mxu0
    %2800 = vdwg.mxu0
    %v2801 = vadd.f32 %v2682, %v2795
    %v2802 = vadd.f32 %v2683, %v2798
    %v2803 = vpack.c.bf16 %v2802, %v2801
    %s2804 = scalar_lea.vmem %s4, 176
    %v2805 = vld [vmem:[%s2804] sm:$0xf]
    %v2806 = vld [vmem:[%s2804 + $0x4] sm:$0xf]
    %v2807 = vld [vmem:[%s2804 + $0x8] sm:$0xf]
    %v2808 = vld [vmem:[%s2804 + $0xc] sm:$0xf]
    %s2809 = scalar_lea.vmem [#allocation7], 11
    %v2810 = vld [vmem:[%s2809] sm:$0x1]
    %v2812 = vlaneseq
    %v2813 = vshrl.u32 %v2812, 7
    %v2814 = vsub.s32 0, %v2813
    %v2815 = vrot.slane %v2810, %v2814
    %v2821 = vunpack.c.l.b16 %v2805
    %v2822 = vunpack.c.l.b16 %v2806
    %v2823 = vunpack.c.l.b16 %v2807
    %v2824 = vunpack.c.l.b16 %v2808
    %v2825 = vpack.c.b16 %v2822, %v2821
    %v2826 = vpack.c.b16 %v2824, %v2823
    %v2830 = vsel %vm326, %v2803, 0
    %2832 = vmatprep.subr.bf16.mxu0 0
    %2833 = vmatpush1.bf16.msra.mxu0 %v2825
    %2834 = vmatprep.subr.bf16.mxu0 0
    %2835 = vmatpush1.bf16.msra.mxu0 %v2826
    %2836 = vmatprep.subr.bf16.mxu0 0
    %2837 = vmatpush1.bf16.msra.mxu0 0
    %2838 = vmatprep.subr.bf16.mxu0 0
    %2839 = vmatpush1.bf16.msra.mxu0 0
    %2840 = vmatprep.subr.bf16.mxu0 0
    %2841 = vmatpush1.bf16.msra.mxu0 0
    %2842 = vmatprep.subr.bf16.mxu0 0
    %2843 = vmatpush1.bf16.msra.mxu0 0
    %2844 = vmatprep.subr.bf16.mxu0 0
    %2845 = vmatpush1.bf16.msra.mxu0 0
    %2846 = vmatprep.subr.bf16.mxu0 0
    %2847 = vmatpush1.bf16.msra.mxu0 0
    %2848 = vmatprep.subr.bf16.mxu0 0
    %2849 = vmatpush1.bf16.msra.mxu0 0
    %2850 = vmatprep.subr.bf16.mxu0 0
    %2851 = vmatpush1.bf16.msra.mxu0 0
    %2852 = vmatprep.subr.bf16.mxu0 0
    %2853 = vmatpush1.bf16.msra.mxu0 0
    %2854 = vmatprep.subr.bf16.mxu0 0
    %2855 = vmatpush1.bf16.msra.mxu0 0
    %2856 = vmatprep.subr.bf16.mxu0 0
    %2857 = vmatpush1.bf16.msra.mxu0 0
    %2858 = vmatprep.subr.bf16.mxu0 0
    %2859 = vmatpush1.bf16.msra.mxu0 0
    %2860 = vmatprep.subr.bf16.mxu0 0
    %2861 = vmatpush1.bf16.msra.mxu0 0
    %2862 = vmatprep.subr.bf16.mxu0 0
    %2863 = vmatpush1.bf16.msra.mxu0 0
    %2864 = vmatprep.mubr.bf16.mxu0 0
    %2865 = vmatmul.mubr.bf16.gmra.mrb[0].mxu0 %v2830
    %v2866 = vpop.f32.mrb[0].mxu0
    %v2867 = vadd.f32 %v2815, %v2866
    %v2868 = vpop.f32.mrb[0].mxu0
    %v2869 = vpop.f32.mrb[0].mxu0
    %v2870 = vadd.f32 %v2815, %v2869
    %v2871 = vpop.f32.mrb[0].mxu0
    %2872 = vdwg.mxu0
    %v2873 = vadd.f32 %v2123, %v2867
    %v2874 = vadd.f32 %v2124, %v2870
    %s2875 = scalar_lea.vmem [#allocation8], 6
    %v2876 = vld [vmem:[%s2875] sm:$0x1]
    %s2877 = scalar_lea.vmem [#allocation8], 7
    %v2878 = vld [vmem:[%s2877] sm:$0x1]
    %v2879 = vsel %vm326, %v2873, 0.0
    %2880 = vadd.xlane.f32.xlu0 %v2879
    %v2881 = vpop.xlane.xlu0 %2880
    %v2882 = vsel %vm326, %v2874, 0.0
    %2883 = vadd.xlane.f32.xlu0 %v2882
    %v2884 = vpop.xlane.xlu0 %2883
    %v2885 = vmul.f32 %v2881, %v1061
    %v2886 = vmul.f32 %v2884, %v1061
    %v2887 = vsub.f32 %v2873, %v2885
    %v2888 = vsub.f32 %v2874, %v2886
    %v2889 = vmul.f32 %v2887, %v2887
    %v2890 = vmul.f32 %v2888, %v2888
    %v2891 = vsel %vm326, %v2889, 0.0
    %2892 = vadd.xlane.f32.xlu0 %v2891
    %v2893 = vpop.xlane.xlu0 %2892
    %v2894 = vsel %vm326, %v2890, 0.0
    %2895 = vadd.xlane.f32.xlu0 %v2894
    %v2896 = vpop.xlane.xlu0 %2895
    %v2897 = vmul.f32 %v2893, %v1061
    %v2898 = vmul.f32 %v2896, %v1061
    %v2899 = vadd.f32 %v2897, 1e-05
    %v2900 = vadd.f32 %v2898, 1e-05
    %v2901 = vrsqrt.pop %v2899
    %v2902 = vrsqrt.pop %v2900
    %v2903 = vmul.f32 %v2887, %v2901
    %v2904 = vmul.f32 %v2888, %v2902
    %v2906 = vlaneseq
    %v2907 = vshrl.u32 %v2906, 7
    %v2908 = vsub.s32 0, %v2907
    %v2909 = vrot.slane %v2876, %v2908
    %v2911 = vmul.f32 %v2903, %v2909
    %v2912 = vmul.f32 %v2904, %v2909
    %v2914 = vlaneseq
    %v2915 = vshrl.u32 %v2914, 7
    %v2916 = vsub.s32 0, %v2915
    %v2917 = vrot.slane %v2878, %v2916
    %v2919 = vadd.f32 %v2911, %v2917
    %v2920 = vadd.f32 %v2912, %v2917
    %v2921 = vpack.c.bf16 %v2920, %v2919
    %s2922 = scalar_lea.vmem %s4, 192
    %v2923 = vld [vmem:[%s2922] sm:$0xf]
    %v2924 = vld [vmem:[%s2922 + $0x4] sm:$0xf]
    %v2925 = vld [vmem:[%s2922 + $0x8] sm:$0xf]
    %v2926 = vld [vmem:[%s2922 + $0xc] sm:$0xf]
    %s2927 = scalar_lea.vmem [#allocation7], 12
    %v2928 = vld [vmem:[%s2927] sm:$0x1]
    %v2930 = vlaneseq
    %v2931 = vshrl.u32 %v2930, 7
    %v2932 = vsub.s32 0, %v2931
    %v2933 = vrot.slane %v2928, %v2932
    %v2939 = vunpack.c.l.b16 %v2923
    %v2940 = vunpack.c.l.b16 %v2924
    %v2941 = vunpack.c.l.b16 %v2925
    %v2942 = vunpack.c.l.b16 %v2926
    %v2943 = vpack.c.b16 %v2940, %v2939
    %v2944 = vpack.c.b16 %v2942, %v2941
    %v2948 = vsel %vm326, %v2921, 0
    %2950 = vmatprep.subr.bf16.mxu0 0
    %2951 = vmatpush1.bf16.msra.mxu0 %v2943
    %2952 = vmatprep.subr.bf16.mxu0 0
    %2953 = vmatpush1.bf16.msra.mxu0 %v2944
    %2954 = vmatprep.subr.bf16.mxu0 0
    %2955 = vmatpush1.bf16.msra.mxu0 0
    %2956 = vmatprep.subr.bf16.mxu0 0
    %2957 = vmatpush1.bf16.msra.mxu0 0
    %2958 = vmatprep.subr.bf16.mxu0 0
    %2959 = vmatpush1.bf16.msra.mxu0 0
    %2960 = vmatprep.subr.bf16.mxu0 0
    %2961 = vmatpush1.bf16.msra.mxu0 0
    %2962 = vmatprep.subr.bf16.mxu0 0
    %2963 = vmatpush1.bf16.msra.mxu0 0
    %2964 = vmatprep.subr.bf16.mxu0 0
    %2965 = vmatpush1.bf16.msra.mxu0 0
    %2966 = vmatprep.subr.bf16.mxu0 0
    %2967 = vmatpush1.bf16.msra.mxu0 0
    %2968 = vmatprep.subr.bf16.mxu0 0
    %2969 = vmatpush1.bf16.msra.mxu0 0
    %2970 = vmatprep.subr.bf16.mxu0 0
    %2971 = vmatpush1.bf16.msra.mxu0 0
    %2972 = vmatprep.subr.bf16.mxu0 0
    %2973 = vmatpush1.bf16.msra.mxu0 0
    %2974 = vmatprep.subr.bf16.mxu0 0
    %2975 = vmatpush1.bf16.msra.mxu0 0
    %2976 = vmatprep.subr.bf16.mxu0 0
    %2977 = vmatpush1.bf16.msra.mxu0 0
    %2978 = vmatprep.subr.bf16.mxu0 0
    %2979 = vmatpush1.bf16.msra.mxu0 0
    %2980 = vmatprep.subr.bf16.mxu0 0
    %2981 = vmatpush1.bf16.msra.mxu0 0
    %2982 = vmatprep.mubr.bf16.mxu0 0
    %2983 = vmatmul.mubr.bf16.gmra.mrb[0].mxu0 %v2948
    %v2984 = vpop.f32.mrb[0].mxu0
    %v2985 = vadd.f32 %v2933, %v2984
    %v2986 = vpop.f32.mrb[0].mxu0
    %v2987 = vpop.f32.mrb[0].mxu0
    %v2988 = vadd.f32 %v2933, %v2987
    %v2989 = vpop.f32.mrb[0].mxu0
    %2990 = vdwg.mxu0
    %s2991 = scalar_lea.vmem %s4, 208
    %v2992 = vld [vmem:[%s2991] sm:$0xf]
    %v2993 = vld [vmem:[%s2991 + $0x4] sm:$0xf]
    %v2994 = vld [vmem:[%s2991 + $0x8] sm:$0xf]
    %v2995 = vld [vmem:[%s2991 + $0xc] sm:$0xf]
    %s2996 = scalar_lea.vmem [#allocation7], 13
    %v2997 = vld [vmem:[%s2996] sm:$0x1]
    %v2999 = vlaneseq
    %v3000 = vshrl.u32 %v2999, 7
    %v3001 = vsub.s32 0, %v3000
    %v3002 = vrot.slane %v2997, %v3001
    %v3008 = vunpack.c.l.b16 %v2992
    %v3009 = vunpack.c.l.b16 %v2993
    %v3010 = vunpack.c.l.b16 %v2994
    %v3011 = vunpack.c.l.b16 %v2995
    %v3012 = vpack.c.b16 %v3009, %v3008
    %v3013 = vpack.c.b16 %v3011, %v3010
    %3016 = vmatprep.subr.bf16.mxu0 0
    %3017 = vmatpush1.bf16.msra.mxu0 %v3012
    %3018 = vmatprep.subr.bf16.mxu0 0
    %3019 = vmatpush1.bf16.msra.mxu0 %v3013
    %3020 = vmatprep.subr.bf16.mxu0 0
    %3021 = vmatpush1.bf16.msra.mxu0 0
    %3022 = vmatprep.subr.bf16.mxu0 0
    %3023 = vmatpush1.bf16.msra.mxu0 0
    %3024 = vmatprep.subr.bf16.mxu0 0
    %3025 = vmatpush1.bf16.msra.mxu0 0
    %3026 = vmatprep.subr.bf16.mxu0 0
    %3027 = vmatpush1.bf16.msra.mxu0 0
    %3028 = vmatprep.subr.bf16.mxu0 0
    %3029 = vmatpush1.bf16.msra.mxu0 0
    %3030 = vmatprep.subr.bf16.mxu0 0
    %3031 = vmatpush1.bf16.msra.mxu0 0
    %3032 = vmatprep.subr.bf16.mxu0 0
    %3033 = vmatpush1.bf16.msra.mxu0 0
    %3034 = vmatprep.subr.bf16.mxu0 0
    %3035 = vmatpush1.bf16.msra.mxu0 0
    %3036 = vmatprep.subr.bf16.mxu0 0
    %3037 = vmatpush1.bf16.msra.mxu0 0
    %3038 = vmatprep.subr.bf16.mxu0 0
    %3039 = vmatpush1.bf16.msra.mxu0 0
    %3040 = vmatprep.subr.bf16.mxu0 0
    %3041 = vmatpush1.bf16.msra.mxu0 0
    %3042 = vmatprep.subr.bf16.mxu0 0
    %3043 = vmatpush1.bf16.msra.mxu0 0
    %3044 = vmatprep.subr.bf16.mxu0 0
    %3045 = vmatpush1.bf16.msra.mxu0 0
    %3046 = vmatprep.subr.bf16.mxu0 0
    %3047 = vmatpush1.bf16.msra.mxu0 0
    %3048 = vmatprep.mubr.bf16.mxu0 0
    %3049 = vmatmul.mubr.bf16.gmra.mrb[0].mxu0 %v328
    %v3050 = vpop.f32.mrb[0].mxu0
    %v3051 = vadd.f32 %v3002, %v3050
    %v3052 = vpop.f32.mrb[0].mxu0
    %v3053 = vpop.f32.mrb[0].mxu0
    %v3054 = vadd.f32 %v3002, %v3053
    %v3055 = vpop.f32.mrb[0].mxu0
    %3056 = vdwg.mxu0
    %s3057 = scalar_lea.vmem %s4, 224
    %v3058 = vld [vmem:[%s3057] sm:$0xf]
    %v3059 = vld [vmem:[%s3057 + $0x4] sm:$0xf]
    %v3060 = vld [vmem:[%s3057 + $0x8] sm:$0xf]
    %v3061 = vld [vmem:[%s3057 + $0xc] sm:$0xf]
    %s3062 = scalar_lea.vmem [#allocation7], 14
    %v3063 = vld [vmem:[%s3062] sm:$0x1]
    %v3065 = vlaneseq
    %v3066 = vshrl.u32 %v3065, 7
    %v3067 = vsub.s32 0, %v3066
    %v3068 = vrot.slane %v3063, %v3067
    %v3074 = vunpack.c.l.b16 %v3058
    %v3075 = vunpack.c.l.b16 %v3059
    %v3076 = vunpack.c.l.b16 %v3060
    %v3077 = vunpack.c.l.b16 %v3061
    %v3078 = vpack.c.b16 %v3075, %v3074
    %v3079 = vpack.c.b16 %v3077, %v3076
    %3082 = vmatprep.subr.bf16.mxu0 0
    %3083 = vmatpush1.bf16.msra.mxu0 %v3078
    %3084 = vmatprep.subr.bf16.mxu0 0
    %3085 = vmatpush1.bf16.msra.mxu0 %v3079
    %3086 = vmatprep.subr.bf16.mxu0 0
    %3087 = vmatpush1.bf16.msra.mxu0 0
    %3088 = vmatprep.subr.bf16.mxu0 0
    %3089 = vmatpush1.bf16.msra.mxu0 0
    %3090 = vmatprep.subr.bf16.mxu0 0
    %3091 = vmatpush1.bf16.msra.mxu0 0
    %3092 = vmatprep.subr.bf16.mxu0 0
    %3093 = vmatpush1.bf16.msra.mxu0 0
    %3094 = vmatprep.subr.bf16.mxu0 0
    %3095 = vmatpush1.bf16.msra.mxu0 0
    %3096 = vmatprep.subr.bf16.mxu0 0
    %3097 = vmatpush1.bf16.msra.mxu0 0
    %3098 = vmatprep.subr.bf16.mxu0 0
    %3099 = vmatpush1.bf16.msra.mxu0 0
    %3100 = vmatprep.subr.bf16.mxu0 0
    %3101 = vmatpush1.bf16.msra.mxu0 0
    %3102 = vmatprep.subr.bf16.mxu0 0
    %3103 = vmatpush1.bf16.msra.mxu0 0
    %3104 = vmatprep.subr.bf16.mxu0 0
    %3105 = vmatpush1.bf16.msra.mxu0 0
    %3106 = vmatprep.subr.bf16.mxu0 0
    %3107 = vmatpush1.bf16.msra.mxu0 0
    %3108 = vmatprep.subr.bf16.mxu0 0
    %3109 = vmatpush1.bf16.msra.mxu0 0
    %3110 = vmatprep.subr.bf16.mxu0 0
    %3111 = vmatpush1.bf16.msra.mxu0 0
    %3112 = vmatprep.subr.bf16.mxu0 0
    %3113 = vmatpush1.bf16.msra.mxu0 0
    %3114 = vmatprep.mubr.bf16.mxu0 0
    %3115 = vmatmul.mubr.bf16.gmra.mrb[0].mxu0 %v328
    %v3116 = vpop.f32.mrb[0].mxu0
    %v3117 = vadd.f32 %v3068, %v3116
    %v3118 = vpop.f32.mrb[0].mxu0
    %v3119 = vpop.f32.mrb[0].mxu0
    %v3120 = vadd.f32 %v3068, %v3119
    %v3121 = vpop.f32.mrb[0].mxu0
    %3122 = vdwg.mxu0
    %v3123 = vpack.c.bf16 %v3054, %v3051
    %v3124 = vmul.f32 %v2985, %v287
    %v3125 = vmul.f32 %v2988, %v287
    %v3126 = vpack.c.bf16 %v3125, %v3124
    %v3128 = vsel %vm326, %v3126, 0
    %v3131 = vsel %vm326, %v3123, 0
    %3133 = vmatprep.subr.bf16.mxu0 0
    %3134 = vmatpush1.bf16.xpose.msra.mxu0 %v3131
    %3135 = vmatprep.subr.bf16.mxu0 0
    %3136 = vmatpush1.bf16.xpose.msra.mxu0 0
    %3137 = vmatprep.subr.bf16.mxu0 0
    %3138 = vmatpush1.bf16.xpose.msra.mxu0 0
    %3139 = vmatprep.subr.bf16.mxu0 0
    %3140 = vmatpush1.bf16.xpose.msra.mxu0 0
    %3141 = vmatprep.subr.bf16.mxu0 0
    %3142 = vmatpush1.bf16.xpose.msra.mxu0 0
    %3143 = vmatprep.subr.bf16.mxu0 0
    %3144 = vmatpush1.bf16.xpose.msra.mxu0 0
    %3145 = vmatprep.subr.bf16.mxu0 0
    %3146 = vmatpush1.bf16.xpose.msra.mxu0 0
    %3147 = vmatprep.subr.bf16.mxu0 0
    %3148 = vmatpush1.bf16.xpose.msra.mxu0 0
    %3149 = vmatprep.subr.bf16.mxu0 0
    %3150 = vmatpush1.bf16.xpose.msra.mxu0 0
    %3151 = vmatprep.subr.bf16.mxu0 0
    %3152 = vmatpush1.bf16.xpose.msra.mxu0 0
    %3153 = vmatprep.subr.bf16.mxu0 0
    %3154 = vmatpush1.bf16.xpose.msra.mxu0 0
    %3155 = vmatprep.subr.bf16.mxu0 0
    %3156 = vmatpush1.bf16.xpose.msra.mxu0 0
    %3157 = vmatprep.subr.bf16.mxu0 0
    %3158 = vmatpush1.bf16.xpose.msra.mxu0 0
    %3159 = vmatprep.subr.bf16.mxu0 0
    %3160 = vmatpush1.bf16.xpose.msra.mxu0 0
    %3161 = vmatprep.subr.bf16.mxu0 0
    %3162 = vmatpush1.bf16.xpose.msra.mxu0 0
    %3163 = vmatprep.subr.bf16.mxu0 0
    %3164 = vmatpush1.bf16.xpose.msra.mxu0 0
    %3165 = vmatprep.mubr.bf16.mxu0 0
    %3166 = vmatmul.mubr.bf16.gmra.mrb[0].mxu0 %v3128
    %v3167 = vpop.f32.mrb[0].mxu0
    %v3168 = vadd.f32 %v281, %v3167
    %v3169 = vpop.f32.mrb[0].mxu0
    %v3170 = vpop.f32.mrb[0].mxu0
    %v3171 = vadd.f32 %v282, %v3170
    %v3172 = vpop.f32.mrb[0].mxu0
    %3173 = vdwg.mxu0
    %v3174 = vsel %vm554, %v3168, -inf
    %3175 = vmax.xlane.f32.xlu0 %v3174
    %v3176 = vpop.xlane.xlu0 %3175
    %v3177 = vsel %vm554, %v3171, -inf
    %3178 = vmax.xlane.f32.xlu0 %v3177
    %v3179 = vpop.xlane.xlu0 %3178
    %v3180 = vsub.f32 %v3168, %v3176
    %v3181 = vsub.f32 %v3171, %v3179
    %v3182 = vmul.f32 %v3180, 1.442695
    %v3183 = vpow.pop %v3182
    %v3184 = vmul.f32 %v3181, 1.442695
    %v3185 = vpow.pop %v3184
    %v3186 = vsel %vm554, %v3183, 0.0
    %3187 = vadd.xlane.f32.xlu0 %v3186
    %v3188 = vpop.xlane.xlu0 %3187
    %v3189 = vsel %vm554, %v3185, 0.0
    %3190 = vadd.xlane.f32.xlu0 %v3189
    %v3191 = vpop.xlane.xlu0 %3190
    %v3192 = vrcp.pop %v3188
    %v3193 = vrcp.pop %v3191
    %v3194 = vmul.f32 %v3183, %v3192
    %v3195 = vmul.f32 %v3185, %v3193
    %v3196 = vpack.c.bf16 %v3195, %v3194
    %v3197 = vmul.f32 %v3117, %v287
    %v3198 = vmul.f32 %v3120, %v287
    %v3199 = vpack.c.bf16 %v3198, %v3197
    %v3200 = vmul.f32 %v2985, %v292
    %v3201 = vmul.f32 %v2988, %v292
    %v3202 = vpack.c.bf16 %v3201, %v3200
    %v3204 = vsel %vm326, %v3202, 0
    %3206 = vmatprep.subr.bf16.mxu0 0
    %3207 = vmatpush1.bf16.xpose.msra.mxu0 %v3131
    %3208 = vmatprep.subr.bf16.mxu0 0
    %3209 = vmatpush1.bf16.xpose.msra.mxu0 0
    %3210 = vmatprep.subr.bf16.mxu0 0
    %3211 = vmatpush1.bf16.xpose.msra.mxu0 0
    %3212 = vmatprep.subr.bf16.mxu0 0
    %3213 = vmatpush1.bf16.xpose.msra.mxu0 0
    %3214 = vmatprep.subr.bf16.mxu0 0
    %3215 = vmatpush1.bf16.xpose.msra.mxu0 0
    %3216 = vmatprep.subr.bf16.mxu0 0
    %3217 = vmatpush1.bf16.xpose.msra.mxu0 0
    %3218 = vmatprep.subr.bf16.mxu0 0
    %3219 = vmatpush1.bf16.xpose.msra.mxu0 0
    %3220 = vmatprep.subr.bf16.mxu0 0
    %3221 = vmatpush1.bf16.xpose.msra.mxu0 0
    %3222 = vmatprep.subr.bf16.mxu0 0
    %3223 = vmatpush1.bf16.xpose.msra.mxu0 0
    %3224 = vmatprep.subr.bf16.mxu0 0
    %3225 = vmatpush1.bf16.xpose.msra.mxu0 0
    %3226 = vmatprep.subr.bf16.mxu0 0
    %3227 = vmatpush1.bf16.xpose.msra.mxu0 0
    %3228 = vmatprep.subr.bf16.mxu0 0
    %3229 = vmatpush1.bf16.xpose.msra.mxu0 0
    %3230 = vmatprep.subr.bf16.mxu0 0
    %3231 = vmatpush1.bf16.xpose.msra.mxu0 0
    %3232 = vmatprep.subr.bf16.mxu0 0
    %3233 = vmatpush1.bf16.xpose.msra.mxu0 0
    %3234 = vmatprep.subr.bf16.mxu0 0
    %3235 = vmatpush1.bf16.xpose.msra.mxu0 0
    %3236 = vmatprep.subr.bf16.mxu0 0
    %3237 = vmatpush1.bf16.xpose.msra.mxu0 0
    %3238 = vmatprep.mubr.bf16.mxu0 0
    %3239 = vmatmul.mubr.bf16.gmra.mrb[0].mxu0 %v3204
    %v3240 = vpop.f32.mrb[0].mxu0
    %v3241 = vadd.f32 %v281, %v3240
    %v3242 = vpop.f32.mrb[0].mxu0
    %v3243 = vpop.f32.mrb[0].mxu0
    %v3244 = vadd.f32 %v282, %v3243
    %v3245 = vpop.f32.mrb[0].mxu0
    %3246 = vdwg.mxu0
    %v3247 = vsel %vm554, %v3241, -inf
    %3248 = vmax.xlane.f32.xlu0 %v3247
    %v3249 = vpop.xlane.xlu0 %3248
    %v3250 = vsel %vm554, %v3244, -inf
    %3251 = vmax.xlane.f32.xlu0 %v3250
    %v3252 = vpop.xlane.xlu0 %3251
    %v3253 = vsub.f32 %v3241, %v3249
    %v3254 = vsub.f32 %v3244, %v3252
    %v3255 = vmul.f32 %v3253, 1.442695
    %v3256 = vpow.pop %v3255
    %v3257 = vmul.f32 %v3254, 1.442695
    %v3258 = vpow.pop %v3257
    %v3259 = vsel %vm554, %v3256, 0.0
    %3260 = vadd.xlane.f32.xlu0 %v3259
    %v3261 = vpop.xlane.xlu0 %3260
    %v3262 = vsel %vm554, %v3258, 0.0
    %3263 = vadd.xlane.f32.xlu0 %v3262
    %v3264 = vpop.xlane.xlu0 %3263
    %v3265 = vrcp.pop %v3261
    %v3266 = vrcp.pop %v3264
    %v3267 = vmul.f32 %v3256, %v3265
    %v3268 = vmul.f32 %v3258, %v3266
    %v3269 = vpack.c.bf16 %v3268, %v3267
    %v3270 = vmul.f32 %v3117, %v292
    %v3271 = vmul.f32 %v3120, %v292
    %v3272 = vpack.c.bf16 %v3271, %v3270
    %v3274 = vsel %vm554, %v3269, 0
    %3276 = vmatprep.subr.bf16.mxu0 0
    %3277 = vmatpush1.bf16.msra.mxu0 %v3272
    %3278 = vmatprep.subr.bf16.mxu0 0
    %3279 = vmatpush1.bf16.msra.mxu0 0
    %3280 = vmatprep.subr.bf16.mxu0 0
    %3281 = vmatpush1.bf16.msra.mxu0 0
    %3282 = vmatprep.subr.bf16.mxu0 0
    %3283 = vmatpush1.bf16.msra.mxu0 0
    %3284 = vmatprep.subr.bf16.mxu0 0
    %3285 = vmatpush1.bf16.msra.mxu0 0
    %3286 = vmatprep.subr.bf16.mxu0 0
    %3287 = vmatpush1.bf16.msra.mxu0 0
    %3288 = vmatprep.subr.bf16.mxu0 0
    %3289 = vmatpush1.bf16.msra.mxu0 0
    %3290 = vmatprep.subr.bf16.mxu0 0
    %3291 = vmatpush1.bf16.msra.mxu0 0
    %3292 = vmatprep.subr.bf16.mxu0 0
    %3293 = vmatpush1.bf16.msra.mxu0 0
    %3294 = vmatprep.subr.bf16.mxu0 0
    %3295 = vmatpush1.bf16.msra.mxu0 0
    %3296 = vmatprep.subr.bf16.mxu0 0
    %3297 = vmatpush1.bf16.msra.mxu0 0
    %3298 = vmatprep.subr.bf16.mxu0 0
    %3299 = vmatpush1.bf16.msra.mxu0 0
    %3300 = vmatprep.subr.bf16.mxu0 0
    %3301 = vmatpush1.bf16.msra.mxu0 0
    %3302 = vmatprep.subr.bf16.mxu0 0
    %3303 = vmatpush1.bf16.msra.mxu0 0
    %3304 = vmatprep.subr.bf16.mxu0 0
    %3305 = vmatpush1.bf16.msra.mxu0 0
    %3306 = vmatprep.subr.bf16.mxu0 0
    %3307 = vmatpush1.bf16.msra.mxu0 0
    %3308 = vmatprep.mubr.bf16.mxu0 0
    %3309 = vmatmul.mubr.bf16.gmra.mrb[0].mxu0 %v3274
    %v3310 = vpop.f32.mrb[0].mxu0
    %v3311 = vadd.f32 0.0, %v3310
    %v3312 = vpop.f32.mrb[0].mxu0
    %v3313 = vpop.f32.mrb[0].mxu0
    %v3314 = vadd.f32 0.0, %v3313
    %v3315 = vpop.f32.mrb[0].mxu0
    %3316 = vdwg.mxu0
    %v3318 = vsel %vm554, %v3196, 0
    %3320 = vmatprep.subr.bf16.mxu0 0
    %3321 = vmatpush1.bf16.msra.mxu0 %v3199
    %3322 = vmatprep.subr.bf16.mxu0 0
    %3323 = vmatpush1.bf16.msra.mxu0 0
    %3324 = vmatprep.subr.bf16.mxu0 0
    %3325 = vmatpush1.bf16.msra.mxu0 0
    %3326 = vmatprep.subr.bf16.mxu0 0
    %3327 = vmatpush1.bf16.msra.mxu0 0
    %3328 = vmatprep.subr.bf16.mxu0 0
    %3329 = vmatpush1.bf16.msra.mxu0 0
    %3330 = vmatprep.subr.bf16.mxu0 0
    %3331 = vmatpush1.bf16.msra.mxu0 0
    %3332 = vmatprep.subr.bf16.mxu0 0
    %3333 = vmatpush1.bf16.msra.mxu0 0
    %3334 = vmatprep.subr.bf16.mxu0 0
    %3335 = vmatpush1.bf16.msra.mxu0 0
    %3336 = vmatprep.subr.bf16.mxu0 0
    %3337 = vmatpush1.bf16.msra.mxu0 0
    %3338 = vmatprep.subr.bf16.mxu0 0
    %3339 = vmatpush1.bf16.msra.mxu0 0
    %3340 = vmatprep.subr.bf16.mxu0 0
    %3341 = vmatpush1.bf16.msra.mxu0 0
    %3342 = vmatprep.subr.bf16.mxu0 0
    %3343 = vmatpush1.bf16.msra.mxu0 0
    %3344 = vmatprep.subr.bf16.mxu0 0
    %3345 = vmatpush1.bf16.msra.mxu0 0
    %3346 = vmatprep.subr.bf16.mxu0 0
    %3347 = vmatpush1.bf16.msra.mxu0 0
    %3348 = vmatprep.subr.bf16.mxu0 0
    %3349 = vmatpush1.bf16.msra.mxu0 0
    %3350 = vmatprep.subr.bf16.mxu0 0
    %3351 = vmatpush1.bf16.msra.mxu0 0
    %3352 = vmatprep.mubr.bf16.mxu0 0
    %3353 = vmatmul.mubr.bf16.gmra.mrb[0].mxu0 %v3318
    %v3354 = vpop.f32.mrb[0].mxu0
    %v3355 = vadd.f32 %v3311, %v3354
    %v3356 = vpop.f32.mrb[0].mxu0
    %v3357 = vpop.f32.mrb[0].mxu0
    %v3358 = vadd.f32 %v3314, %v3357
    %v3359 = vpop.f32.mrb[0].mxu0
    %3360 = vdwg.mxu0
    %v3361 = vmul.f32 %v2985, %v297
    %v3362 = vmul.f32 %v2988, %v297
    %v3363 = vpack.c.bf16 %v3362, %v3361
    %v3365 = vsel %vm326, %v3363, 0
    %3367 = vmatprep.subr.bf16.mxu0 0
    %3368 = vmatpush1.bf16.xpose.msra.mxu0 %v3131
    %3369 = vmatprep.subr.bf16.mxu0 0
    %3370 = vmatpush1.bf16.xpose.msra.mxu0 0
    %3371 = vmatprep.subr.bf16.mxu0 0
    %3372 = vmatpush1.bf16.xpose.msra.mxu0 0
    %3373 = vmatprep.subr.bf16.mxu0 0
    %3374 = vmatpush1.bf16.xpose.msra.mxu0 0
    %3375 = vmatprep.subr.bf16.mxu0 0
    %3376 = vmatpush1.bf16.xpose.msra.mxu0 0
    %3377 = vmatprep.subr.bf16.mxu0 0
    %3378 = vmatpush1.bf16.xpose.msra.mxu0 0
    %3379 = vmatprep.subr.bf16.mxu0 0
    %3380 = vmatpush1.bf16.xpose.msra.mxu0 0
    %3381 = vmatprep.subr.bf16.mxu0 0
    %3382 = vmatpush1.bf16.xpose.msra.mxu0 0
    %3383 = vmatprep.subr.bf16.mxu0 0
    %3384 = vmatpush1.bf16.xpose.msra.mxu0 0
    %3385 = vmatprep.subr.bf16.mxu0 0
    %3386 = vmatpush1.bf16.xpose.msra.mxu0 0
    %3387 = vmatprep.subr.bf16.mxu0 0
    %3388 = vmatpush1.bf16.xpose.msra.mxu0 0
    %3389 = vmatprep.subr.bf16.mxu0 0
    %3390 = vmatpush1.bf16.xpose.msra.mxu0 0
    %3391 = vmatprep.subr.bf16.mxu0 0
    %3392 = vmatpush1.bf16.xpose.msra.mxu0 0
    %3393 = vmatprep.subr.bf16.mxu0 0
    %3394 = vmatpush1.bf16.xpose.msra.mxu0 0
    %3395 = vmatprep.subr.bf16.mxu0 0
    %3396 = vmatpush1.bf16.xpose.msra.mxu0 0
    %3397 = vmatprep.subr.bf16.mxu0 0
    %3398 = vmatpush1.bf16.xpose.msra.mxu0 0
    %3399 = vmatprep.mubr.bf16.mxu0 0
    %3400 = vmatmul.mubr.bf16.gmra.mrb[0].mxu0 %v3365
    %v3401 = vpop.f32.mrb[0].mxu0
    %v3402 = vadd.f32 %v281, %v3401
    %v3403 = vpop.f32.mrb[0].mxu0
    %v3404 = vpop.f32.mrb[0].mxu0
    %v3405 = vadd.f32 %v282, %v3404
    %v3406 = vpop.f32.mrb[0].mxu0
    %3407 = vdwg.mxu0
    %v3408 = vsel %vm554, %v3402, -inf
    %3409 = vmax.xlane.f32.xlu0 %v3408
    %v3410 = vpop.xlane.xlu0 %3409
    %v3411 = vsel %vm554, %v3405, -inf
    %3412 = vmax.xlane.f32.xlu0 %v3411
    %v3413 = vpop.xlane.xlu0 %3412
    %v3414 = vsub.f32 %v3402, %v3410
    %v3415 = vsub.f32 %v3405, %v3413
    %v3416 = vmul.f32 %v3414, 1.442695
    %v3417 = vpow.pop %v3416
    %v3418 = vmul.f32 %v3415, 1.442695
    %v3419 = vpow.pop %v3418
    %v3420 = vsel %vm554, %v3417, 0.0
    %3421 = vadd.xlane.f32.xlu0 %v3420
    %v3422 = vpop.xlane.xlu0 %3421
    %v3423 = vsel %vm554, %v3419, 0.0
    %3424 = vadd.xlane.f32.xlu0 %v3423
    %v3425 = vpop.xlane.xlu0 %3424
    %v3426 = vrcp.pop %v3422
    %v3427 = vrcp.pop %v3425
    %v3428 = vmul.f32 %v3417, %v3426
    %v3429 = vmul.f32 %v3419, %v3427
    %v3430 = vpack.c.bf16 %v3429, %v3428
    %v3431 = vmul.f32 %v3117, %v297
    %v3432 = vmul.f32 %v3120, %v297
    %v3433 = vpack.c.bf16 %v3432, %v3431
    %v3435 = vsel %vm554, %v3430, 0
    %3437 = vmatprep.subr.bf16.mxu0 0
    %3438 = vmatpush1.bf16.msra.mxu0 %v3433
    %3439 = vmatprep.subr.bf16.mxu0 0
    %3440 = vmatpush1.bf16.msra.mxu0 0
    %3441 = vmatprep.subr.bf16.mxu0 0
    %3442 = vmatpush1.bf16.msra.mxu0 0
    %3443 = vmatprep.subr.bf16.mxu0 0
    %3444 = vmatpush1.bf16.msra.mxu0 0
    %3445 = vmatprep.subr.bf16.mxu0 0
    %3446 = vmatpush1.bf16.msra.mxu0 0
    %3447 = vmatprep.subr.bf16.mxu0 0
    %3448 = vmatpush1.bf16.msra.mxu0 0
    %3449 = vmatprep.subr.bf16.mxu0 0
    %3450 = vmatpush1.bf16.msra.mxu0 0
    %3451 = vmatprep.subr.bf16.mxu0 0
    %3452 = vmatpush1.bf16.msra.mxu0 0
    %3453 = vmatprep.subr.bf16.mxu0 0
    %3454 = vmatpush1.bf16.msra.mxu0 0
    %3455 = vmatprep.subr.bf16.mxu0 0
    %3456 = vmatpush1.bf16.msra.mxu0 0
    %3457 = vmatprep.subr.bf16.mxu0 0
    %3458 = vmatpush1.bf16.msra.mxu0 0
    %3459 = vmatprep.subr.bf16.mxu0 0
    %3460 = vmatpush1.bf16.msra.mxu0 0
    %3461 = vmatprep.subr.bf16.mxu0 0
    %3462 = vmatpush1.bf16.msra.mxu0 0
    %3463 = vmatprep.subr.bf16.mxu0 0
    %3464 = vmatpush1.bf16.msra.mxu0 0
    %3465 = vmatprep.subr.bf16.mxu0 0
    %3466 = vmatpush1.bf16.msra.mxu0 0
    %3467 = vmatprep.subr.bf16.mxu0 0
    %3468 = vmatpush1.bf16.msra.mxu0 0
    %3469 = vmatprep.mubr.bf16.mxu0 0
    %3470 = vmatmul.mubr.bf16.gmra.mrb[0].mxu0 %v3435
    %v3471 = vpop.f32.mrb[0].mxu0
    %v3472 = vadd.f32 0.0, %v3471
    %v3473 = vpop.f32.mrb[0].mxu0
    %v3474 = vpop.f32.mrb[0].mxu0
    %v3475 = vadd.f32 0.0, %v3474
    %v3476 = vpop.f32.mrb[0].mxu0
    %3477 = vdwg.mxu0
    %v3478 = vadd.f32 %v3355, %v3472
    %v3479 = vadd.f32 %v3358, %v3475
    %v3480 = vmul.f32 %v2985, %v302
    %v3481 = vmul.f32 %v2988, %v302
    %v3482 = vpack.c.bf16 %v3481, %v3480
    %v3484 = vsel %vm326, %v3482, 0
    %3486 = vmatprep.subr.bf16.mxu0 0
    %3487 = vmatpush1.bf16.xpose.msra.mxu0 %v3131
    %3488 = vmatprep.subr.bf16.mxu0 0
    %3489 = vmatpush1.bf16.xpose.msra.mxu0 0
    %3490 = vmatprep.subr.bf16.mxu0 0
    %3491 = vmatpush1.bf16.xpose.msra.mxu0 0
    %3492 = vmatprep.subr.bf16.mxu0 0
    %3493 = vmatpush1.bf16.xpose.msra.mxu0 0
    %3494 = vmatprep.subr.bf16.mxu0 0
    %3495 = vmatpush1.bf16.xpose.msra.mxu0 0
    %3496 = vmatprep.subr.bf16.mxu0 0
    %3497 = vmatpush1.bf16.xpose.msra.mxu0 0
    %3498 = vmatprep.subr.bf16.mxu0 0
    %3499 = vmatpush1.bf16.xpose.msra.mxu0 0
    %3500 = vmatprep.subr.bf16.mxu0 0
    %3501 = vmatpush1.bf16.xpose.msra.mxu0 0
    %3502 = vmatprep.subr.bf16.mxu0 0
    %3503 = vmatpush1.bf16.xpose.msra.mxu0 0
    %3504 = vmatprep.subr.bf16.mxu0 0
    %3505 = vmatpush1.bf16.xpose.msra.mxu0 0
    %3506 = vmatprep.subr.bf16.mxu0 0
    %3507 = vmatpush1.bf16.xpose.msra.mxu0 0
    %3508 = vmatprep.subr.bf16.mxu0 0
    %3509 = vmatpush1.bf16.xpose.msra.mxu0 0
    %3510 = vmatprep.subr.bf16.mxu0 0
    %3511 = vmatpush1.bf16.xpose.msra.mxu0 0
    %3512 = vmatprep.subr.bf16.mxu0 0
    %3513 = vmatpush1.bf16.xpose.msra.mxu0 0
    %3514 = vmatprep.subr.bf16.mxu0 0
    %3515 = vmatpush1.bf16.xpose.msra.mxu0 0
    %3516 = vmatprep.subr.bf16.mxu0 0
    %3517 = vmatpush1.bf16.xpose.msra.mxu0 0
    %3518 = vmatprep.mubr.bf16.mxu0 0
    %3519 = vmatmul.mubr.bf16.gmra.mrb[0].mxu0 %v3484
    %v3520 = vpop.f32.mrb[0].mxu0
    %v3521 = vadd.f32 %v281, %v3520
    %v3522 = vpop.f32.mrb[0].mxu0
    %v3523 = vpop.f32.mrb[0].mxu0
    %v3524 = vadd.f32 %v282, %v3523
    %v3525 = vpop.f32.mrb[0].mxu0
    %3526 = vdwg.mxu0
    %v3527 = vsel %vm554, %v3521, -inf
    %3528 = vmax.xlane.f32.xlu0 %v3527
    %v3529 = vpop.xlane.xlu0 %3528
    %v3530 = vsel %vm554, %v3524, -inf
    %3531 = vmax.xlane.f32.xlu0 %v3530
    %v3532 = vpop.xlane.xlu0 %3531
    %v3533 = vsub.f32 %v3521, %v3529
    %v3534 = vsub.f32 %v3524, %v3532
    %v3535 = vmul.f32 %v3533, 1.442695
    %v3536 = vpow.pop %v3535
    %v3537 = vmul.f32 %v3534, 1.442695
    %v3538 = vpow.pop %v3537
    %v3539 = vsel %vm554, %v3536, 0.0
    %3540 = vadd.xlane.f32.xlu0 %v3539
    %v3541 = vpop.xlane.xlu0 %3540
    %v3542 = vsel %vm554, %v3538, 0.0
    %3543 = vadd.xlane.f32.xlu0 %v3542
    %v3544 = vpop.xlane.xlu0 %3543
    %v3545 = vrcp.pop %v3541
    %v3546 = vrcp.pop %v3544
    %v3547 = vmul.f32 %v3536, %v3545
    %v3548 = vmul.f32 %v3538, %v3546
    %v3549 = vpack.c.bf16 %v3548, %v3547
    %v3550 = vmul.f32 %v3117, %v302
    %v3551 = vmul.f32 %v3120, %v302
    %v3552 = vpack.c.bf16 %v3551, %v3550
    %v3554 = vsel %vm554, %v3549, 0
    %3556 = vmatprep.subr.bf16.mxu0 0
    %3557 = vmatpush1.bf16.msra.mxu0 %v3552
    %3558 = vmatprep.subr.bf16.mxu0 0
    %3559 = vmatpush1.bf16.msra.mxu0 0
    %3560 = vmatprep.subr.bf16.mxu0 0
    %3561 = vmatpush1.bf16.msra.mxu0 0
    %3562 = vmatprep.subr.bf16.mxu0 0
    %3563 = vmatpush1.bf16.msra.mxu0 0
    %3564 = vmatprep.subr.bf16.mxu0 0
    %3565 = vmatpush1.bf16.msra.mxu0 0
    %3566 = vmatprep.subr.bf16.mxu0 0
    %3567 = vmatpush1.bf16.msra.mxu0 0
    %3568 = vmatprep.subr.bf16.mxu0 0
    %3569 = vmatpush1.bf16.msra.mxu0 0
    %3570 = vmatprep.subr.bf16.mxu0 0
    %3571 = vmatpush1.bf16.msra.mxu0 0
    %3572 = vmatprep.subr.bf16.mxu0 0
    %3573 = vmatpush1.bf16.msra.mxu0 0
    %3574 = vmatprep.subr.bf16.mxu0 0
    %3575 = vmatpush1.bf16.msra.mxu0 0
    %3576 = vmatprep.subr.bf16.mxu0 0
    %3577 = vmatpush1.bf16.msra.mxu0 0
    %3578 = vmatprep.subr.bf16.mxu0 0
    %3579 = vmatpush1.bf16.msra.mxu0 0
    %3580 = vmatprep.subr.bf16.mxu0 0
    %3581 = vmatpush1.bf16.msra.mxu0 0
    %3582 = vmatprep.subr.bf16.mxu0 0
    %3583 = vmatpush1.bf16.msra.mxu0 0
    %3584 = vmatprep.subr.bf16.mxu0 0
    %3585 = vmatpush1.bf16.msra.mxu0 0
    %3586 = vmatprep.subr.bf16.mxu0 0
    %3587 = vmatpush1.bf16.msra.mxu0 0
    %3588 = vmatprep.mubr.bf16.mxu0 0
    %3589 = vmatmul.mubr.bf16.gmra.mrb[0].mxu0 %v3554
    %v3590 = vpop.f32.mrb[0].mxu0
    %v3591 = vadd.f32 0.0, %v3590
    %v3592 = vpop.f32.mrb[0].mxu0
    %v3593 = vpop.f32.mrb[0].mxu0
    %v3594 = vadd.f32 0.0, %v3593
    %v3595 = vpop.f32.mrb[0].mxu0
    %3596 = vdwg.mxu0
    %v3597 = vadd.f32 %v3478, %v3591
    %v3598 = vadd.f32 %v3479, %v3594
    %v3599 = vpack.c.bf16 %v3598, %v3597
    %s3600 = scalar_lea.vmem %s4, 240
    %v3601 = vld [vmem:[%s3600] sm:$0xf]
    %v3602 = vld [vmem:[%s3600 + $0x4] sm:$0xf]
    %v3603 = vld [vmem:[%s3600 + $0x8] sm:$0xf]
    %v3604 = vld [vmem:[%s3600 + $0xc] sm:$0xf]
    %s3605 = scalar_lea.vmem [#allocation7], 15
    %v3606 = vld [vmem:[%s3605] sm:$0x1]
    %v3608 = vlaneseq
    %v3609 = vshrl.u32 %v3608, 7
    %v3610 = vsub.s32 0, %v3609
    %v3611 = vrot.slane %v3606, %v3610
    %v3617 = vunpack.c.l.b16 %v3601
    %v3618 = vunpack.c.l.b16 %v3602
    %v3619 = vunpack.c.l.b16 %v3603
    %v3620 = vunpack.c.l.b16 %v3604
    %v3621 = vpack.c.b16 %v3618, %v3617
    %v3622 = vpack.c.b16 %v3620, %v3619
    %v3626 = vsel %vm326, %v3599, 0
    %3628 = vmatprep.subr.bf16.mxu0 0
    %3629 = vmatpush1.bf16.msra.mxu0 %v3621
    %3630 = vmatprep.subr.bf16.mxu0 0
    %3631 = vmatpush1.bf16.msra.mxu0 %v3622
    %3632 = vmatprep.subr.bf16.mxu0 0
    %3633 = vmatpush1.bf16.msra.mxu0 0
    %3634 = vmatprep.subr.bf16.mxu0 0
    %3635 = vmatpush1.bf16.msra.mxu0 0
    %3636 = vmatprep.subr.bf16.mxu0 0
    %3637 = vmatpush1.bf16.msra.mxu0 0
    %3638 = vmatprep.subr.bf16.mxu0 0
    %3639 = vmatpush1.bf16.msra.mxu0 0
    %3640 = vmatprep.subr.bf16.mxu0 0
    %3641 = vmatpush1.bf16.msra.mxu0 0
    %3642 = vmatprep.subr.bf16.mxu0 0
    %3643 = vmatpush1.bf16.msra.mxu0 0
    %3644 = vmatprep.subr.bf16.mxu0 0
    %3645 = vmatpush1.bf16.msra.mxu0 0
    %3646 = vmatprep.subr.bf16.mxu0 0
    %3647 = vmatpush1.bf16.msra.mxu0 0
    %3648 = vmatprep.subr.bf16.mxu0 0
    %3649 = vmatpush1.bf16.msra.mxu0 0
    %3650 = vmatprep.subr.bf16.mxu0 0
    %3651 = vmatpush1.bf16.msra.mxu0 0
    %3652 = vmatprep.subr.bf16.mxu0 0
    %3653 = vmatpush1.bf16.msra.mxu0 0
    %3654 = vmatprep.subr.bf16.mxu0 0
    %3655 = vmatpush1.bf16.msra.mxu0 0
    %3656 = vmatprep.subr.bf16.mxu0 0
    %3657 = vmatpush1.bf16.msra.mxu0 0
    %3658 = vmatprep.subr.bf16.mxu0 0
    %3659 = vmatpush1.bf16.msra.mxu0 0
    %3660 = vmatprep.mubr.bf16.mxu0 0
    %3661 = vmatmul.mubr.bf16.gmra.mrb[0].mxu0 %v3626
    %v3662 = vpop.f32.mrb[0].mxu0
    %v3663 = vadd.f32 %v3611, %v3662
    %v3664 = vpop.f32.mrb[0].mxu0
    %v3665 = vpop.f32.mrb[0].mxu0
    %v3666 = vadd.f32 %v3611, %v3665
    %v3667 = vpop.f32.mrb[0].mxu0
    %3668 = vdwg.mxu0
    %v3669 = vadd.f32 %v2919, %v3663
    %v3670 = vadd.f32 %v2920, %v3666
    %s3671 = scalar_lea.vmem [#allocation8], 8
    %v3672 = vld [vmem:[%s3671] sm:$0x1]
    %s3673 = scalar_lea.vmem [#allocation8], 9
    %v3674 = vld [vmem:[%s3673] sm:$0x1]
    %v3675 = vsel %vm326, %v3669, 0.0
    %3676 = vadd.xlane.f32.xlu0 %v3675
    %v3677 = vpop.xlane.xlu0 %3676
    %v3678 = vsel %vm326, %v3670, 0.0
    %3679 = vadd.xlane.f32.xlu0 %v3678
    %v3680 = vpop.xlane.xlu0 %3679
    %v3681 = vmul.f32 %v3677, %v1061
    %v3682 = vmul.f32 %v3680, %v1061
    %v3683 = vsub.f32 %v3669, %v3681
    %v3684 = vsub.f32 %v3670, %v3682
    %v3685 = vmul.f32 %v3683, %v3683
    %v3686 = vmul.f32 %v3684, %v3684
    %v3687 = vsel %vm326, %v3685, 0.0
    %3688 = vadd.xlane.f32.xlu0 %v3687
    %v3689 = vpop.xlane.xlu0 %3688
    %v3690 = vsel %vm326, %v3686, 0.0
    %3691 = vadd.xlane.f32.xlu0 %v3690
    %v3692 = vpop.xlane.xlu0 %3691
    %v3693 = vmul.f32 %v3689, %v1061
    %v3694 = vmul.f32 %v3692, %v1061
    %v3695 = vadd.f32 %v3693, 1e-05
    %v3696 = vadd.f32 %v3694, 1e-05
    %v3697 = vrsqrt.pop %v3695
    %v3698 = vrsqrt.pop %v3696
    %v3699 = vmul.f32 %v3683, %v3697
    %v3700 = vmul.f32 %v3684, %v3698
    %v3702 = vlaneseq
    %v3703 = vshrl.u32 %v3702, 7
    %v3704 = vsub.s32 0, %v3703
    %v3705 = vrot.slane %v3672, %v3704
    %v3707 = vmul.f32 %v3699, %v3705
    %v3708 = vmul.f32 %v3700, %v3705
    %v3710 = vlaneseq
    %v3711 = vshrl.u32 %v3710, 7
    %v3712 = vsub.s32 0, %v3711
    %v3713 = vrot.slane %v3674, %v3712
    %v3715 = vadd.f32 %v3707, %v3713
    %v3716 = vadd.f32 %v3708, %v3713
    %v3717 = vpack.c.bf16 %v3716, %v3715
    %s3718 = scalar_lea.vmem [#allocation10], 16
    %v3719 = vld [vmem:[%s3718] sm:$0xf]
    %v3720 = vld [vmem:[%s3718 + $0x4] sm:$0xf]
    %v3721 = vld [vmem:[%s3718 + $0x8] sm:$0xf]
    %v3722 = vld [vmem:[%s3718 + $0xc] sm:$0xf]
    %s3723 = scalar_lea.vmem [#allocation11], 1
    %v3724 = vld [vmem:[%s3723] sm:$0x1]
    %v3726 = vlaneseq
    %v3727 = vshrl.u32 %v3726, 7
    %v3728 = vsub.s32 0, %v3727
    %v3729 = vrot.slane %v3724, %v3728
    %v3735 = vunpack.c.l.b16 %v3719
    %v3736 = vunpack.c.l.b16 %v3720
    %v3737 = vunpack.c.l.b16 %v3721
    %v3738 = vunpack.c.l.b16 %v3722
    %v3739 = vpack.c.b16 %v3736, %v3735
    %v3740 = vpack.c.b16 %v3738, %v3737
    %v3744 = vsel %vm326, %v3717, 0
    %3746 = vmatprep.subr.bf16.mxu0 0
    %3747 = vmatpush1.bf16.msra.mxu0 %v3739
    %3748 = vmatprep.subr.bf16.mxu0 0
    %3749 = vmatpush1.bf16.msra.mxu0 %v3740
    %3750 = vmatprep.subr.bf16.mxu0 0
    %3751 = vmatpush1.bf16.msra.mxu0 0
    %3752 = vmatprep.subr.bf16.mxu0 0
    %3753 = vmatpush1.bf16.msra.mxu0 0
    %3754 = vmatprep.subr.bf16.mxu0 0
    %3755 = vmatpush1.bf16.msra.mxu0 0
    %3756 = vmatprep.subr.bf16.mxu0 0
    %3757 = vmatpush1.bf16.msra.mxu0 0
    %3758 = vmatprep.subr.bf16.mxu0 0
    %3759 = vmatpush1.bf16.msra.mxu0 0
    %3760 = vmatprep.subr.bf16.mxu0 0
    %3761 = vmatpush1.bf16.msra.mxu0 0
    %3762 = vmatprep.subr.bf16.mxu0 0
    %3763 = vmatpush1.bf16.msra.mxu0 0
    %3764 = vmatprep.subr.bf16.mxu0 0
    %3765 = vmatpush1.bf16.msra.mxu0 0
    %3766 = vmatprep.subr.bf16.mxu0 0
    %3767 = vmatpush1.bf16.msra.mxu0 0
    %3768 = vmatprep.subr.bf16.mxu0 0
    %3769 = vmatpush1.bf16.msra.mxu0 0
    %3770 = vmatprep.subr.bf16.mxu0 0
    %3771 = vmatpush1.bf16.msra.mxu0 0
    %3772 = vmatprep.subr.bf16.mxu0 0
    %3773 = vmatpush1.bf16.msra.mxu0 0
    %3774 = vmatprep.subr.bf16.mxu0 0
    %3775 = vmatpush1.bf16.msra.mxu0 0
    %3776 = vmatprep.subr.bf16.mxu0 0
    %3777 = vmatpush1.bf16.msra.mxu0 0
    %3778 = vmatprep.mubr.bf16.mxu0 0
    %3779 = vmatmul.mubr.bf16.gmra.mrb[0].mxu0 %v3744
    %v3780 = vpop.f32.mrb[0].mxu0
    %v3781 = vadd.f32 %v3729, %v3780
    %v3782 = vpop.f32.mrb[0].mxu0
    %v3783 = vpop.f32.mrb[0].mxu0
    %v3784 = vadd.f32 %v3729, %v3783
    %v3785 = vpop.f32.mrb[0].mxu0
    %3786 = vdwg.mxu0
    %v3787 = vmax.f32 %v3781, 0.0
    %v3788 = vmax.f32 %v3784, 0.0
    %v3789 = vpack.c.bf16 %v3788, %v3787
    %s3790 = scalar_lea.vmem %s9, 64
    %v3791 = vld [vmem:[%s3790] sm:$0xf]
    %v3792 = vld [vmem:[%s3790 + $0x4] sm:$0xf]
    %v3793 = vld [vmem:[%s3790 + $0x8] sm:$0xf]
    %v3794 = vld [vmem:[%s3790 + $0xc] sm:$0xf]
    %v3795 = vld [vmem:[%s3790 + $0x10] sm:$0xf]
    %v3796 = vld [vmem:[%s3790 + $0x14] sm:$0xf]
    %v3797 = vld [vmem:[%s3790 + $0x18] sm:$0xf]
    %v3798 = vld [vmem:[%s3790 + $0x1c] sm:$0xf]
    %v3799 = vld [vmem:[%s3790 + $0x20] sm:$0xf]
    %v3800 = vld [vmem:[%s3790 + $0x24] sm:$0xf]
    %v3801 = vld [vmem:[%s3790 + $0x28] sm:$0xf]
    %v3802 = vld [vmem:[%s3790 + $0x2c] sm:$0xf]
    %v3803 = vld [vmem:[%s3790 + $0x30] sm:$0xf]
    %v3804 = vld [vmem:[%s3790 + $0x34] sm:$0xf]
    %v3805 = vld [vmem:[%s3790 + $0x38] sm:$0xf]
    %v3806 = vld [vmem:[%s3790 + $0x3c] sm:$0xf]
    %s3807 = scalar_lea.vmem %s10, 1
    %v3808 = vld [vmem:[%s3807] sm:$0x1]
    %v3810 = vlaneseq
    %v3811 = vshrl.u32 %v3810, 7
    %v3812 = vsub.s32 0, %v3811
    %v3813 = vrot.slane %v3808, %v3812
    %v3831 = vunpack.c.l.b16 %v3791
    %v3832 = vunpack.c.l.b16 %v3792
    %v3833 = vunpack.c.l.b16 %v3793
    %v3834 = vunpack.c.l.b16 %v3794
    %v3835 = vunpack.c.l.b16 %v3795
    %v3836 = vunpack.c.l.b16 %v3796
    %v3837 = vunpack.c.l.b16 %v3797
    %v3838 = vunpack.c.l.b16 %v3798
    %v3839 = vunpack.c.l.b16 %v3799
    %v3840 = vunpack.c.l.b16 %v3800
    %v3841 = vunpack.c.l.b16 %v3801
    %v3842 = vunpack.c.l.b16 %v3802
    %v3843 = vunpack.c.l.b16 %v3803
    %v3844 = vunpack.c.l.b16 %v3804
    %v3845 = vunpack.c.l.b16 %v3805
    %v3846 = vunpack.c.l.b16 %v3806
    %v3847 = vpack.c.b16 %v3832, %v3831
    %v3848 = vpack.c.b16 %v3834, %v3833
    %v3849 = vpack.c.b16 %v3836, %v3835
    %v3850 = vpack.c.b16 %v3838, %v3837
    %v3851 = vpack.c.b16 %v3840, %v3839
    %v3852 = vpack.c.b16 %v3842, %v3841
    %v3853 = vpack.c.b16 %v3844, %v3843
    %v3854 = vpack.c.b16 %v3846, %v3845
    %3863 = vmatprep.subr.bf16.mxu0 0
    %3864 = vmatpush1.bf16.msra.mxu0 %v3847
    %3865 = vmatprep.subr.bf16.mxu0 0
    %3866 = vmatpush1.bf16.msra.mxu0 %v3848
    %3867 = vmatprep.subr.bf16.mxu0 0
    %3868 = vmatpush1.bf16.msra.mxu0 %v3849
    %3869 = vmatprep.subr.bf16.mxu0 0
    %3870 = vmatpush1.bf16.msra.mxu0 %v3850
    %3871 = vmatprep.subr.bf16.mxu0 0
    %3872 = vmatpush1.bf16.msra.mxu0 %v3851
    %3873 = vmatprep.subr.bf16.mxu0 0
    %3874 = vmatpush1.bf16.msra.mxu0 %v3852
    %3875 = vmatprep.subr.bf16.mxu0 0
    %3876 = vmatpush1.bf16.msra.mxu0 %v3853
    %3877 = vmatprep.subr.bf16.mxu0 0
    %3878 = vmatpush1.bf16.msra.mxu0 %v3854
    %3879 = vmatprep.subr.bf16.mxu0 0
    %3880 = vmatpush1.bf16.msra.mxu0 0
    %3881 = vmatprep.subr.bf16.mxu0 0
    %3882 = vmatpush1.bf16.msra.mxu0 0
    %3883 = vmatprep.subr.bf16.mxu0 0
    %3884 = vmatpush1.bf16.msra.mxu0 0
    %3885 = vmatprep.subr.bf16.mxu0 0
    %3886 = vmatpush1.bf16.msra.mxu0 0
    %3887 = vmatprep.subr.bf16.mxu0 0
    %3888 = vmatpush1.bf16.msra.mxu0 0
    %3889 = vmatprep.subr.bf16.mxu0 0
    %3890 = vmatpush1.bf16.msra.mxu0 0
    %3891 = vmatprep.subr.bf16.mxu0 0
    %3892 = vmatpush1.bf16.msra.mxu0 0
    %3893 = vmatprep.subr.bf16.mxu0 0
    %3894 = vmatpush1.bf16.msra.mxu0 0
    %3895 = vmatprep.mubr.bf16.mxu0 0
    %3896 = vmatmul.mubr.bf16.gmra.mrb[0].mxu0 %v3789
    %v3897 = vpop.f32.mrb[0].mxu0
    %v3898 = vadd.f32 %v3813, %v3897
    %v3899 = vpop.f32.mrb[0].mxu0
    %v3900 = vpop.f32.mrb[0].mxu0
    %v3901 = vadd.f32 %v3813, %v3900
    %v3902 = vpop.f32.mrb[0].mxu0
    %3903 = vdwg.mxu0
    %v3904 = vadd.f32 %v3715, %v3898
    %v3905 = vadd.f32 %v3716, %v3901
    %s3906 = scalar_lea.vmem [#allocation8], 10
    %v3907 = vld [vmem:[%s3906] sm:$0x1]
    %s3908 = scalar_lea.vmem [#allocation8], 11
    %v3909 = vld [vmem:[%s3908] sm:$0x1]
    %v3910 = vsel %vm326, %v3904, 0.0
    %3911 = vadd.xlane.f32.xlu0 %v3910
    %v3912 = vpop.xlane.xlu0 %3911
    %v3913 = vsel %vm326, %v3905, 0.0
    %3914 = vadd.xlane.f32.xlu0 %v3913
    %v3915 = vpop.xlane.xlu0 %3914
    %v3916 = vmul.f32 %v3912, %v1061
    %v3917 = vmul.f32 %v3915, %v1061
    %v3918 = vsub.f32 %v3904, %v3916
    %v3919 = vsub.f32 %v3905, %v3917
    %v3920 = vmul.f32 %v3918, %v3918
    %v3921 = vmul.f32 %v3919, %v3919
    %v3922 = vsel %vm326, %v3920, 0.0
    %3923 = vadd.xlane.f32.xlu0 %v3922
    %v3924 = vpop.xlane.xlu0 %3923
    %v3925 = vsel %vm326, %v3921, 0.0
    %3926 = vadd.xlane.f32.xlu0 %v3925
    %v3927 = vpop.xlane.xlu0 %3926
    %v3928 = vmul.f32 %v3924, %v1061
    %v3929 = vmul.f32 %v3927, %v1061
    %v3930 = vadd.f32 %v3928, 1e-05
    %v3931 = vadd.f32 %v3929, 1e-05
    %v3932 = vrsqrt.pop %v3930
    %v3933 = vrsqrt.pop %v3931
    %v3934 = vmul.f32 %v3918, %v3932
    %v3935 = vmul.f32 %v3919, %v3933
    %v3937 = vlaneseq
    %v3938 = vshrl.u32 %v3937, 7
    %v3939 = vsub.s32 0, %v3938
    %v3940 = vrot.slane %v3907, %v3939
    %v3942 = vmul.f32 %v3934, %v3940
    %v3943 = vmul.f32 %v3935, %v3940
    %v3945 = vlaneseq
    %v3946 = vshrl.u32 %v3945, 7
    %v3947 = vsub.s32 0, %v3946
    %v3948 = vrot.slane %v3909, %v3947
    %v3950 = vadd.f32 %v3942, %v3948
    %v3951 = vadd.f32 %v3943, %v3948
    %v3952 = vpack.c.bf16 %v3951, %v3950
    %v3953 = vld [vmem:[%s13] sm:$0xf]
    %v3954 = vld [vmem:[%s13 + $0x4] sm:$0xf]
    %v3955 = vld [vmem:[%s13 + $0x8] sm:$0xf]
    %v3956 = vld [vmem:[%s13 + $0xc] sm:$0xf]
    %v3957 = vld [vmem:[%s14] sm:$0x1]
    %v3959 = vlaneseq
    %v3960 = vshrl.u32 %v3959, 7
    %v3961 = vsub.s32 0, %v3960
    %v3962 = vrot.slane %v3957, %v3961
    %v3968 = vunpack.c.l.b16 %v3953
    %v3969 = vunpack.c.l.b16 %v3954
    %v3970 = vunpack.c.l.b16 %v3955
    %v3971 = vunpack.c.l.b16 %v3956
    %v3972 = vpack.c.b16 %v3969, %v3968
    %v3973 = vpack.c.b16 %v3971, %v3970
    %v3977 = vsel %vm326, %v3952, 0
    %3979 = vmatprep.subr.bf16.mxu0 0
    %3980 = vmatpush1.bf16.msra.mxu0 %v3972
    %3981 = vmatprep.subr.bf16.mxu0 0
    %3982 = vmatpush1.bf16.msra.mxu0 %v3973
    %3983 = vmatprep.subr.bf16.mxu0 0
    %3984 = vmatpush1.bf16.msra.mxu0 0
    %3985 = vmatprep.subr.bf16.mxu0 0
    %3986 = vmatpush1.bf16.msra.mxu0 0
    %3987 = vmatprep.subr.bf16.mxu0 0
    %3988 = vmatpush1.bf16.msra.mxu0 0
    %3989 = vmatprep.subr.bf16.mxu0 0
    %3990 = vmatpush1.bf16.msra.mxu0 0
    %3991 = vmatprep.subr.bf16.mxu0 0
    %3992 = vmatpush1.bf16.msra.mxu0 0
    %3993 = vmatprep.subr.bf16.mxu0 0
    %3994 = vmatpush1.bf16.msra.mxu0 0
    %3995 = vmatprep.subr.bf16.mxu0 0
    %3996 = vmatpush1.bf16.msra.mxu0 0
    %3997 = vmatprep.subr.bf16.mxu0 0
    %3998 = vmatpush1.bf16.msra.mxu0 0
    %3999 = vmatprep.subr.bf16.mxu0 0
    %4000 = vmatpush1.bf16.msra.mxu0 0
    %4001 = vmatprep.subr.bf16.mxu0 0
    %4002 = vmatpush1.bf16.msra.mxu0 0
    %4003 = vmatprep.subr.bf16.mxu0 0
    %4004 = vmatpush1.bf16.msra.mxu0 0
    %4005 = vmatprep.subr.bf16.mxu0 0
    %4006 = vmatpush1.bf16.msra.mxu0 0
    %4007 = vmatprep.subr.bf16.mxu0 0
    %4008 = vmatpush1.bf16.msra.mxu0 0
    %4009 = vmatprep.subr.bf16.mxu0 0
    %4010 = vmatpush1.bf16.msra.mxu0 0
    %4011 = vmatprep.mubr.bf16.mxu0 0
    %4012 = vmatmul.mubr.bf16.gmra.mrb[0].mxu0 %v3977
    %v4013 = vpop.f32.mrb[0].mxu0
    %v4014 = vadd.f32 %v3962, %v4013
    %v4015 = vpop.f32.mrb[0].mxu0
    %v4016 = vpop.f32.mrb[0].mxu0
    %v4017 = vadd.f32 %v3962, %v4016
    %v4018 = vpop.f32.mrb[0].mxu0
    %4019 = vdwg.mxu0
    %v4020 = vld [vmem:[%s15] sm:$0xff]
    %v4021 = vld [vmem:[%s15 + $0x8] sm:$0xff]
    %4023 = vset.pattern.permute.xlu0 0
    %4024 = vperm.xlu0 %4023, %v4020
    %v4025 = vpop.permute.xlu0 %4024
    %4028 = vset.pattern.permute.xlu0 0
    %4029 = vperm.xlu0 %4028, %v4021
    %v4030 = vpop.permute.xlu0 %4029
    %v4032 = vmul.f32 %v4025, %v4014
    %v4033 = vmul.f32 %v4030, %v4017
    %v4034 = vadd.f32 %v4032, 0.0
    %v4035 = vadd.f32 %v4033, 0.0
    %s4036 = scalar_lea.vmem %s13, 16
    %v4037 = vld [vmem:[%s4036] sm:$0xf]
    %v4038 = vld [vmem:[%s4036 + $0x4] sm:$0xf]
    %v4039 = vld [vmem:[%s4036 + $0x8] sm:$0xf]
    %v4040 = vld [vmem:[%s4036 + $0xc] sm:$0xf]
    %s4041 = scalar_lea.vmem %s14, 1
    %v4042 = vld [vmem:[%s4041] sm:$0x1]
    %v4044 = vlaneseq
    %v4045 = vshrl.u32 %v4044, 7
    %v4046 = vsub.s32 0, %v4045
    %v4047 = vrot.slane %v4042, %v4046
    %v4053 = vunpack.c.l.b16 %v4037
    %v4054 = vunpack.c.l.b16 %v4038
    %v4055 = vunpack.c.l.b16 %v4039
    %v4056 = vunpack.c.l.b16 %v4040
    %v4057 = vpack.c.b16 %v4054, %v4053
    %v4058 = vpack.c.b16 %v4056, %v4055
    %4061 = vmatprep.subr.bf16.mxu0 0
    %4062 = vmatpush1.bf16.msra.mxu0 %v4057
    %4063 = vmatprep.subr.bf16.mxu0 0
    %4064 = vmatpush1.bf16.msra.mxu0 %v4058
    %4065 = vmatprep.subr.bf16.mxu0 0
    %4066 = vmatpush1.bf16.msra.mxu0 0
    %4067 = vmatprep.subr.bf16.mxu0 0
    %4068 = vmatpush1.bf16.msra.mxu0 0
    %4069 = vmatprep.subr.bf16.mxu0 0
    %4070 = vmatpush1.bf16.msra.mxu0 0
    %4071 = vmatprep.subr.bf16.mxu0 0
    %4072 = vmatpush1.bf16.msra.mxu0 0
    %4073 = vmatprep.subr.bf16.mxu0 0
    %4074 = vmatpush1.bf16.msra.mxu0 0
    %4075 = vmatprep.subr.bf16.mxu0 0
    %4076 = vmatpush1.bf16.msra.mxu0 0
    %4077 = vmatprep.subr.bf16.mxu0 0
    %4078 = vmatpush1.bf16.msra.mxu0 0
    %4079 = vmatprep.subr.bf16.mxu0 0
    %4080 = vmatpush1.bf16.msra.mxu0 0
    %4081 = vmatprep.subr.bf16.mxu0 0
    %4082 = vmatpush1.bf16.msra.mxu0 0
    %4083 = vmatprep.subr.bf16.mxu0 0
    %4084 = vmatpush1.bf16.msra.mxu0 0
    %4085 = vmatprep.subr.bf16.mxu0 0
    %4086 = vmatpush1.bf16.msra.mxu0 0
    %4087 = vmatprep.subr.bf16.mxu0 0
    %4088 = vmatpush1.bf16.msra.mxu0 0
    %4089 = vmatprep.subr.bf16.mxu0 0
    %4090 = vmatpush1.bf16.msra.mxu0 0
    %4091 = vmatprep.subr.bf16.mxu0 0
    %4092 = vmatpush1.bf16.msra.mxu0 0
    %4093 = vmatprep.mubr.bf16.mxu0 0
    %4094 = vmatmul.mubr.bf16.gmra.mrb[0].mxu0 %v3977
    %v4095 = vpop.f32.mrb[0].mxu0
    %v4096 = vadd.f32 %v4047, %v4095
    %v4097 = vpop.f32.mrb[0].mxu0
    %v4098 = vpop.f32.mrb[0].mxu0
    %v4099 = vadd.f32 %v4047, %v4098
    %v4100 = vpop.f32.mrb[0].mxu0
    %4101 = vdwg.mxu0
    %s4102 = scalar_lea.vmem %s15, 16
    %v4103 = vld [vmem:[%s4102] sm:$0xff]
    %v4104 = vld [vmem:[%s4102 + $0x8] sm:$0xff]
    %4106 = vset.pattern.permute.xlu0 0
    %4107 = vperm.xlu0 %4106, %v4103
    %v4108 = vpop.permute.xlu0 %4107
    %4111 = vset.pattern.permute.xlu0 0
    %4112 = vperm.xlu0 %4111, %v4104
    %v4113 = vpop.permute.xlu0 %4112
    %v4115 = vmul.f32 %v4108, %v4096
    %v4116 = vmul.f32 %v4113, %v4099
    %v4117 = vadd.f32 %v4034, %v4115
    %v4118 = vadd.f32 %v4035, %v4116
    %v4119 = vadd.f32 %v3950, %v4117
    %v4120 = vadd.f32 %v3951, %v4118
    %4121 = vst.msk [vmem:[#allocation15] sm:$0xff] %vm326, %v4119
    %4122 = vst.msk [vmem:[#allocation15 + $0x8] sm:$0xff] %vm326, %v4120
    %v4123 = vpack.c.bf16 %v4120, %v4119
    %v4124 = vld [vmem:[#allocation13] sm:$0xf]
    %v4125 = vld [vmem:[#allocation13 + $0x4] sm:$0xf]
    %v4126 = vld [vmem:[#allocation13 + $0x8] sm:$0xf]
    %v4127 = vld [vmem:[#allocation13 + $0xc] sm:$0xf]
    %v4128 = vld [vmem:[%s12] sm:$0x1]
    %v4130 = vlaneseq
    %v4131 = vshrl.u32 %v4130, 7
    %v4132 = vsub.s32 0, %v4131
    %v4133 = vrot.slane %v4128, %v4132
    %v4139 = vunpack.c.l.b16 %v4124
    %v4140 = vunpack.c.l.b16 %v4125
    %v4141 = vunpack.c.l.b16 %v4126
    %v4142 = vunpack.c.l.b16 %v4127
    %v4143 = vpack.c.b16 %v4140, %v4139
    %v4144 = vpack.c.b16 %v4142, %v4141
    %v4148 = vsel %vm326, %v4123, 0
    %4150 = vmatprep.subr.bf16.mxu0 0
    %4151 = vmatpush1.bf16.msra.mxu0 %v4143
    %4152 = vmatprep.subr.bf16.mxu0 0
    %4153 = vmatpush1.bf16.msra.mxu0 %v4144
    %4154 = vmatprep.subr.bf16.mxu0 0
    %4155 = vmatpush1.bf16.msra.mxu0 0
    %4156 = vmatprep.subr.bf16.mxu0 0
    %4157 = vmatpush1.bf16.msra.mxu0 0
    %4158 = vmatprep.subr.bf16.mxu0 0
    %4159 = vmatpush1.bf16.msra.mxu0 0
    %4160 = vmatprep.subr.bf16.mxu0 0
    %4161 = vmatpush1.bf16.msra.mxu0 0
    %4162 = vmatprep.subr.bf16.mxu0 0
    %4163 = vmatpush1.bf16.msra.mxu0 0
    %4164 = vmatprep.subr.bf16.mxu0 0
    %4165 = vmatpush1.bf16.msra.mxu0 0
    %4166 = vmatprep.subr.bf16.mxu0 0
    %4167 = vmatpush1.bf16.msra.mxu0 0
    %4168 = vmatprep.subr.bf16.mxu0 0
    %4169 = vmatpush1.bf16.msra.mxu0 0
    %4170 = vmatprep.subr.bf16.mxu0 0
    %4171 = vmatpush1.bf16.msra.mxu0 0
    %4172 = vmatprep.subr.bf16.mxu0 0
    %4173 = vmatpush1.bf16.msra.mxu0 0
    %4174 = vmatprep.subr.bf16.mxu0 0
    %4175 = vmatpush1.bf16.msra.mxu0 0
    %4176 = vmatprep.subr.bf16.mxu0 0
    %4177 = vmatpush1.bf16.msra.mxu0 0
    %4178 = vmatprep.subr.bf16.mxu0 0
    %4179 = vmatpush1.bf16.msra.mxu0 0
    %4180 = vmatprep.subr.bf16.mxu0 0
    %4181 = vmatpush1.bf16.msra.mxu0 0
    %4182 = vmatprep.mubr.bf16.mxu0 0
    %4183 = vmatmul.mubr.bf16.gmra.mrb[0].mxu0 %v4148
    %v4184 = vpop.f32.mrb[0].mxu0
    %v4185 = vadd.f32 %v4133, %v4184
    %v4186 = vpop.f32.mrb[0].mxu0
    %v4187 = vpop.f32.mrb[0].mxu0
    %v4188 = vadd.f32 %v4133, %v4187
    %v4189 = vpop.f32.mrb[0].mxu0
    %4190 = vdwg.mxu0
    %4191 = vst [vmem:[#allocation14] sm:$0xff] %v4185
    %4192 = vst [vmem:[#allocation14 + $0x8] sm:$0xff] %v4188
    // Predicated region
    $region94: #{tpu_custom_call.1} parent=1 // pred_check
      _
    $region95: #{tpu_custom_call.1} parent=1 // pred_check_branch
      %4194 = sbr.rel (0) target = $region97
    $region96: #{tpu_custom_call.1} parent=1 // pred_region
      %s4196 = ssub.s32 256, 256
      %4197 = vsyncadd [#allocation4], %s4196
      %s4198 = sshll.u32 [#allocation14], 4
      %s4199 = int_to_ptr.vmem [resolvable:$true] %s4198
      %4204 = dma.vmem_to_hbm [thread:$0]  %s4199, 256, %s16, [#allocation4], 128, 128, 8
    $region97: #{tpu_custom_call.1} parent=1 // pred_fallthru
      _
    // Predicated region
    $region98: #{tpu_custom_call.1} parent=1 // pred_check
      _
    $region99: #{tpu_custom_call.1} parent=1 // pred_check_branch
      %4206 = sbr.rel (0) target = $region101
    $region100: #{tpu_custom_call.1} parent=1 // pred_region
      %s4208 = ssub.s32 256, 256
      %4209 = vsyncadd [#allocation16], %s4208
      %s4210 = sshll.u32 [#allocation15], 4
      %s4211 = int_to_ptr.vmem [resolvable:$true] %s4210
      %4216 = dma.vmem_to_hbm [thread:$0]  %s4211, 256, %s17, [#allocation16], 128, 128, 8
    $region101: #{tpu_custom_call.1} parent=1 // pred_fallthru
      _
    // Predicated region
    $region102: #{tpu_custom_call.1} parent=1 // pred_check
      _
    $region103: #{tpu_custom_call.1} parent=1 // pred_check_branch
      %4218 = sbr.rel (0) target = $region105
    $region104: #{tpu_custom_call.1} parent=1 // pred_region
      %4219 = dma.done [#allocation4], 256
    $region105: #{tpu_custom_call.1} parent=1 // pred_fallthru
      _
    // Predicated region
    $region106: #{tpu_custom_call.1} parent=1 // pred_check
      _
    $region107: #{tpu_custom_call.1} parent=1 // pred_check_branch
      %4221 = sbr.rel (0) target = $region109
    $region108: #{tpu_custom_call.1} parent=1 // pred_region
      %4222 = dma.done [#allocation16], 256
    $region109: #{tpu_custom_call.1} parent=1 // pred_fallthru
      _
    %4223 = vsyncpa [#allocation3], 1
    %4224 = vsyncpa [#allocation6], 1
    %4225 = vsyncpa [#allocation9], 1
    %4226 = vsyncpa [#allocation12], 1
    %4227 = vsyncpa [#allocation4], 1
    %4228 = vsyncpa [#allocation16], 1

</llo_original>
